<compile_context>
chip_gen: v5e
topology: v5e:2x2
jax: 0.10.0
libtpu: 0.0.40
codegen_flags: <defaults>
</compile_context>

<pallas_src>
import functools

import numpy as np
import jax
import jax.numpy as jnp
from jax.experimental import pallas as pl
from jax.experimental.pallas import tpu as pltpu


def _matcher_kernel(src_ref, w_ref, ids_ref, ms_ref, *, thr, approx):
    # src_ref: (TQ, S*C) compute dtype; w_ref: (S*C, S) compute dtype
    # ids_ref: (1, Q) int32 output; ms_ref: (Q, S) f32 scratch (sim, then match scores)
    i = pl.program_id(0)
    tq = src_ref.shape[0]

    # ---- phase 1 (every grid step): MXU contraction for this Q tile ----------------
    # sim[q, s] = sum_c src[q, s, c] * pilot[s, c]  ==  (TQ, S*C) @ blockdiag(pilot)
    tile_sim = jnp.dot(src_ref[...], w_ref[...], preferred_element_type=jnp.float32)
    row0 = pl.multiple_of(i * tq, tq)
    ms_ref[pl.ds(row0, tq), :] = tile_sim

    # ---- phase 2 (last grid step only): fused dual softmax + greedy assignment -----
    @pl.when(i == pl.num_programs(0) - 1)
    def _finalize():
        Q, S = ms_ref.shape
        sim = ms_ref[...]
        # match_scores = 0.5*(softmax(sim, axis=1) + softmax(sim, axis=0)), fused:
        # single global max, single exp, reciprocal of the row / column sums.
        e = jnp.exp(sim - jnp.max(sim))
        r_inv = pl.reciprocal(jnp.sum(e, axis=1, keepdims=True), approx=approx)  # (Q,1)
        c_inv = pl.reciprocal(jnp.sum(e, axis=0, keepdims=True), approx=approx)  # (1,S)
        ms_ref[...] = e * (0.5 * (r_inv + c_inv))   # written once

        iota_q = jax.lax.broadcasted_iota(jnp.int32, (1, Q), 1)
        iota_s = jax.lax.broadcasted_iota(jnp.int32, (1, S), 1)

        def body(idx, carry):
            ids, avail = carry                        # (1,Q) int32, (1,S) f32 in {0,1}
            # Only the active row (O(S) per iteration); taken columns are zeroed via
            # the carried availability mask (same semantics as the reference's
            # match_scores[:, max_idx] = 0).
            row = ms_ref[pl.ds(idx, 1), :] * avail    # (1, S)
            mx = jnp.max(row)
            # first column index achieving the max (torch.max / np.argmax semantics)
            sel = jnp.min(jnp.where(row == mx, iota_s, S)).astype(jnp.int32)
            matched = mx > thr
            ids = jnp.where(matched & (iota_q == idx), sel, ids)
            avail = avail * jnp.where(matched & (iota_s == sel), 0.0, 1.0)
            return ids, avail

        ids0 = jnp.full((1, Q), -1, dtype=jnp.int32)
        avail0 = jnp.ones((1, S), dtype=jnp.float32)
        ids_final, _ = jax.lax.fori_loop(0, Q, body, (ids0, avail0), unroll=Q <= 64)
        ids_ref[...] = ids_final                      # single output store


def _pick_q_tile(q):
    for t in (256, 128, 64, 32, 16, 8):
        if q % t == 0:
            return t
    return q


@functools.partial(
    jax.jit,
    static_argnames=("match_score_thr", "q_tile", "compute_dtype", "approx_reciprocal"),
)
def consecutive_frames_matcher(
    src_reid_embeds,            # (Q, S, C) float32
    pilot_reid_embeds,          # (S, C)    float32
    match_score_thr=0.2,
    q_tile=None,                # Q-tile size (None -> auto); must divide Q
    compute_dtype=jnp.float32,  # jnp.bfloat16 recommended on v6e/v7x (MXU inputs only)
    approx_reciprocal=False,    # EUP approx reciprocal for the softmax denominators
):
    Q, S, C = src_reid_embeds.shape
    SC = S * C
    tq = q_tile if q_tile is not None else _pick_q_tile(Q)
    if Q % tq != 0:
        raise ValueError(f"q_tile={tq} must divide Q={Q}")

    # Lane-dense layouts: src -> (Q, S*C); pilot -> block-diagonal (S*C, S) so the
    # C-contraction is a plain MXU matmul and the last dim is a multiple of 128 for
    # realistic S*C.
    src2d = src_reid_embeds.reshape(Q, SC).astype(compute_dtype)
    eye = jnp.eye(S, dtype=pilot_reid_embeds.dtype)
    w = (pilot_reid_embeds[:, :, None] * eye[:, None, :]).reshape(SC, S)
    w = w.astype(compute_dtype)

    cd = jnp.dtype(compute_dtype).itemsize
    vmem_est = (
        2 * tq * SC * cd          # double-buffered src tile
        + 2 * SC * S * cd         # block-diagonal pilot
        + Q * S * 4               # sim / match-score scratch
        + 8 * Q * S * 4           # finalize temporaries headroom
    )
    vmem_limit = int(min(max(2 * vmem_est, 32 * 1024 * 1024), 64 * 1024 * 1024))

    ids = pl.pallas_call(
        functools.partial(
            _matcher_kernel, thr=float(match_score_thr), approx=bool(approx_reciprocal)
        ),
        out_shape=jax.ShapeDtypeStruct((1, Q), jnp.int32),   # torch uses int64
        grid=(Q // tq,),
        in_specs=[
            pl.BlockSpec((tq, SC), lambda i: (i, 0)),  # src Q-tile, pipelined
            pl.BlockSpec((SC, S), lambda i: (0, 0)),   # block-diag pilot, resident
        ],
        out_specs=pl.BlockSpec((1, Q), lambda i: (0, 0)),
        scratch_shapes=[pltpu.VMEM((Q, S), jnp.float32)],
        compiler_params=pltpu.CompilerParams(
            dimension_semantics=("arbitrary",),
            vmem_limit_bytes=vmem_limit,
        ),
    )(src2d, w)
    return ids.reshape(Q)


def _np_softmax(x, axis):
    m = np.max(x, axis=axis, keepdims=True)
    e = np.exp(x - m)
    return e / np.sum(e, axis=axis, keepdims=True)


def reference_matcher(src, pilot, thr=0.2):
    # Plain numpy replica of the PyTorch forward (valid_weight=False, greedy).
    sim = np.einsum("qsc,sc->qs", src, pilot)
    ms = 0.5 * (_np_softmax(sim, axis=1) + _np_softmax(sim, axis=0))
    Q = src.shape[0]
    ids = np.full((Q,), -1, dtype=np.int32)
    for idx in range(Q):
        max_idx = int(np.argmax(ms[idx, :]))
        score = ms[idx, max_idx]
        if score > thr:
            ids[idx] = max_idx
            ms[:idx, max_idx] = 0
            ms[idx + 1:, max_idx] = 0
    return ids


if __name__ == "__main__":
    Q, S, C = 32, 16, 32
    key = jax.random.PRNGKey(0)
    k1, k2 = jax.random.split(key)
    # Small-integer-valued f32 embeddings: the similarity contraction is then exact in
    # f32 and bf16 alike (and for any MXU pass structure), so the greedy ids can be
    # compared bit-exactly against the numpy reference for every compute_dtype.
    src_reid_embeds = jax.random.randint(k1, (Q, S, C), -1, 2).astype(jnp.float32)
    pilot_reid_embeds = jax.random.randint(k2, (S, C), -1, 2).astype(jnp.float32)

    ref_ids = reference_matcher(
        np.asarray(src_reid_embeds), np.asarray(pilot_reid_embeds), thr=0.2
    )

    # f32 path (bit-parity config), grid of 4 Q-tiles.
    ids_f32 = jax.block_until_ready(
        consecutive_frames_matcher(
            src_reid_embeds, pilot_reid_embeds, match_score_thr=0.2, q_tile=8
        )
    )
    assert np.array_equal(np.asarray(ids_f32), ref_ids), (np.asarray(ids_f32), ref_ids)

    # bf16 MXU-contraction path (recommended on v6e/v7x); exact here because the demo
    # inputs are bf16-representable.
    ids_bf16 = jax.block_until_ready(
        consecutive_frames_matcher(
            src_reid_embeds, pilot_reid_embeds, match_score_thr=0.2, q_tile=8,
            compute_dtype=jnp.bfloat16,
        )
    )
    assert np.array_equal(np.asarray(ids_bf16), ref_ids), (np.asarray(ids_bf16), ref_ids)

    # Approx-reciprocal softmax denominators (EUP vrcp): smoke test only — ~2^-12
    # relative error means ids are not guaranteed bit-identical to the f32 reference.
    ids_approx = jax.block_until_ready(
        consecutive_frames_matcher(
            src_reid_embeds, pilot_reid_embeds, match_score_thr=0.2, q_tile=8,
            compute_dtype=jnp.bfloat16, approx_reciprocal=True,
        )
    )
    assert ids_approx.shape == (Q,) and ids_approx.dtype == jnp.int32

    print("KERNEL_OK")
</pallas_src>

<mosaic_0001>
module attributes {stable_mosaic.version = 11 : i64} {
  func.func @_matcher_kernel(%arg0: i32, %arg1: memref<8x512xf32, #tpu.memory_space<vmem>>, %arg2: memref<512x16xf32, #tpu.memory_space<vmem>>, %arg3: memref<1x32xi32, #tpu.memory_space<vmem>>, %arg4: memref<32x16xf32, #tpu.memory_space<vmem>>) attributes {dimension_semantics = [#tpu.dimension_semantics<arbitrary>], iteration_bounds = array<i64: 4>, scalar_prefetch = 0 : i64, scratch_operands = 1 : i64, tpu.core_type = #tpu.core_type<tc>, window_params = [{transform_indices = @transform_0, window_bounds = array<i64: 8, 512>}, {pipeline_mode = #tpu.pipeline_mode<synchronous>, transform_indices = @transform_1, window_bounds = array<i64: 512, 16>}, {pipeline_mode = #tpu.pipeline_mode<synchronous>, transform_indices = @transform_2, window_bounds = array<i64: 1, 32>}]} {
    %c0 = arith.constant 0 : index
    %c0_0 = arith.constant 0 : index
    %0 = vector.load %arg1[%c0, %c0_0] : memref<8x512xf32, #tpu.memory_space<vmem>>, vector<8x512xf32>
    %c0_1 = arith.constant 0 : index
    %c0_2 = arith.constant 0 : index
    %1 = vector.load %arg2[%c0_1, %c0_2] : memref<512x16xf32, #tpu.memory_space<vmem>>, vector<512x16xf32>
    %cst = arith.constant dense<0.000000e+00> : vector<8x16xf32>
    %2 = tpu.matmul %0, %1, %cst {dimension_numbers = #tpu.dot_dimension_numbers<[1], [0], [0], [1], [0, 0, 1, 1], [], []>} : vector<8x512xf32>, vector<512x16xf32>, vector<8x16xf32> -> vector<8x16xf32>
    %c8_i32 = arith.constant 8 : i32
    %3 = arith.muli %arg0, %c8_i32 : i32
    %4 = tpu.assume_multiple %3, 8 : i32
    %5 = arith.index_cast %4 : i32 to index
    %c0_3 = arith.constant 0 : index
    %6 = vector.load %arg4[%5, %c0_3] : memref<32x16xf32, #tpu.memory_space<vmem>>, vector<8x16xf32>
    tpu.vector_store %arg4[%5, %c0_3], %2 {strides = array<i32>} : memref<32x16xf32, #tpu.memory_space<vmem>>, vector<8x16xf32>,
    %c3_i32 = arith.constant 3 : i32
    %7 = arith.cmpi eq, %arg0, %c3_i32 : i32
    %8 = arith.extui %7 : i1 to i32
    %c0_i32 = arith.constant 0 : i32
    %9 = arith.cmpi ne, %8, %c0_i32 : i32
    scf.if %9 {
      %c0_4 = arith.constant 0 : index
      %c0_5 = arith.constant 0 : index
      %10 = vector.load %arg4[%c0_4, %c0_5] : memref<32x16xf32, #tpu.memory_space<vmem>>, vector<32x16xf32>
      %11 = vector.shape_cast %10 : vector<32x16xf32> to vector<1x32x16xf32>
      %cst_6 = arith.constant dense<0xFF800000> : vector<1xf32>
      %12 = vector.multi_reduction <maximumf>, %11, %cst_6 [1, 2] : vector<1x32x16xf32> to vector<1xf32>
      %13 = vector.shape_cast %12 : vector<1xf32> to vector<1x1x1xf32>
      %14 = vector.extract %13[0, 0, 0] : f32 from vector<1x1x1xf32>
      %15 = vector.broadcast %14 : f32 to vector<32x16xf32>
      %16 = arith.subf %10, %15 : vector<32x16xf32>
      %17 = math.exp %16 : vector<32x16xf32>
      %cst_7 = arith.constant dense<0.000000e+00> : vector<32xf32>
      %18 = vector.multi_reduction <add>, %17, %cst_7 [1] : vector<32x16xf32> to vector<32xf32>
      %19 = vector.shape_cast %18 : vector<32xf32> to vector<32x1xf32>
      %20 = tpu.reciprocal %19 : vector<32x1xf32> -> vector<32x1xf32>
      %cst_8 = arith.constant dense<0.000000e+00> : vector<16xf32>
      %21 = vector.multi_reduction <add>, %17, %cst_8 [0] : vector<32x16xf32> to vector<16xf32>
      %22 = vector.shape_cast %21 : vector<16xf32> to vector<1x16xf32>
      %23 = tpu.reciprocal %22 : vector<1x16xf32> -> vector<1x16xf32>
      %24 = vector.broadcast %20 : vector<32x1xf32> to vector<32x16xf32>
      %25 = vector.broadcast %23 : vector<1x16xf32> to vector<32x16xf32>
      %26 = arith.addf %24, %25 : vector<32x16xf32>
      %cst_9 = arith.constant 5.000000e-01 : f32
      %27 = vector.broadcast %cst_9 : f32 to vector<32x16xf32>
      %28 = arith.mulf %27, %26 : vector<32x16xf32>
      %29 = arith.mulf %17, %28 : vector<32x16xf32>
      %c0_10 = arith.constant 0 : index
      %c0_11 = arith.constant 0 : index
      %30 = vector.load %arg4[%c0_10, %c0_11] : memref<32x16xf32, #tpu.memory_space<vmem>>, vector<32x16xf32>
      tpu.vector_store %arg4[%c0_10, %c0_11], %29 {strides = array<i32>} : memref<32x16xf32, #tpu.memory_space<vmem>>, vector<32x16xf32>,
      %31 = tpu.iota {dimensions = array<i32: 1>} : vector<1x32xi32>
      %32 = tpu.iota {dimensions = array<i32: 1>} : vector<1x16xi32>
      %c-1_i32 = arith.constant -1 : i32
      %33 = vector.broadcast %c-1_i32 : i32 to vector<1x32xi32>
      %cst_12 = arith.constant 1.000000e+00 : f32
      %34 = vector.broadcast %cst_12 : f32 to vector<1x16xf32>
      %c0_i32_13 = arith.constant 0 : i32
      %35 = arith.index_cast %c0_i32_13 : i32 to index
      %c0_14 = arith.constant 0 : index
      %36 = vector.load %arg4[%35, %c0_14] : memref<32x16xf32, #tpu.memory_space<vmem>>, vector<1x16xf32>
      %37 = arith.mulf %36, %34 : vector<1x16xf32>
      %38 = vector.shape_cast %37 : vector<1x16xf32> to vector<1x1x16xf32>
      %cst_15 = arith.constant dense<0xFF800000> : vector<1xf32>
      %39 = vector.multi_reduction <maximumf>, %38, %cst_15 [1, 2] : vector<1x1x16xf32> to vector<1xf32>
      %40 = vector.shape_cast %39 : vector<1xf32> to vector<1x1x1xf32>
      %41 = vector.extract %40[0, 0, 0] : f32 from vector<1x1x1xf32>
      %42 = vector.broadcast %41 : f32 to vector<1x16xf32>
      %43 = arith.cmpf oeq, %37, %42 : vector<1x16xf32>
      %c16_i32 = arith.constant 16 : i32
      %44 = vector.broadcast %c16_i32 : i32 to vector<1x16xi32>
      %45 = arith.select %43, %32, %44 : vector<1x16xi1>, vector<1x16xi32>
      %46 = vector.shape_cast %45 : vector<1x16xi32> to vector<1x1x16xi32>
      %cst_16 = arith.constant dense<2147483647> : vector<1xi32>
      %47 = vector.multi_reduction <minsi>, %46, %cst_16 [1, 2] : vector<1x1x16xi32> to vector<1xi32>
      %48 = vector.shape_cast %47 : vector<1xi32> to vector<1x1x1xi32>
      %49 = vector.extract %48[0, 0, 0] : i32 from vector<1x1x1xi32>
      %cst_17 = arith.constant 2.000000e-01 : f32
      %50 = arith.cmpf ogt, %41, %cst_17 : f32
      %51 = vector.broadcast %c0_i32_13 : i32 to vector<1x32xi32>
      %52 = arith.cmpi eq, %31, %51 : vector<1x32xi32>
      %53 = vector.broadcast %50 : i1 to vector<1x32xi1>
      %54 = arith.andi %53, %52 : vector<1x32xi1>
      %55 = vector.broadcast %49 : i32 to vector<1x32xi32>
      %56 = arith.select %54, %55, %33 : vector<1x32xi1>, vector<1x32xi32>
      %57 = vector.broadcast %49 : i32 to vector<1x16xi32>
      %58 = arith.cmpi eq, %32, %57 : vector<1x16xi32>
      %59 = vector.broadcast %50 : i1 to vector<1x16xi1>
      %60 = arith.andi %59, %58 : vector<1x16xi1>
      %cst_18 = arith.constant 0.000000e+00 : f32
      %cst_19 = arith.constant 1.000000e+00 : f32
      %61 = vector.broadcast %cst_18 : f32 to vector<1x16xf32>
      %62 = vector.broadcast %cst_19 : f32 to vector<1x16xf32>
      %63 = arith.select %60, %61, %62 : vector<1x16xi1>, vector<1x16xf32>
      %64 = arith.mulf %34, %63 : vector<1x16xf32>
      %c1_i32 = arith.constant 1 : i32
      %65 = arith.index_cast %c1_i32 : i32 to index
      %c0_20 = arith.constant 0 : index
      %66 = vector.load %arg4[%65, %c0_20] : memref<32x16xf32, #tpu.memory_space<vmem>>, vector<1x16xf32>
      %67 = arith.mulf %66, %64 : vector<1x16xf32>
      %68 = vector.shape_cast %67 : vector<1x16xf32> to vector<1x1x16xf32>
      %cst_21 = arith.constant dense<0xFF800000> : vector<1xf32>
      %69 = vector.multi_reduction <maximumf>, %68, %cst_21 [1, 2] : vector<1x1x16xf32> to vector<1xf32>
      %70 = vector.shape_cast %69 : vector<1xf32> to vector<1x1x1xf32>
      %71 = vector.extract %70[0, 0, 0] : f32 from vector<1x1x1xf32>
      %72 = vector.broadcast %71 : f32 to vector<1x16xf32>
      %73 = arith.cmpf oeq, %67, %72 : vector<1x16xf32>
      %c16_i32_22 = arith.constant 16 : i32
      %74 = vector.broadcast %c16_i32_22 : i32 to vector<1x16xi32>
      %75 = arith.select %73, %32, %74 : vector<1x16xi1>, vector<1x16xi32>
      %76 = vector.shape_cast %75 : vector<1x16xi32> to vector<1x1x16xi32>
      %cst_23 = arith.constant dense<2147483647> : vector<1xi32>
      %77 = vector.multi_reduction <minsi>, %76, %cst_23 [1, 2] : vector<1x1x16xi32> to vector<1xi32>
      %78 = vector.shape_cast %77 : vector<1xi32> to vector<1x1x1xi32>
      %79 = vector.extract %78[0, 0, 0] : i32 from vector<1x1x1xi32>
      %cst_24 = arith.constant 2.000000e-01 : f32
      %80 = arith.cmpf ogt, %71, %cst_24 : f32
      %81 = vector.broadcast %c1_i32 : i32 to vector<1x32xi32>
      %82 = arith.cmpi eq, %31, %81 : vector<1x32xi32>
      %83 = vector.broadcast %80 : i1 to vector<1x32xi1>
      %84 = arith.andi %83, %82 : vector<1x32xi1>
      %85 = vector.broadcast %79 : i32 to vector<1x32xi32>
      %86 = arith.select %84, %85, %56 : vector<1x32xi1>, vector<1x32xi32>
      %87 = vector.broadcast %79 : i32 to vector<1x16xi32>
      %88 = arith.cmpi eq, %32, %87 : vector<1x16xi32>
      %89 = vector.broadcast %80 : i1 to vector<1x16xi1>
      %90 = arith.andi %89, %88 : vector<1x16xi1>
      %cst_25 = arith.constant 0.000000e+00 : f32
      %cst_26 = arith.constant 1.000000e+00 : f32
      %91 = vector.broadcast %cst_25 : f32 to vector<1x16xf32>
      %92 = vector.broadcast %cst_26 : f32 to vector<1x16xf32>
      %93 = arith.select %90, %91, %92 : vector<1x16xi1>, vector<1x16xf32>
      %94 = arith.mulf %64, %93 : vector<1x16xf32>
      %c2_i32 = arith.constant 2 : i32
      %95 = arith.index_cast %c2_i32 : i32 to index
      %c0_27 = arith.constant 0 : index
      %96 = vector.load %arg4[%95, %c0_27] : memref<32x16xf32, #tpu.memory_space<vmem>>, vector<1x16xf32>
      %97 = arith.mulf %96, %94 : vector<1x16xf32>
      %98 = vector.shape_cast %97 : vector<1x16xf32> to vector<1x1x16xf32>
      %cst_28 = arith.constant dense<0xFF800000> : vector<1xf32>
      %99 = vector.multi_reduction <maximumf>, %98, %cst_28 [1, 2] : vector<1x1x16xf32> to vector<1xf32>
      %100 = vector.shape_cast %99 : vector<1xf32> to vector<1x1x1xf32>
      %101 = vector.extract %100[0, 0, 0] : f32 from vector<1x1x1xf32>
      %102 = vector.broadcast %101 : f32 to vector<1x16xf32>
      %103 = arith.cmpf oeq, %97, %102 : vector<1x16xf32>
      %c16_i32_29 = arith.constant 16 : i32
      %104 = vector.broadcast %c16_i32_29 : i32 to vector<1x16xi32>
      %105 = arith.select %103, %32, %104 : vector<1x16xi1>, vector<1x16xi32>
      %106 = vector.shape_cast %105 : vector<1x16xi32> to vector<1x1x16xi32>
      %cst_30 = arith.constant dense<2147483647> : vector<1xi32>
      %107 = vector.multi_reduction <minsi>, %106, %cst_30 [1, 2] : vector<1x1x16xi32> to vector<1xi32>
      %108 = vector.shape_cast %107 : vector<1xi32> to vector<1x1x1xi32>
      %109 = vector.extract %108[0, 0, 0] : i32 from vector<1x1x1xi32>
      %cst_31 = arith.constant 2.000000e-01 : f32
      %110 = arith.cmpf ogt, %101, %cst_31 : f32
      %111 = vector.broadcast %c2_i32 : i32 to vector<1x32xi32>
      %112 = arith.cmpi eq, %31, %111 : vector<1x32xi32>
      %113 = vector.broadcast %110 : i1 to vector<1x32xi1>
      %114 = arith.andi %113, %112 : vector<1x32xi1>
      %115 = vector.broadcast %109 : i32 to vector<1x32xi32>
      %116 = arith.select %114, %115, %86 : vector<1x32xi1>, vector<1x32xi32>
      %117 = vector.broadcast %109 : i32 to vector<1x16xi32>
      %118 = arith.cmpi eq, %32, %117 : vector<1x16xi32>
      %119 = vector.broadcast %110 : i1 to vector<1x16xi1>
      %120 = arith.andi %119, %118 : vector<1x16xi1>
      %cst_32 = arith.constant 0.000000e+00 : f32
      %cst_33 = arith.constant 1.000000e+00 : f32
      %121 = vector.broadcast %cst_32 : f32 to vector<1x16xf32>
      %122 = vector.broadcast %cst_33 : f32 to vector<1x16xf32>
      %123 = arith.select %120, %121, %122 : vector<1x16xi1>, vector<1x16xf32>
      %124 = arith.mulf %94, %123 : vector<1x16xf32>
      %c3_i32_34 = arith.constant 3 : i32
      %125 = arith.index_cast %c3_i32_34 : i32 to index
      %c0_35 = arith.constant 0 : index
      %126 = vector.load %arg4[%125, %c0_35] : memref<32x16xf32, #tpu.memory_space<vmem>>, vector<1x16xf32>
      %127 = arith.mulf %126, %124 : vector<1x16xf32>
      %128 = vector.shape_cast %127 : vector<1x16xf32> to vector<1x1x16xf32>
      %cst_36 = arith.constant dense<0xFF800000> : vector<1xf32>
      %129 = vector.multi_reduction <maximumf>, %128, %cst_36 [1, 2] : vector<1x1x16xf32> to vector<1xf32>
      %130 = vector.shape_cast %129 : vector<1xf32> to vector<1x1x1xf32>
      %131 = vector.extract %130[0, 0, 0] : f32 from vector<1x1x1xf32>
      %132 = vector.broadcast %131 : f32 to vector<1x16xf32>
      %133 = arith.cmpf oeq, %127, %132 : vector<1x16xf32>
      %c16_i32_37 = arith.constant 16 : i32
      %134 = vector.broadcast %c16_i32_37 : i32 to vector<1x16xi32>
      %135 = arith.select %133, %32, %134 : vector<1x16xi1>, vector<1x16xi32>
      %136 = vector.shape_cast %135 : vector<1x16xi32> to vector<1x1x16xi32>
      %cst_38 = arith.constant dense<2147483647> : vector<1xi32>
      %137 = vector.multi_reduction <minsi>, %136, %cst_38 [1, 2] : vector<1x1x16xi32> to vector<1xi32>
      %138 = vector.shape_cast %137 : vector<1xi32> to vector<1x1x1xi32>
      %139 = vector.extract %138[0, 0, 0] : i32 from vector<1x1x1xi32>
      %cst_39 = arith.constant 2.000000e-01 : f32
      %140 = arith.cmpf ogt, %131, %cst_39 : f32
      %141 = vector.broadcast %c3_i32_34 : i32 to vector<1x32xi32>
      %142 = arith.cmpi eq, %31, %141 : vector<1x32xi32>
      %143 = vector.broadcast %140 : i1 to vector<1x32xi1>
      %144 = arith.andi %143, %142 : vector<1x32xi1>
      %145 = vector.broadcast %139 : i32 to vector<1x32xi32>
      %146 = arith.select %144, %145, %116 : vector<1x32xi1>, vector<1x32xi32>
      %147 = vector.broadcast %139 : i32 to vector<1x16xi32>
      %148 = arith.cmpi eq, %32, %147 : vector<1x16xi32>
      %149 = vector.broadcast %140 : i1 to vector<1x16xi1>
      %150 = arith.andi %149, %148 : vector<1x16xi1>
      %cst_40 = arith.constant 0.000000e+00 : f32
      %cst_41 = arith.constant 1.000000e+00 : f32
      %151 = vector.broadcast %cst_40 : f32 to vector<1x16xf32>
      %152 = vector.broadcast %cst_41 : f32 to vector<1x16xf32>
      %153 = arith.select %150, %151, %152 : vector<1x16xi1>, vector<1x16xf32>
      %154 = arith.mulf %124, %153 : vector<1x16xf32>
      %c4_i32 = arith.constant 4 : i32
      %155 = arith.index_cast %c4_i32 : i32 to index
      %c0_42 = arith.constant 0 : index
      %156 = vector.load %arg4[%155, %c0_42] : memref<32x16xf32, #tpu.memory_space<vmem>>, vector<1x16xf32>
      %157 = arith.mulf %156, %154 : vector<1x16xf32>
      %158 = vector.shape_cast %157 : vector<1x16xf32> to vector<1x1x16xf32>
      %cst_43 = arith.constant dense<0xFF800000> : vector<1xf32>
      %159 = vector.multi_reduction <maximumf>, %158, %cst_43 [1, 2] : vector<1x1x16xf32> to vector<1xf32>
      %160 = vector.shape_cast %159 : vector<1xf32> to vector<1x1x1xf32>
      %161 = vector.extract %160[0, 0, 0] : f32 from vector<1x1x1xf32>
      %162 = vector.broadcast %161 : f32 to vector<1x16xf32>
      %163 = arith.cmpf oeq, %157, %162 : vector<1x16xf32>
      %c16_i32_44 = arith.constant 16 : i32
      %164 = vector.broadcast %c16_i32_44 : i32 to vector<1x16xi32>
      %165 = arith.select %163, %32, %164 : vector<1x16xi1>, vector<1x16xi32>
      %166 = vector.shape_cast %165 : vector<1x16xi32> to vector<1x1x16xi32>
      %cst_45 = arith.constant dense<2147483647> : vector<1xi32>
      %167 = vector.multi_reduction <minsi>, %166, %cst_45 [1, 2] : vector<1x1x16xi32> to vector<1xi32>
      %168 = vector.shape_cast %167 : vector<1xi32> to vector<1x1x1xi32>
      %169 = vector.extract %168[0, 0, 0] : i32 from vector<1x1x1xi32>
      %cst_46 = arith.constant 2.000000e-01 : f32
      %170 = arith.cmpf ogt, %161, %cst_46 : f32
      %171 = vector.broadcast %c4_i32 : i32 to vector<1x32xi32>
      %172 = arith.cmpi eq, %31, %171 : vector<1x32xi32>
      %173 = vector.broadcast %170 : i1 to vector<1x32xi1>
      %174 = arith.andi %173, %172 : vector<1x32xi1>
      %175 = vector.broadcast %169 : i32 to vector<1x32xi32>
      %176 = arith.select %174, %175, %146 : vector<1x32xi1>, vector<1x32xi32>
      %177 = vector.broadcast %169 : i32 to vector<1x16xi32>
      %178 = arith.cmpi eq, %32, %177 : vector<1x16xi32>
      %179 = vector.broadcast %170 : i1 to vector<1x16xi1>
      %180 = arith.andi %179, %178 : vector<1x16xi1>
      %cst_47 = arith.constant 0.000000e+00 : f32
      %cst_48 = arith.constant 1.000000e+00 : f32
      %181 = vector.broadcast %cst_47 : f32 to vector<1x16xf32>
      %182 = vector.broadcast %cst_48 : f32 to vector<1x16xf32>
      %183 = arith.select %180, %181, %182 : vector<1x16xi1>, vector<1x16xf32>
      %184 = arith.mulf %154, %183 : vector<1x16xf32>
      %c5_i32 = arith.constant 5 : i32
      %185 = arith.index_cast %c5_i32 : i32 to index
      %c0_49 = arith.constant 0 : index
      %186 = vector.load %arg4[%185, %c0_49] : memref<32x16xf32, #tpu.memory_space<vmem>>, vector<1x16xf32>
      %187 = arith.mulf %186, %184 : vector<1x16xf32>
      %188 = vector.shape_cast %187 : vector<1x16xf32> to vector<1x1x16xf32>
      %cst_50 = arith.constant dense<0xFF800000> : vector<1xf32>
      %189 = vector.multi_reduction <maximumf>, %188, %cst_50 [1, 2] : vector<1x1x16xf32> to vector<1xf32>
      %190 = vector.shape_cast %189 : vector<1xf32> to vector<1x1x1xf32>
      %191 = vector.extract %190[0, 0, 0] : f32 from vector<1x1x1xf32>
      %192 = vector.broadcast %191 : f32 to vector<1x16xf32>
      %193 = arith.cmpf oeq, %187, %192 : vector<1x16xf32>
      %c16_i32_51 = arith.constant 16 : i32
      %194 = vector.broadcast %c16_i32_51 : i32 to vector<1x16xi32>
      %195 = arith.select %193, %32, %194 : vector<1x16xi1>, vector<1x16xi32>
      %196 = vector.shape_cast %195 : vector<1x16xi32> to vector<1x1x16xi32>
      %cst_52 = arith.constant dense<2147483647> : vector<1xi32>
      %197 = vector.multi_reduction <minsi>, %196, %cst_52 [1, 2] : vector<1x1x16xi32> to vector<1xi32>
      %198 = vector.shape_cast %197 : vector<1xi32> to vector<1x1x1xi32>
      %199 = vector.extract %198[0, 0, 0] : i32 from vector<1x1x1xi32>
      %cst_53 = arith.constant 2.000000e-01 : f32
      %200 = arith.cmpf ogt, %191, %cst_53 : f32
      %201 = vector.broadcast %c5_i32 : i32 to vector<1x32xi32>
      %202 = arith.cmpi eq, %31, %201 : vector<1x32xi32>
      %203 = vector.broadcast %200 : i1 to vector<1x32xi1>
      %204 = arith.andi %203, %202 : vector<1x32xi1>
      %205 = vector.broadcast %199 : i32 to vector<1x32xi32>
      %206 = arith.select %204, %205, %176 : vector<1x32xi1>, vector<1x32xi32>
      %207 = vector.broadcast %199 : i32 to vector<1x16xi32>
      %208 = arith.cmpi eq, %32, %207 : vector<1x16xi32>
      %209 = vector.broadcast %200 : i1 to vector<1x16xi1>
      %210 = arith.andi %209, %208 : vector<1x16xi1>
      %cst_54 = arith.constant 0.000000e+00 : f32
      %cst_55 = arith.constant 1.000000e+00 : f32
      %211 = vector.broadcast %cst_54 : f32 to vector<1x16xf32>
      %212 = vector.broadcast %cst_55 : f32 to vector<1x16xf32>
      %213 = arith.select %210, %211, %212 : vector<1x16xi1>, vector<1x16xf32>
      %214 = arith.mulf %184, %213 : vector<1x16xf32>
      %c6_i32 = arith.constant 6 : i32
      %215 = arith.index_cast %c6_i32 : i32 to index
      %c0_56 = arith.constant 0 : index
      %216 = vector.load %arg4[%215, %c0_56] : memref<32x16xf32, #tpu.memory_space<vmem>>, vector<1x16xf32>
      %217 = arith.mulf %216, %214 : vector<1x16xf32>
      %218 = vector.shape_cast %217 : vector<1x16xf32> to vector<1x1x16xf32>
      %cst_57 = arith.constant dense<0xFF800000> : vector<1xf32>
      %219 = vector.multi_reduction <maximumf>, %218, %cst_57 [1, 2] : vector<1x1x16xf32> to vector<1xf32>
      %220 = vector.shape_cast %219 : vector<1xf32> to vector<1x1x1xf32>
      %221 = vector.extract %220[0, 0, 0] : f32 from vector<1x1x1xf32>
      %222 = vector.broadcast %221 : f32 to vector<1x16xf32>
      %223 = arith.cmpf oeq, %217, %222 : vector<1x16xf32>
      %c16_i32_58 = arith.constant 16 : i32
      %224 = vector.broadcast %c16_i32_58 : i32 to vector<1x16xi32>
      %225 = arith.select %223, %32, %224 : vector<1x16xi1>, vector<1x16xi32>
      %226 = vector.shape_cast %225 : vector<1x16xi32> to vector<1x1x16xi32>
      %cst_59 = arith.constant dense<2147483647> : vector<1xi32>
      %227 = vector.multi_reduction <minsi>, %226, %cst_59 [1, 2] : vector<1x1x16xi32> to vector<1xi32>
      %228 = vector.shape_cast %227 : vector<1xi32> to vector<1x1x1xi32>
      %229 = vector.extract %228[0, 0, 0] : i32 from vector<1x1x1xi32>
      %cst_60 = arith.constant 2.000000e-01 : f32
      %230 = arith.cmpf ogt, %221, %cst_60 : f32
      %231 = vector.broadcast %c6_i32 : i32 to vector<1x32xi32>
      %232 = arith.cmpi eq, %31, %231 : vector<1x32xi32>
      %233 = vector.broadcast %230 : i1 to vector<1x32xi1>
      %234 = arith.andi %233, %232 : vector<1x32xi1>
      %235 = vector.broadcast %229 : i32 to vector<1x32xi32>
      %236 = arith.select %234, %235, %206 : vector<1x32xi1>, vector<1x32xi32>
      %237 = vector.broadcast %229 : i32 to vector<1x16xi32>
      %238 = arith.cmpi eq, %32, %237 : vector<1x16xi32>
      %239 = vector.broadcast %230 : i1 to vector<1x16xi1>
      %240 = arith.andi %239, %238 : vector<1x16xi1>
      %cst_61 = arith.constant 0.000000e+00 : f32
      %cst_62 = arith.constant 1.000000e+00 : f32
      %241 = vector.broadcast %cst_61 : f32 to vector<1x16xf32>
      %242 = vector.broadcast %cst_62 : f32 to vector<1x16xf32>
      %243 = arith.select %240, %241, %242 : vector<1x16xi1>, vector<1x16xf32>
      %244 = arith.mulf %214, %243 : vector<1x16xf32>
      %c7_i32 = arith.constant 7 : i32
      %245 = arith.index_cast %c7_i32 : i32 to index
      %c0_63 = arith.constant 0 : index
      %246 = vector.load %arg4[%245, %c0_63] : memref<32x16xf32, #tpu.memory_space<vmem>>, vector<1x16xf32>
      %247 = arith.mulf %246, %244 : vector<1x16xf32>
      %248 = vector.shape_cast %247 : vector<1x16xf32> to vector<1x1x16xf32>
      %cst_64 = arith.constant dense<0xFF800000> : vector<1xf32>
      %249 = vector.multi_reduction <maximumf>, %248, %cst_64 [1, 2] : vector<1x1x16xf32> to vector<1xf32>
      %250 = vector.shape_cast %249 : vector<1xf32> to vector<1x1x1xf32>
      %251 = vector.extract %250[0, 0, 0] : f32 from vector<1x1x1xf32>
      %252 = vector.broadcast %251 : f32 to vector<1x16xf32>
      %253 = arith.cmpf oeq, %247, %252 : vector<1x16xf32>
      %c16_i32_65 = arith.constant 16 : i32
      %254 = vector.broadcast %c16_i32_65 : i32 to vector<1x16xi32>
      %255 = arith.select %253, %32, %254 : vector<1x16xi1>, vector<1x16xi32>
      %256 = vector.shape_cast %255 : vector<1x16xi32> to vector<1x1x16xi32>
      %cst_66 = arith.constant dense<2147483647> : vector<1xi32>
      %257 = vector.multi_reduction <minsi>, %256, %cst_66 [1, 2] : vector<1x1x16xi32> to vector<1xi32>
      %258 = vector.shape_cast %257 : vector<1xi32> to vector<1x1x1xi32>
      %259 = vector.extract %258[0, 0, 0] : i32 from vector<1x1x1xi32>
      %cst_67 = arith.constant 2.000000e-01 : f32
      %260 = arith.cmpf ogt, %251, %cst_67 : f32
      %261 = vector.broadcast %c7_i32 : i32 to vector<1x32xi32>
      %262 = arith.cmpi eq, %31, %261 : vector<1x32xi32>
      %263 = vector.broadcast %260 : i1 to vector<1x32xi1>
      %264 = arith.andi %263, %262 : vector<1x32xi1>
      %265 = vector.broadcast %259 : i32 to vector<1x32xi32>
      %266 = arith.select %264, %265, %236 : vector<1x32xi1>, vector<1x32xi32>
      %267 = vector.broadcast %259 : i32 to vector<1x16xi32>
      %268 = arith.cmpi eq, %32, %267 : vector<1x16xi32>
      %269 = vector.broadcast %260 : i1 to vector<1x16xi1>
      %270 = arith.andi %269, %268 : vector<1x16xi1>
      %cst_68 = arith.constant 0.000000e+00 : f32
      %cst_69 = arith.constant 1.000000e+00 : f32
      %271 = vector.broadcast %cst_68 : f32 to vector<1x16xf32>
      %272 = vector.broadcast %cst_69 : f32 to vector<1x16xf32>
      %273 = arith.select %270, %271, %272 : vector<1x16xi1>, vector<1x16xf32>
      %274 = arith.mulf %244, %273 : vector<1x16xf32>
      %c8_i32_70 = arith.constant 8 : i32
      %275 = arith.index_cast %c8_i32_70 : i32 to index
      %c0_71 = arith.constant 0 : index
      %276 = vector.load %arg4[%275, %c0_71] : memref<32x16xf32, #tpu.memory_space<vmem>>, vector<1x16xf32>
      %277 = arith.mulf %276, %274 : vector<1x16xf32>
      %278 = vector.shape_cast %277 : vector<1x16xf32> to vector<1x1x16xf32>
      %cst_72 = arith.constant dense<0xFF800000> : vector<1xf32>
      %279 = vector.multi_reduction <maximumf>, %278, %cst_72 [1, 2] : vector<1x1x16xf32> to vector<1xf32>
      %280 = vector.shape_cast %279 : vector<1xf32> to vector<1x1x1xf32>
      %281 = vector.extract %280[0, 0, 0] : f32 from vector<1x1x1xf32>
      %282 = vector.broadcast %281 : f32 to vector<1x16xf32>
      %283 = arith.cmpf oeq, %277, %282 : vector<1x16xf32>
      %c16_i32_73 = arith.constant 16 : i32
      %284 = vector.broadcast %c16_i32_73 : i32 to vector<1x16xi32>
      %285 = arith.select %283, %32, %284 : vector<1x16xi1>, vector<1x16xi32>
      %286 = vector.shape_cast %285 : vector<1x16xi32> to vector<1x1x16xi32>
      %cst_74 = arith.constant dense<2147483647> : vector<1xi32>
      %287 = vector.multi_reduction <minsi>, %286, %cst_74 [1, 2] : vector<1x1x16xi32> to vector<1xi32>
      %288 = vector.shape_cast %287 : vector<1xi32> to vector<1x1x1xi32>
      %289 = vector.extract %288[0, 0, 0] : i32 from vector<1x1x1xi32>
      %cst_75 = arith.constant 2.000000e-01 : f32
      %290 = arith.cmpf ogt, %281, %cst_75 : f32
      %291 = vector.broadcast %c8_i32_70 : i32 to vector<1x32xi32>
      %292 = arith.cmpi eq, %31, %291 : vector<1x32xi32>
      %293 = vector.broadcast %290 : i1 to vector<1x32xi1>
      %294 = arith.andi %293, %292 : vector<1x32xi1>
      %295 = vector.broadcast %289 : i32 to vector<1x32xi32>
      %296 = arith.select %294, %295, %266 : vector<1x32xi1>, vector<1x32xi32>
      %297 = vector.broadcast %289 : i32 to vector<1x16xi32>
      %298 = arith.cmpi eq, %32, %297 : vector<1x16xi32>
      %299 = vector.broadcast %290 : i1 to vector<1x16xi1>
      %300 = arith.andi %299, %298 : vector<1x16xi1>
      %cst_76 = arith.constant 0.000000e+00 : f32
      %cst_77 = arith.constant 1.000000e+00 : f32
      %301 = vector.broadcast %cst_76 : f32 to vector<1x16xf32>
      %302 = vector.broadcast %cst_77 : f32 to vector<1x16xf32>
      %303 = arith.select %300, %301, %302 : vector<1x16xi1>, vector<1x16xf32>
      %304 = arith.mulf %274, %303 : vector<1x16xf32>
      %c9_i32 = arith.constant 9 : i32
      %305 = arith.index_cast %c9_i32 : i32 to index
      %c0_78 = arith.constant 0 : index
      %306 = vector.load %arg4[%305, %c0_78] : memref<32x16xf32, #tpu.memory_space<vmem>>, vector<1x16xf32>
      %307 = arith.mulf %306, %304 : vector<1x16xf32>
      %308 = vector.shape_cast %307 : vector<1x16xf32> to vector<1x1x16xf32>
      %cst_79 = arith.constant dense<0xFF800000> : vector<1xf32>
      %309 = vector.multi_reduction <maximumf>, %308, %cst_79 [1, 2] : vector<1x1x16xf32> to vector<1xf32>
      %310 = vector.shape_cast %309 : vector<1xf32> to vector<1x1x1xf32>
      %311 = vector.extract %310[0, 0, 0] : f32 from vector<1x1x1xf32>
      %312 = vector.broadcast %311 : f32 to vector<1x16xf32>
      %313 = arith.cmpf oeq, %307, %312 : vector<1x16xf32>
      %c16_i32_80 = arith.constant 16 : i32
      %314 = vector.broadcast %c16_i32_80 : i32 to vector<1x16xi32>
      %315 = arith.select %313, %32, %314 : vector<1x16xi1>, vector<1x16xi32>
      %316 = vector.shape_cast %315 : vector<1x16xi32> to vector<1x1x16xi32>
      %cst_81 = arith.constant dense<2147483647> : vector<1xi32>
      %317 = vector.multi_reduction <minsi>, %316, %cst_81 [1, 2] : vector<1x1x16xi32> to vector<1xi32>
      %318 = vector.shape_cast %317 : vector<1xi32> to vector<1x1x1xi32>
      %319 = vector.extract %318[0, 0, 0] : i32 from vector<1x1x1xi32>
      %cst_82 = arith.constant 2.000000e-01 : f32
      %320 = arith.cmpf ogt, %311, %cst_82 : f32
      %321 = vector.broadcast %c9_i32 : i32 to vector<1x32xi32>
      %322 = arith.cmpi eq, %31, %321 : vector<1x32xi32>
      %323 = vector.broadcast %320 : i1 to vector<1x32xi1>
      %324 = arith.andi %323, %322 : vector<1x32xi1>
      %325 = vector.broadcast %319 : i32 to vector<1x32xi32>
      %326 = arith.select %324, %325, %296 : vector<1x32xi1>, vector<1x32xi32>
      %327 = vector.broadcast %319 : i32 to vector<1x16xi32>
      %328 = arith.cmpi eq, %32, %327 : vector<1x16xi32>
      %329 = vector.broadcast %320 : i1 to vector<1x16xi1>
      %330 = arith.andi %329, %328 : vector<1x16xi1>
      %cst_83 = arith.constant 0.000000e+00 : f32
      %cst_84 = arith.constant 1.000000e+00 : f32
      %331 = vector.broadcast %cst_83 : f32 to vector<1x16xf32>
      %332 = vector.broadcast %cst_84 : f32 to vector<1x16xf32>
      %333 = arith.select %330, %331, %332 : vector<1x16xi1>, vector<1x16xf32>
      %334 = arith.mulf %304, %333 : vector<1x16xf32>
      %c10_i32 = arith.constant 10 : i32
      %335 = arith.index_cast %c10_i32 : i32 to index
      %c0_85 = arith.constant 0 : index
      %336 = vector.load %arg4[%335, %c0_85] : memref<32x16xf32, #tpu.memory_space<vmem>>, vector<1x16xf32>
      %337 = arith.mulf %336, %334 : vector<1x16xf32>
      %338 = vector.shape_cast %337 : vector<1x16xf32> to vector<1x1x16xf32>
      %cst_86 = arith.constant dense<0xFF800000> : vector<1xf32>
      %339 = vector.multi_reduction <maximumf>, %338, %cst_86 [1, 2] : vector<1x1x16xf32> to vector<1xf32>
      %340 = vector.shape_cast %339 : vector<1xf32> to vector<1x1x1xf32>
      %341 = vector.extract %340[0, 0, 0] : f32 from vector<1x1x1xf32>
      %342 = vector.broadcast %341 : f32 to vector<1x16xf32>
      %343 = arith.cmpf oeq, %337, %342 : vector<1x16xf32>
      %c16_i32_87 = arith.constant 16 : i32
      %344 = vector.broadcast %c16_i32_87 : i32 to vector<1x16xi32>
      %345 = arith.select %343, %32, %344 : vector<1x16xi1>, vector<1x16xi32>
      %346 = vector.shape_cast %345 : vector<1x16xi32> to vector<1x1x16xi32>
      %cst_88 = arith.constant dense<2147483647> : vector<1xi32>
      %347 = vector.multi_reduction <minsi>, %346, %cst_88 [1, 2] : vector<1x1x16xi32> to vector<1xi32>
      %348 = vector.shape_cast %347 : vector<1xi32> to vector<1x1x1xi32>
      %349 = vector.extract %348[0, 0, 0] : i32 from vector<1x1x1xi32>
      %cst_89 = arith.constant 2.000000e-01 : f32
      %350 = arith.cmpf ogt, %341, %cst_89 : f32
      %351 = vector.broadcast %c10_i32 : i32 to vector<1x32xi32>
      %352 = arith.cmpi eq, %31, %351 : vector<1x32xi32>
      %353 = vector.broadcast %350 : i1 to vector<1x32xi1>
      %354 = arith.andi %353, %352 : vector<1x32xi1>
      %355 = vector.broadcast %349 : i32 to vector<1x32xi32>
      %356 = arith.select %354, %355, %326 : vector<1x32xi1>, vector<1x32xi32>
      %357 = vector.broadcast %349 : i32 to vector<1x16xi32>
      %358 = arith.cmpi eq, %32, %357 : vector<1x16xi32>
      %359 = vector.broadcast %350 : i1 to vector<1x16xi1>
      %360 = arith.andi %359, %358 : vector<1x16xi1>
      %cst_90 = arith.constant 0.000000e+00 : f32
      %cst_91 = arith.constant 1.000000e+00 : f32
      %361 = vector.broadcast %cst_90 : f32 to vector<1x16xf32>
      %362 = vector.broadcast %cst_91 : f32 to vector<1x16xf32>
      %363 = arith.select %360, %361, %362 : vector<1x16xi1>, vector<1x16xf32>
      %364 = arith.mulf %334, %363 : vector<1x16xf32>
      %c11_i32 = arith.constant 11 : i32
      %365 = arith.index_cast %c11_i32 : i32 to index
      %c0_92 = arith.constant 0 : index
      %366 = vector.load %arg4[%365, %c0_92] : memref<32x16xf32, #tpu.memory_space<vmem>>, vector<1x16xf32>
      %367 = arith.mulf %366, %364 : vector<1x16xf32>
      %368 = vector.shape_cast %367 : vector<1x16xf32> to vector<1x1x16xf32>
      %cst_93 = arith.constant dense<0xFF800000> : vector<1xf32>
      %369 = vector.multi_reduction <maximumf>, %368, %cst_93 [1, 2] : vector<1x1x16xf32> to vector<1xf32>
      %370 = vector.shape_cast %369 : vector<1xf32> to vector<1x1x1xf32>
      %371 = vector.extract %370[0, 0, 0] : f32 from vector<1x1x1xf32>
      %372 = vector.broadcast %371 : f32 to vector<1x16xf32>
      %373 = arith.cmpf oeq, %367, %372 : vector<1x16xf32>
      %c16_i32_94 = arith.constant 16 : i32
      %374 = vector.broadcast %c16_i32_94 : i32 to vector<1x16xi32>
      %375 = arith.select %373, %32, %374 : vector<1x16xi1>, vector<1x16xi32>
      %376 = vector.shape_cast %375 : vector<1x16xi32> to vector<1x1x16xi32>
      %cst_95 = arith.constant dense<2147483647> : vector<1xi32>
      %377 = vector.multi_reduction <minsi>, %376, %cst_95 [1, 2] : vector<1x1x16xi32> to vector<1xi32>
      %378 = vector.shape_cast %377 : vector<1xi32> to vector<1x1x1xi32>
      %379 = vector.extract %378[0, 0, 0] : i32 from vector<1x1x1xi32>
      %cst_96 = arith.constant 2.000000e-01 : f32
      %380 = arith.cmpf ogt, %371, %cst_96 : f32
      %381 = vector.broadcast %c11_i32 : i32 to vector<1x32xi32>
      %382 = arith.cmpi eq, %31, %381 : vector<1x32xi32>
      %383 = vector.broadcast %380 : i1 to vector<1x32xi1>
      %384 = arith.andi %383, %382 : vector<1x32xi1>
      %385 = vector.broadcast %379 : i32 to vector<1x32xi32>
      %386 = arith.select %384, %385, %356 : vector<1x32xi1>, vector<1x32xi32>
      %387 = vector.broadcast %379 : i32 to vector<1x16xi32>
      %388 = arith.cmpi eq, %32, %387 : vector<1x16xi32>
      %389 = vector.broadcast %380 : i1 to vector<1x16xi1>
      %390 = arith.andi %389, %388 : vector<1x16xi1>
      %cst_97 = arith.constant 0.000000e+00 : f32
      %cst_98 = arith.constant 1.000000e+00 : f32
      %391 = vector.broadcast %cst_97 : f32 to vector<1x16xf32>
      %392 = vector.broadcast %cst_98 : f32 to vector<1x16xf32>
      %393 = arith.select %390, %391, %392 : vector<1x16xi1>, vector<1x16xf32>
      %394 = arith.mulf %364, %393 : vector<1x16xf32>
      %c12_i32 = arith.constant 12 : i32
      %395 = arith.index_cast %c12_i32 : i32 to index
      %c0_99 = arith.constant 0 : index
      %396 = vector.load %arg4[%395, %c0_99] : memref<32x16xf32, #tpu.memory_space<vmem>>, vector<1x16xf32>
      %397 = arith.mulf %396, %394 : vector<1x16xf32>
      %398 = vector.shape_cast %397 : vector<1x16xf32> to vector<1x1x16xf32>
      %cst_100 = arith.constant dense<0xFF800000> : vector<1xf32>
      %399 = vector.multi_reduction <maximumf>, %398, %cst_100 [1, 2] : vector<1x1x16xf32> to vector<1xf32>
      %400 = vector.shape_cast %399 : vector<1xf32> to vector<1x1x1xf32>
      %401 = vector.extract %400[0, 0, 0] : f32 from vector<1x1x1xf32>
      %402 = vector.broadcast %401 : f32 to vector<1x16xf32>
      %403 = arith.cmpf oeq, %397, %402 : vector<1x16xf32>
      %c16_i32_101 = arith.constant 16 : i32
      %404 = vector.broadcast %c16_i32_101 : i32 to vector<1x16xi32>
      %405 = arith.select %403, %32, %404 : vector<1x16xi1>, vector<1x16xi32>
      %406 = vector.shape_cast %405 : vector<1x16xi32> to vector<1x1x16xi32>
      %cst_102 = arith.constant dense<2147483647> : vector<1xi32>
      %407 = vector.multi_reduction <minsi>, %406, %cst_102 [1, 2] : vector<1x1x16xi32> to vector<1xi32>
      %408 = vector.shape_cast %407 : vector<1xi32> to vector<1x1x1xi32>
      %409 = vector.extract %408[0, 0, 0] : i32 from vector<1x1x1xi32>
      %cst_103 = arith.constant 2.000000e-01 : f32
      %410 = arith.cmpf ogt, %401, %cst_103 : f32
      %411 = vector.broadcast %c12_i32 : i32 to vector<1x32xi32>
      %412 = arith.cmpi eq, %31, %411 : vector<1x32xi32>
      %413 = vector.broadcast %410 : i1 to vector<1x32xi1>
      %414 = arith.andi %413, %412 : vector<1x32xi1>
      %415 = vector.broadcast %409 : i32 to vector<1x32xi32>
      %416 = arith.select %414, %415, %386 : vector<1x32xi1>, vector<1x32xi32>
      %417 = vector.broadcast %409 : i32 to vector<1x16xi32>
      %418 = arith.cmpi eq, %32, %417 : vector<1x16xi32>
      %419 = vector.broadcast %410 : i1 to vector<1x16xi1>
      %420 = arith.andi %419, %418 : vector<1x16xi1>
      %cst_104 = arith.constant 0.000000e+00 : f32
      %cst_105 = arith.constant 1.000000e+00 : f32
      %421 = vector.broadcast %cst_104 : f32 to vector<1x16xf32>
      %422 = vector.broadcast %cst_105 : f32 to vector<1x16xf32>
      %423 = arith.select %420, %421, %422 : vector<1x16xi1>, vector<1x16xf32>
      %424 = arith.mulf %394, %423 : vector<1x16xf32>
      %c13_i32 = arith.constant 13 : i32
      %425 = arith.index_cast %c13_i32 : i32 to index
      %c0_106 = arith.constant 0 : index
      %426 = vector.load %arg4[%425, %c0_106] : memref<32x16xf32, #tpu.memory_space<vmem>>, vector<1x16xf32>
      %427 = arith.mulf %426, %424 : vector<1x16xf32>
      %428 = vector.shape_cast %427 : vector<1x16xf32> to vector<1x1x16xf32>
      %cst_107 = arith.constant dense<0xFF800000> : vector<1xf32>
      %429 = vector.multi_reduction <maximumf>, %428, %cst_107 [1, 2] : vector<1x1x16xf32> to vector<1xf32>
      %430 = vector.shape_cast %429 : vector<1xf32> to vector<1x1x1xf32>
      %431 = vector.extract %430[0, 0, 0] : f32 from vector<1x1x1xf32>
      %432 = vector.broadcast %431 : f32 to vector<1x16xf32>
      %433 = arith.cmpf oeq, %427, %432 : vector<1x16xf32>
      %c16_i32_108 = arith.constant 16 : i32
      %434 = vector.broadcast %c16_i32_108 : i32 to vector<1x16xi32>
      %435 = arith.select %433, %32, %434 : vector<1x16xi1>, vector<1x16xi32>
      %436 = vector.shape_cast %435 : vector<1x16xi32> to vector<1x1x16xi32>
      %cst_109 = arith.constant dense<2147483647> : vector<1xi32>
      %437 = vector.multi_reduction <minsi>, %436, %cst_109 [1, 2] : vector<1x1x16xi32> to vector<1xi32>
      %438 = vector.shape_cast %437 : vector<1xi32> to vector<1x1x1xi32>
      %439 = vector.extract %438[0, 0, 0] : i32 from vector<1x1x1xi32>
      %cst_110 = arith.constant 2.000000e-01 : f32
      %440 = arith.cmpf ogt, %431, %cst_110 : f32
      %441 = vector.broadcast %c13_i32 : i32 to vector<1x32xi32>
      %442 = arith.cmpi eq, %31, %441 : vector<1x32xi32>
      %443 = vector.broadcast %440 : i1 to vector<1x32xi1>
      %444 = arith.andi %443, %442 : vector<1x32xi1>
      %445 = vector.broadcast %439 : i32 to vector<1x32xi32>
      %446 = arith.select %444, %445, %416 : vector<1x32xi1>, vector<1x32xi32>
      %447 = vector.broadcast %439 : i32 to vector<1x16xi32>
      %448 = arith.cmpi eq, %32, %447 : vector<1x16xi32>
      %449 = vector.broadcast %440 : i1 to vector<1x16xi1>
      %450 = arith.andi %449, %448 : vector<1x16xi1>
      %cst_111 = arith.constant 0.000000e+00 : f32
      %cst_112 = arith.constant 1.000000e+00 : f32
      %451 = vector.broadcast %cst_111 : f32 to vector<1x16xf32>
      %452 = vector.broadcast %cst_112 : f32 to vector<1x16xf32>
      %453 = arith.select %450, %451, %452 : vector<1x16xi1>, vector<1x16xf32>
      %454 = arith.mulf %424, %453 : vector<1x16xf32>
      %c14_i32 = arith.constant 14 : i32
      %455 = arith.index_cast %c14_i32 : i32 to index
      %c0_113 = arith.constant 0 : index
      %456 = vector.load %arg4[%455, %c0_113] : memref<32x16xf32, #tpu.memory_space<vmem>>, vector<1x16xf32>
      %457 = arith.mulf %456, %454 : vector<1x16xf32>
      %458 = vector.shape_cast %457 : vector<1x16xf32> to vector<1x1x16xf32>
      %cst_114 = arith.constant dense<0xFF800000> : vector<1xf32>
      %459 = vector.multi_reduction <maximumf>, %458, %cst_114 [1, 2] : vector<1x1x16xf32> to vector<1xf32>
      %460 = vector.shape_cast %459 : vector<1xf32> to vector<1x1x1xf32>
      %461 = vector.extract %460[0, 0, 0] : f32 from vector<1x1x1xf32>
      %462 = vector.broadcast %461 : f32 to vector<1x16xf32>
      %463 = arith.cmpf oeq, %457, %462 : vector<1x16xf32>
      %c16_i32_115 = arith.constant 16 : i32
      %464 = vector.broadcast %c16_i32_115 : i32 to vector<1x16xi32>
      %465 = arith.select %463, %32, %464 : vector<1x16xi1>, vector<1x16xi32>
      %466 = vector.shape_cast %465 : vector<1x16xi32> to vector<1x1x16xi32>
      %cst_116 = arith.constant dense<2147483647> : vector<1xi32>
      %467 = vector.multi_reduction <minsi>, %466, %cst_116 [1, 2] : vector<1x1x16xi32> to vector<1xi32>
      %468 = vector.shape_cast %467 : vector<1xi32> to vector<1x1x1xi32>
      %469 = vector.extract %468[0, 0, 0] : i32 from vector<1x1x1xi32>
      %cst_117 = arith.constant 2.000000e-01 : f32
      %470 = arith.cmpf ogt, %461, %cst_117 : f32
      %471 = vector.broadcast %c14_i32 : i32 to vector<1x32xi32>
      %472 = arith.cmpi eq, %31, %471 : vector<1x32xi32>
      %473 = vector.broadcast %470 : i1 to vector<1x32xi1>
      %474 = arith.andi %473, %472 : vector<1x32xi1>
      %475 = vector.broadcast %469 : i32 to vector<1x32xi32>
      %476 = arith.select %474, %475, %446 : vector<1x32xi1>, vector<1x32xi32>
      %477 = vector.broadcast %469 : i32 to vector<1x16xi32>
      %478 = arith.cmpi eq, %32, %477 : vector<1x16xi32>
      %479 = vector.broadcast %470 : i1 to vector<1x16xi1>
      %480 = arith.andi %479, %478 : vector<1x16xi1>
      %cst_118 = arith.constant 0.000000e+00 : f32
      %cst_119 = arith.constant 1.000000e+00 : f32
      %481 = vector.broadcast %cst_118 : f32 to vector<1x16xf32>
      %482 = vector.broadcast %cst_119 : f32 to vector<1x16xf32>
      %483 = arith.select %480, %481, %482 : vector<1x16xi1>, vector<1x16xf32>
      %484 = arith.mulf %454, %483 : vector<1x16xf32>
      %c15_i32 = arith.constant 15 : i32
      %485 = arith.index_cast %c15_i32 : i32 to index
      %c0_120 = arith.constant 0 : index
      %486 = vector.load %arg4[%485, %c0_120] : memref<32x16xf32, #tpu.memory_space<vmem>>, vector<1x16xf32>
      %487 = arith.mulf %486, %484 : vector<1x16xf32>
      %488 = vector.shape_cast %487 : vector<1x16xf32> to vector<1x1x16xf32>
      %cst_121 = arith.constant dense<0xFF800000> : vector<1xf32>
      %489 = vector.multi_reduction <maximumf>, %488, %cst_121 [1, 2] : vector<1x1x16xf32> to vector<1xf32>
      %490 = vector.shape_cast %489 : vector<1xf32> to vector<1x1x1xf32>
      %491 = vector.extract %490[0, 0, 0] : f32 from vector<1x1x1xf32>
      %492 = vector.broadcast %491 : f32 to vector<1x16xf32>
      %493 = arith.cmpf oeq, %487, %492 : vector<1x16xf32>
      %c16_i32_122 = arith.constant 16 : i32
      %494 = vector.broadcast %c16_i32_122 : i32 to vector<1x16xi32>
      %495 = arith.select %493, %32, %494 : vector<1x16xi1>, vector<1x16xi32>
      %496 = vector.shape_cast %495 : vector<1x16xi32> to vector<1x1x16xi32>
      %cst_123 = arith.constant dense<2147483647> : vector<1xi32>
      %497 = vector.multi_reduction <minsi>, %496, %cst_123 [1, 2] : vector<1x1x16xi32> to vector<1xi32>
      %498 = vector.shape_cast %497 : vector<1xi32> to vector<1x1x1xi32>
      %499 = vector.extract %498[0, 0, 0] : i32 from vector<1x1x1xi32>
      %cst_124 = arith.constant 2.000000e-01 : f32
      %500 = arith.cmpf ogt, %491, %cst_124 : f32
      %501 = vector.broadcast %c15_i32 : i32 to vector<1x32xi32>
      %502 = arith.cmpi eq, %31, %501 : vector<1x32xi32>
      %503 = vector.broadcast %500 : i1 to vector<1x32xi1>
      %504 = arith.andi %503, %502 : vector<1x32xi1>
      %505 = vector.broadcast %499 : i32 to vector<1x32xi32>
      %506 = arith.select %504, %505, %476 : vector<1x32xi1>, vector<1x32xi32>
      %507 = vector.broadcast %499 : i32 to vector<1x16xi32>
      %508 = arith.cmpi eq, %32, %507 : vector<1x16xi32>
      %509 = vector.broadcast %500 : i1 to vector<1x16xi1>
      %510 = arith.andi %509, %508 : vector<1x16xi1>
      %cst_125 = arith.constant 0.000000e+00 : f32
      %cst_126 = arith.constant 1.000000e+00 : f32
      %511 = vector.broadcast %cst_125 : f32 to vector<1x16xf32>
      %512 = vector.broadcast %cst_126 : f32 to vector<1x16xf32>
      %513 = arith.select %510, %511, %512 : vector<1x16xi1>, vector<1x16xf32>
      %514 = arith.mulf %484, %513 : vector<1x16xf32>
      %c16_i32_127 = arith.constant 16 : i32
      %515 = arith.index_cast %c16_i32_127 : i32 to index
      %c0_128 = arith.constant 0 : index
      %516 = vector.load %arg4[%515, %c0_128] : memref<32x16xf32, #tpu.memory_space<vmem>>, vector<1x16xf32>
      %517 = arith.mulf %516, %514 : vector<1x16xf32>
      %518 = vector.shape_cast %517 : vector<1x16xf32> to vector<1x1x16xf32>
      %cst_129 = arith.constant dense<0xFF800000> : vector<1xf32>
      %519 = vector.multi_reduction <maximumf>, %518, %cst_129 [1, 2] : vector<1x1x16xf32> to vector<1xf32>
      %520 = vector.shape_cast %519 : vector<1xf32> to vector<1x1x1xf32>
      %521 = vector.extract %520[0, 0, 0] : f32 from vector<1x1x1xf32>
      %522 = vector.broadcast %521 : f32 to vector<1x16xf32>
      %523 = arith.cmpf oeq, %517, %522 : vector<1x16xf32>
      %c16_i32_130 = arith.constant 16 : i32
      %524 = vector.broadcast %c16_i32_130 : i32 to vector<1x16xi32>
      %525 = arith.select %523, %32, %524 : vector<1x16xi1>, vector<1x16xi32>
      %526 = vector.shape_cast %525 : vector<1x16xi32> to vector<1x1x16xi32>
      %cst_131 = arith.constant dense<2147483647> : vector<1xi32>
      %527 = vector.multi_reduction <minsi>, %526, %cst_131 [1, 2] : vector<1x1x16xi32> to vector<1xi32>
      %528 = vector.shape_cast %527 : vector<1xi32> to vector<1x1x1xi32>
      %529 = vector.extract %528[0, 0, 0] : i32 from vector<1x1x1xi32>
      %cst_132 = arith.constant 2.000000e-01 : f32
      %530 = arith.cmpf ogt, %521, %cst_132 : f32
      %531 = vector.broadcast %c16_i32_127 : i32 to vector<1x32xi32>
      %532 = arith.cmpi eq, %31, %531 : vector<1x32xi32>
      %533 = vector.broadcast %530 : i1 to vector<1x32xi1>
      %534 = arith.andi %533, %532 : vector<1x32xi1>
      %535 = vector.broadcast %529 : i32 to vector<1x32xi32>
      %536 = arith.select %534, %535, %506 : vector<1x32xi1>, vector<1x32xi32>
      %537 = vector.broadcast %529 : i32 to vector<1x16xi32>
      %538 = arith.cmpi eq, %32, %537 : vector<1x16xi32>
      %539 = vector.broadcast %530 : i1 to vector<1x16xi1>
      %540 = arith.andi %539, %538 : vector<1x16xi1>
      %cst_133 = arith.constant 0.000000e+00 : f32
      %cst_134 = arith.constant 1.000000e+00 : f32
      %541 = vector.broadcast %cst_133 : f32 to vector<1x16xf32>
      %542 = vector.broadcast %cst_134 : f32 to vector<1x16xf32>
      %543 = arith.select %540, %541, %542 : vector<1x16xi1>, vector<1x16xf32>
      %544 = arith.mulf %514, %543 : vector<1x16xf32>
      %c17_i32 = arith.constant 17 : i32
      %545 = arith.index_cast %c17_i32 : i32 to index
      %c0_135 = arith.constant 0 : index
      %546 = vector.load %arg4[%545, %c0_135] : memref<32x16xf32, #tpu.memory_space<vmem>>, vector<1x16xf32>
      %547 = arith.mulf %546, %544 : vector<1x16xf32>
      %548 = vector.shape_cast %547 : vector<1x16xf32> to vector<1x1x16xf32>
      %cst_136 = arith.constant dense<0xFF800000> : vector<1xf32>
      %549 = vector.multi_reduction <maximumf>, %548, %cst_136 [1, 2] : vector<1x1x16xf32> to vector<1xf32>
      %550 = vector.shape_cast %549 : vector<1xf32> to vector<1x1x1xf32>
      %551 = vector.extract %550[0, 0, 0] : f32 from vector<1x1x1xf32>
      %552 = vector.broadcast %551 : f32 to vector<1x16xf32>
      %553 = arith.cmpf oeq, %547, %552 : vector<1x16xf32>
      %c16_i32_137 = arith.constant 16 : i32
      %554 = vector.broadcast %c16_i32_137 : i32 to vector<1x16xi32>
      %555 = arith.select %553, %32, %554 : vector<1x16xi1>, vector<1x16xi32>
      %556 = vector.shape_cast %555 : vector<1x16xi32> to vector<1x1x16xi32>
      %cst_138 = arith.constant dense<2147483647> : vector<1xi32>
      %557 = vector.multi_reduction <minsi>, %556, %cst_138 [1, 2] : vector<1x1x16xi32> to vector<1xi32>
      %558 = vector.shape_cast %557 : vector<1xi32> to vector<1x1x1xi32>
      %559 = vector.extract %558[0, 0, 0] : i32 from vector<1x1x1xi32>
      %cst_139 = arith.constant 2.000000e-01 : f32
      %560 = arith.cmpf ogt, %551, %cst_139 : f32
      %561 = vector.broadcast %c17_i32 : i32 to vector<1x32xi32>
      %562 = arith.cmpi eq, %31, %561 : vector<1x32xi32>
      %563 = vector.broadcast %560 : i1 to vector<1x32xi1>
      %564 = arith.andi %563, %562 : vector<1x32xi1>
      %565 = vector.broadcast %559 : i32 to vector<1x32xi32>
      %566 = arith.select %564, %565, %536 : vector<1x32xi1>, vector<1x32xi32>
      %567 = vector.broadcast %559 : i32 to vector<1x16xi32>
      %568 = arith.cmpi eq, %32, %567 : vector<1x16xi32>
      %569 = vector.broadcast %560 : i1 to vector<1x16xi1>
      %570 = arith.andi %569, %568 : vector<1x16xi1>
      %cst_140 = arith.constant 0.000000e+00 : f32
      %cst_141 = arith.constant 1.000000e+00 : f32
      %571 = vector.broadcast %cst_140 : f32 to vector<1x16xf32>
      %572 = vector.broadcast %cst_141 : f32 to vector<1x16xf32>
      %573 = arith.select %570, %571, %572 : vector<1x16xi1>, vector<1x16xf32>
      %574 = arith.mulf %544, %573 : vector<1x16xf32>
      %c18_i32 = arith.constant 18 : i32
      %575 = arith.index_cast %c18_i32 : i32 to index
      %c0_142 = arith.constant 0 : index
      %576 = vector.load %arg4[%575, %c0_142] : memref<32x16xf32, #tpu.memory_space<vmem>>, vector<1x16xf32>
      %577 = arith.mulf %576, %574 : vector<1x16xf32>
      %578 = vector.shape_cast %577 : vector<1x16xf32> to vector<1x1x16xf32>
      %cst_143 = arith.constant dense<0xFF800000> : vector<1xf32>
      %579 = vector.multi_reduction <maximumf>, %578, %cst_143 [1, 2] : vector<1x1x16xf32> to vector<1xf32>
      %580 = vector.shape_cast %579 : vector<1xf32> to vector<1x1x1xf32>
      %581 = vector.extract %580[0, 0, 0] : f32 from vector<1x1x1xf32>
      %582 = vector.broadcast %581 : f32 to vector<1x16xf32>
      %583 = arith.cmpf oeq, %577, %582 : vector<1x16xf32>
      %c16_i32_144 = arith.constant 16 : i32
      %584 = vector.broadcast %c16_i32_144 : i32 to vector<1x16xi32>
      %585 = arith.select %583, %32, %584 : vector<1x16xi1>, vector<1x16xi32>
      %586 = vector.shape_cast %585 : vector<1x16xi32> to vector<1x1x16xi32>
      %cst_145 = arith.constant dense<2147483647> : vector<1xi32>
      %587 = vector.multi_reduction <minsi>, %586, %cst_145 [1, 2] : vector<1x1x16xi32> to vector<1xi32>
      %588 = vector.shape_cast %587 : vector<1xi32> to vector<1x1x1xi32>
      %589 = vector.extract %588[0, 0, 0] : i32 from vector<1x1x1xi32>
      %cst_146 = arith.constant 2.000000e-01 : f32
      %590 = arith.cmpf ogt, %581, %cst_146 : f32
      %591 = vector.broadcast %c18_i32 : i32 to vector<1x32xi32>
      %592 = arith.cmpi eq, %31, %591 : vector<1x32xi32>
      %593 = vector.broadcast %590 : i1 to vector<1x32xi1>
      %594 = arith.andi %593, %592 : vector<1x32xi1>
      %595 = vector.broadcast %589 : i32 to vector<1x32xi32>
      %596 = arith.select %594, %595, %566 : vector<1x32xi1>, vector<1x32xi32>
      %597 = vector.broadcast %589 : i32 to vector<1x16xi32>
      %598 = arith.cmpi eq, %32, %597 : vector<1x16xi32>
      %599 = vector.broadcast %590 : i1 to vector<1x16xi1>
      %600 = arith.andi %599, %598 : vector<1x16xi1>
      %cst_147 = arith.constant 0.000000e+00 : f32
      %cst_148 = arith.constant 1.000000e+00 : f32
      %601 = vector.broadcast %cst_147 : f32 to vector<1x16xf32>
      %602 = vector.broadcast %cst_148 : f32 to vector<1x16xf32>
      %603 = arith.select %600, %601, %602 : vector<1x16xi1>, vector<1x16xf32>
      %604 = arith.mulf %574, %603 : vector<1x16xf32>
      %c19_i32 = arith.constant 19 : i32
      %605 = arith.index_cast %c19_i32 : i32 to index
      %c0_149 = arith.constant 0 : index
      %606 = vector.load %arg4[%605, %c0_149] : memref<32x16xf32, #tpu.memory_space<vmem>>, vector<1x16xf32>
      %607 = arith.mulf %606, %604 : vector<1x16xf32>
      %608 = vector.shape_cast %607 : vector<1x16xf32> to vector<1x1x16xf32>
      %cst_150 = arith.constant dense<0xFF800000> : vector<1xf32>
      %609 = vector.multi_reduction <maximumf>, %608, %cst_150 [1, 2] : vector<1x1x16xf32> to vector<1xf32>
      %610 = vector.shape_cast %609 : vector<1xf32> to vector<1x1x1xf32>
      %611 = vector.extract %610[0, 0, 0] : f32 from vector<1x1x1xf32>
      %612 = vector.broadcast %611 : f32 to vector<1x16xf32>
      %613 = arith.cmpf oeq, %607, %612 : vector<1x16xf32>
      %c16_i32_151 = arith.constant 16 : i32
      %614 = vector.broadcast %c16_i32_151 : i32 to vector<1x16xi32>
      %615 = arith.select %613, %32, %614 : vector<1x16xi1>, vector<1x16xi32>
      %616 = vector.shape_cast %615 : vector<1x16xi32> to vector<1x1x16xi32>
      %cst_152 = arith.constant dense<2147483647> : vector<1xi32>
      %617 = vector.multi_reduction <minsi>, %616, %cst_152 [1, 2] : vector<1x1x16xi32> to vector<1xi32>
      %618 = vector.shape_cast %617 : vector<1xi32> to vector<1x1x1xi32>
      %619 = vector.extract %618[0, 0, 0] : i32 from vector<1x1x1xi32>
      %cst_153 = arith.constant 2.000000e-01 : f32
      %620 = arith.cmpf ogt, %611, %cst_153 : f32
      %621 = vector.broadcast %c19_i32 : i32 to vector<1x32xi32>
      %622 = arith.cmpi eq, %31, %621 : vector<1x32xi32>
      %623 = vector.broadcast %620 : i1 to vector<1x32xi1>
      %624 = arith.andi %623, %622 : vector<1x32xi1>
      %625 = vector.broadcast %619 : i32 to vector<1x32xi32>
      %626 = arith.select %624, %625, %596 : vector<1x32xi1>, vector<1x32xi32>
      %627 = vector.broadcast %619 : i32 to vector<1x16xi32>
      %628 = arith.cmpi eq, %32, %627 : vector<1x16xi32>
      %629 = vector.broadcast %620 : i1 to vector<1x16xi1>
      %630 = arith.andi %629, %628 : vector<1x16xi1>
      %cst_154 = arith.constant 0.000000e+00 : f32
      %cst_155 = arith.constant 1.000000e+00 : f32
      %631 = vector.broadcast %cst_154 : f32 to vector<1x16xf32>
      %632 = vector.broadcast %cst_155 : f32 to vector<1x16xf32>
      %633 = arith.select %630, %631, %632 : vector<1x16xi1>, vector<1x16xf32>
      %634 = arith.mulf %604, %633 : vector<1x16xf32>
      %c20_i32 = arith.constant 20 : i32
      %635 = arith.index_cast %c20_i32 : i32 to index
      %c0_156 = arith.constant 0 : index
      %636 = vector.load %arg4[%635, %c0_156] : memref<32x16xf32, #tpu.memory_space<vmem>>, vector<1x16xf32>
      %637 = arith.mulf %636, %634 : vector<1x16xf32>
      %638 = vector.shape_cast %637 : vector<1x16xf32> to vector<1x1x16xf32>
      %cst_157 = arith.constant dense<0xFF800000> : vector<1xf32>
      %639 = vector.multi_reduction <maximumf>, %638, %cst_157 [1, 2] : vector<1x1x16xf32> to vector<1xf32>
      %640 = vector.shape_cast %639 : vector<1xf32> to vector<1x1x1xf32>
      %641 = vector.extract %640[0, 0, 0] : f32 from vector<1x1x1xf32>
      %642 = vector.broadcast %641 : f32 to vector<1x16xf32>
      %643 = arith.cmpf oeq, %637, %642 : vector<1x16xf32>
      %c16_i32_158 = arith.constant 16 : i32
      %644 = vector.broadcast %c16_i32_158 : i32 to vector<1x16xi32>
      %645 = arith.select %643, %32, %644 : vector<1x16xi1>, vector<1x16xi32>
      %646 = vector.shape_cast %645 : vector<1x16xi32> to vector<1x1x16xi32>
      %cst_159 = arith.constant dense<2147483647> : vector<1xi32>
      %647 = vector.multi_reduction <minsi>, %646, %cst_159 [1, 2] : vector<1x1x16xi32> to vector<1xi32>
      %648 = vector.shape_cast %647 : vector<1xi32> to vector<1x1x1xi32>
      %649 = vector.extract %648[0, 0, 0] : i32 from vector<1x1x1xi32>
      %cst_160 = arith.constant 2.000000e-01 : f32
      %650 = arith.cmpf ogt, %641, %cst_160 : f32
      %651 = vector.broadcast %c20_i32 : i32 to vector<1x32xi32>
      %652 = arith.cmpi eq, %31, %651 : vector<1x32xi32>
      %653 = vector.broadcast %650 : i1 to vector<1x32xi1>
      %654 = arith.andi %653, %652 : vector<1x32xi1>
      %655 = vector.broadcast %649 : i32 to vector<1x32xi32>
      %656 = arith.select %654, %655, %626 : vector<1x32xi1>, vector<1x32xi32>
      %657 = vector.broadcast %649 : i32 to vector<1x16xi32>
      %658 = arith.cmpi eq, %32, %657 : vector<1x16xi32>
      %659 = vector.broadcast %650 : i1 to vector<1x16xi1>
      %660 = arith.andi %659, %658 : vector<1x16xi1>
      %cst_161 = arith.constant 0.000000e+00 : f32
      %cst_162 = arith.constant 1.000000e+00 : f32
      %661 = vector.broadcast %cst_161 : f32 to vector<1x16xf32>
      %662 = vector.broadcast %cst_162 : f32 to vector<1x16xf32>
      %663 = arith.select %660, %661, %662 : vector<1x16xi1>, vector<1x16xf32>
      %664 = arith.mulf %634, %663 : vector<1x16xf32>
      %c21_i32 = arith.constant 21 : i32
      %665 = arith.index_cast %c21_i32 : i32 to index
      %c0_163 = arith.constant 0 : index
      %666 = vector.load %arg4[%665, %c0_163] : memref<32x16xf32, #tpu.memory_space<vmem>>, vector<1x16xf32>
      %667 = arith.mulf %666, %664 : vector<1x16xf32>
      %668 = vector.shape_cast %667 : vector<1x16xf32> to vector<1x1x16xf32>
      %cst_164 = arith.constant dense<0xFF800000> : vector<1xf32>
      %669 = vector.multi_reduction <maximumf>, %668, %cst_164 [1, 2] : vector<1x1x16xf32> to vector<1xf32>
      %670 = vector.shape_cast %669 : vector<1xf32> to vector<1x1x1xf32>
      %671 = vector.extract %670[0, 0, 0] : f32 from vector<1x1x1xf32>
      %672 = vector.broadcast %671 : f32 to vector<1x16xf32>
      %673 = arith.cmpf oeq, %667, %672 : vector<1x16xf32>
      %c16_i32_165 = arith.constant 16 : i32
      %674 = vector.broadcast %c16_i32_165 : i32 to vector<1x16xi32>
      %675 = arith.select %673, %32, %674 : vector<1x16xi1>, vector<1x16xi32>
      %676 = vector.shape_cast %675 : vector<1x16xi32> to vector<1x1x16xi32>
      %cst_166 = arith.constant dense<2147483647> : vector<1xi32>
      %677 = vector.multi_reduction <minsi>, %676, %cst_166 [1, 2] : vector<1x1x16xi32> to vector<1xi32>
      %678 = vector.shape_cast %677 : vector<1xi32> to vector<1x1x1xi32>
      %679 = vector.extract %678[0, 0, 0] : i32 from vector<1x1x1xi32>
      %cst_167 = arith.constant 2.000000e-01 : f32
      %680 = arith.cmpf ogt, %671, %cst_167 : f32
      %681 = vector.broadcast %c21_i32 : i32 to vector<1x32xi32>
      %682 = arith.cmpi eq, %31, %681 : vector<1x32xi32>
      %683 = vector.broadcast %680 : i1 to vector<1x32xi1>
      %684 = arith.andi %683, %682 : vector<1x32xi1>
      %685 = vector.broadcast %679 : i32 to vector<1x32xi32>
      %686 = arith.select %684, %685, %656 : vector<1x32xi1>, vector<1x32xi32>
      %687 = vector.broadcast %679 : i32 to vector<1x16xi32>
      %688 = arith.cmpi eq, %32, %687 : vector<1x16xi32>
      %689 = vector.broadcast %680 : i1 to vector<1x16xi1>
      %690 = arith.andi %689, %688 : vector<1x16xi1>
      %cst_168 = arith.constant 0.000000e+00 : f32
      %cst_169 = arith.constant 1.000000e+00 : f32
      %691 = vector.broadcast %cst_168 : f32 to vector<1x16xf32>
      %692 = vector.broadcast %cst_169 : f32 to vector<1x16xf32>
      %693 = arith.select %690, %691, %692 : vector<1x16xi1>, vector<1x16xf32>
      %694 = arith.mulf %664, %693 : vector<1x16xf32>
      %c22_i32 = arith.constant 22 : i32
      %695 = arith.index_cast %c22_i32 : i32 to index
      %c0_170 = arith.constant 0 : index
      %696 = vector.load %arg4[%695, %c0_170] : memref<32x16xf32, #tpu.memory_space<vmem>>, vector<1x16xf32>
      %697 = arith.mulf %696, %694 : vector<1x16xf32>
      %698 = vector.shape_cast %697 : vector<1x16xf32> to vector<1x1x16xf32>
      %cst_171 = arith.constant dense<0xFF800000> : vector<1xf32>
      %699 = vector.multi_reduction <maximumf>, %698, %cst_171 [1, 2] : vector<1x1x16xf32> to vector<1xf32>
      %700 = vector.shape_cast %699 : vector<1xf32> to vector<1x1x1xf32>
      %701 = vector.extract %700[0, 0, 0] : f32 from vector<1x1x1xf32>
      %702 = vector.broadcast %701 : f32 to vector<1x16xf32>
      %703 = arith.cmpf oeq, %697, %702 : vector<1x16xf32>
      %c16_i32_172 = arith.constant 16 : i32
      %704 = vector.broadcast %c16_i32_172 : i32 to vector<1x16xi32>
      %705 = arith.select %703, %32, %704 : vector<1x16xi1>, vector<1x16xi32>
      %706 = vector.shape_cast %705 : vector<1x16xi32> to vector<1x1x16xi32>
      %cst_173 = arith.constant dense<2147483647> : vector<1xi32>
      %707 = vector.multi_reduction <minsi>, %706, %cst_173 [1, 2] : vector<1x1x16xi32> to vector<1xi32>
      %708 = vector.shape_cast %707 : vector<1xi32> to vector<1x1x1xi32>
      %709 = vector.extract %708[0, 0, 0] : i32 from vector<1x1x1xi32>
      %cst_174 = arith.constant 2.000000e-01 : f32
      %710 = arith.cmpf ogt, %701, %cst_174 : f32
      %711 = vector.broadcast %c22_i32 : i32 to vector<1x32xi32>
      %712 = arith.cmpi eq, %31, %711 : vector<1x32xi32>
      %713 = vector.broadcast %710 : i1 to vector<1x32xi1>
      %714 = arith.andi %713, %712 : vector<1x32xi1>
      %715 = vector.broadcast %709 : i32 to vector<1x32xi32>
      %716 = arith.select %714, %715, %686 : vector<1x32xi1>, vector<1x32xi32>
      %717 = vector.broadcast %709 : i32 to vector<1x16xi32>
      %718 = arith.cmpi eq, %32, %717 : vector<1x16xi32>
      %719 = vector.broadcast %710 : i1 to vector<1x16xi1>
      %720 = arith.andi %719, %718 : vector<1x16xi1>
      %cst_175 = arith.constant 0.000000e+00 : f32
      %cst_176 = arith.constant 1.000000e+00 : f32
      %721 = vector.broadcast %cst_175 : f32 to vector<1x16xf32>
      %722 = vector.broadcast %cst_176 : f32 to vector<1x16xf32>
      %723 = arith.select %720, %721, %722 : vector<1x16xi1>, vector<1x16xf32>
      %724 = arith.mulf %694, %723 : vector<1x16xf32>
      %c23_i32 = arith.constant 23 : i32
      %725 = arith.index_cast %c23_i32 : i32 to index
      %c0_177 = arith.constant 0 : index
      %726 = vector.load %arg4[%725, %c0_177] : memref<32x16xf32, #tpu.memory_space<vmem>>, vector<1x16xf32>
      %727 = arith.mulf %726, %724 : vector<1x16xf32>
      %728 = vector.shape_cast %727 : vector<1x16xf32> to vector<1x1x16xf32>
      %cst_178 = arith.constant dense<0xFF800000> : vector<1xf32>
      %729 = vector.multi_reduction <maximumf>, %728, %cst_178 [1, 2] : vector<1x1x16xf32> to vector<1xf32>
      %730 = vector.shape_cast %729 : vector<1xf32> to vector<1x1x1xf32>
      %731 = vector.extract %730[0, 0, 0] : f32 from vector<1x1x1xf32>
      %732 = vector.broadcast %731 : f32 to vector<1x16xf32>
      %733 = arith.cmpf oeq, %727, %732 : vector<1x16xf32>
      %c16_i32_179 = arith.constant 16 : i32
      %734 = vector.broadcast %c16_i32_179 : i32 to vector<1x16xi32>
      %735 = arith.select %733, %32, %734 : vector<1x16xi1>, vector<1x16xi32>
      %736 = vector.shape_cast %735 : vector<1x16xi32> to vector<1x1x16xi32>
      %cst_180 = arith.constant dense<2147483647> : vector<1xi32>
      %737 = vector.multi_reduction <minsi>, %736, %cst_180 [1, 2] : vector<1x1x16xi32> to vector<1xi32>
      %738 = vector.shape_cast %737 : vector<1xi32> to vector<1x1x1xi32>
      %739 = vector.extract %738[0, 0, 0] : i32 from vector<1x1x1xi32>
      %cst_181 = arith.constant 2.000000e-01 : f32
      %740 = arith.cmpf ogt, %731, %cst_181 : f32
      %741 = vector.broadcast %c23_i32 : i32 to vector<1x32xi32>
      %742 = arith.cmpi eq, %31, %741 : vector<1x32xi32>
      %743 = vector.broadcast %740 : i1 to vector<1x32xi1>
      %744 = arith.andi %743, %742 : vector<1x32xi1>
      %745 = vector.broadcast %739 : i32 to vector<1x32xi32>
      %746 = arith.select %744, %745, %716 : vector<1x32xi1>, vector<1x32xi32>
      %747 = vector.broadcast %739 : i32 to vector<1x16xi32>
      %748 = arith.cmpi eq, %32, %747 : vector<1x16xi32>
      %749 = vector.broadcast %740 : i1 to vector<1x16xi1>
      %750 = arith.andi %749, %748 : vector<1x16xi1>
      %cst_182 = arith.constant 0.000000e+00 : f32
      %cst_183 = arith.constant 1.000000e+00 : f32
      %751 = vector.broadcast %cst_182 : f32 to vector<1x16xf32>
      %752 = vector.broadcast %cst_183 : f32 to vector<1x16xf32>
      %753 = arith.select %750, %751, %752 : vector<1x16xi1>, vector<1x16xf32>
      %754 = arith.mulf %724, %753 : vector<1x16xf32>
      %c24_i32 = arith.constant 24 : i32
      %755 = arith.index_cast %c24_i32 : i32 to index
      %c0_184 = arith.constant 0 : index
      %756 = vector.load %arg4[%755, %c0_184] : memref<32x16xf32, #tpu.memory_space<vmem>>, vector<1x16xf32>
      %757 = arith.mulf %756, %754 : vector<1x16xf32>
      %758 = vector.shape_cast %757 : vector<1x16xf32> to vector<1x1x16xf32>
      %cst_185 = arith.constant dense<0xFF800000> : vector<1xf32>
      %759 = vector.multi_reduction <maximumf>, %758, %cst_185 [1, 2] : vector<1x1x16xf32> to vector<1xf32>
      %760 = vector.shape_cast %759 : vector<1xf32> to vector<1x1x1xf32>
      %761 = vector.extract %760[0, 0, 0] : f32 from vector<1x1x1xf32>
      %762 = vector.broadcast %761 : f32 to vector<1x16xf32>
      %763 = arith.cmpf oeq, %757, %762 : vector<1x16xf32>
      %c16_i32_186 = arith.constant 16 : i32
      %764 = vector.broadcast %c16_i32_186 : i32 to vector<1x16xi32>
      %765 = arith.select %763, %32, %764 : vector<1x16xi1>, vector<1x16xi32>
      %766 = vector.shape_cast %765 : vector<1x16xi32> to vector<1x1x16xi32>
      %cst_187 = arith.constant dense<2147483647> : vector<1xi32>
      %767 = vector.multi_reduction <minsi>, %766, %cst_187 [1, 2] : vector<1x1x16xi32> to vector<1xi32>
      %768 = vector.shape_cast %767 : vector<1xi32> to vector<1x1x1xi32>
      %769 = vector.extract %768[0, 0, 0] : i32 from vector<1x1x1xi32>
      %cst_188 = arith.constant 2.000000e-01 : f32
      %770 = arith.cmpf ogt, %761, %cst_188 : f32
      %771 = vector.broadcast %c24_i32 : i32 to vector<1x32xi32>
      %772 = arith.cmpi eq, %31, %771 : vector<1x32xi32>
      %773 = vector.broadcast %770 : i1 to vector<1x32xi1>
      %774 = arith.andi %773, %772 : vector<1x32xi1>
      %775 = vector.broadcast %769 : i32 to vector<1x32xi32>
      %776 = arith.select %774, %775, %746 : vector<1x32xi1>, vector<1x32xi32>
      %777 = vector.broadcast %769 : i32 to vector<1x16xi32>
      %778 = arith.cmpi eq, %32, %777 : vector<1x16xi32>
      %779 = vector.broadcast %770 : i1 to vector<1x16xi1>
      %780 = arith.andi %779, %778 : vector<1x16xi1>
      %cst_189 = arith.constant 0.000000e+00 : f32
      %cst_190 = arith.constant 1.000000e+00 : f32
      %781 = vector.broadcast %cst_189 : f32 to vector<1x16xf32>
      %782 = vector.broadcast %cst_190 : f32 to vector<1x16xf32>
      %783 = arith.select %780, %781, %782 : vector<1x16xi1>, vector<1x16xf32>
      %784 = arith.mulf %754, %783 : vector<1x16xf32>
      %c25_i32 = arith.constant 25 : i32
      %785 = arith.index_cast %c25_i32 : i32 to index
      %c0_191 = arith.constant 0 : index
      %786 = vector.load %arg4[%785, %c0_191] : memref<32x16xf32, #tpu.memory_space<vmem>>, vector<1x16xf32>
      %787 = arith.mulf %786, %784 : vector<1x16xf32>
      %788 = vector.shape_cast %787 : vector<1x16xf32> to vector<1x1x16xf32>
      %cst_192 = arith.constant dense<0xFF800000> : vector<1xf32>
      %789 = vector.multi_reduction <maximumf>, %788, %cst_192 [1, 2] : vector<1x1x16xf32> to vector<1xf32>
      %790 = vector.shape_cast %789 : vector<1xf32> to vector<1x1x1xf32>
      %791 = vector.extract %790[0, 0, 0] : f32 from vector<1x1x1xf32>
      %792 = vector.broadcast %791 : f32 to vector<1x16xf32>
      %793 = arith.cmpf oeq, %787, %792 : vector<1x16xf32>
      %c16_i32_193 = arith.constant 16 : i32
      %794 = vector.broadcast %c16_i32_193 : i32 to vector<1x16xi32>
      %795 = arith.select %793, %32, %794 : vector<1x16xi1>, vector<1x16xi32>
      %796 = vector.shape_cast %795 : vector<1x16xi32> to vector<1x1x16xi32>
      %cst_194 = arith.constant dense<2147483647> : vector<1xi32>
      %797 = vector.multi_reduction <minsi>, %796, %cst_194 [1, 2] : vector<1x1x16xi32> to vector<1xi32>
      %798 = vector.shape_cast %797 : vector<1xi32> to vector<1x1x1xi32>
      %799 = vector.extract %798[0, 0, 0] : i32 from vector<1x1x1xi32>
      %cst_195 = arith.constant 2.000000e-01 : f32
      %800 = arith.cmpf ogt, %791, %cst_195 : f32
      %801 = vector.broadcast %c25_i32 : i32 to vector<1x32xi32>
      %802 = arith.cmpi eq, %31, %801 : vector<1x32xi32>
      %803 = vector.broadcast %800 : i1 to vector<1x32xi1>
      %804 = arith.andi %803, %802 : vector<1x32xi1>
      %805 = vector.broadcast %799 : i32 to vector<1x32xi32>
      %806 = arith.select %804, %805, %776 : vector<1x32xi1>, vector<1x32xi32>
      %807 = vector.broadcast %799 : i32 to vector<1x16xi32>
      %808 = arith.cmpi eq, %32, %807 : vector<1x16xi32>
      %809 = vector.broadcast %800 : i1 to vector<1x16xi1>
      %810 = arith.andi %809, %808 : vector<1x16xi1>
      %cst_196 = arith.constant 0.000000e+00 : f32
      %cst_197 = arith.constant 1.000000e+00 : f32
      %811 = vector.broadcast %cst_196 : f32 to vector<1x16xf32>
      %812 = vector.broadcast %cst_197 : f32 to vector<1x16xf32>
      %813 = arith.select %810, %811, %812 : vector<1x16xi1>, vector<1x16xf32>
      %814 = arith.mulf %784, %813 : vector<1x16xf32>
      %c26_i32 = arith.constant 26 : i32
      %815 = arith.index_cast %c26_i32 : i32 to index
      %c0_198 = arith.constant 0 : index
      %816 = vector.load %arg4[%815, %c0_198] : memref<32x16xf32, #tpu.memory_space<vmem>>, vector<1x16xf32>
      %817 = arith.mulf %816, %814 : vector<1x16xf32>
      %818 = vector.shape_cast %817 : vector<1x16xf32> to vector<1x1x16xf32>
      %cst_199 = arith.constant dense<0xFF800000> : vector<1xf32>
      %819 = vector.multi_reduction <maximumf>, %818, %cst_199 [1, 2] : vector<1x1x16xf32> to vector<1xf32>
      %820 = vector.shape_cast %819 : vector<1xf32> to vector<1x1x1xf32>
      %821 = vector.extract %820[0, 0, 0] : f32 from vector<1x1x1xf32>
      %822 = vector.broadcast %821 : f32 to vector<1x16xf32>
      %823 = arith.cmpf oeq, %817, %822 : vector<1x16xf32>
      %c16_i32_200 = arith.constant 16 : i32
      %824 = vector.broadcast %c16_i32_200 : i32 to vector<1x16xi32>
      %825 = arith.select %823, %32, %824 : vector<1x16xi1>, vector<1x16xi32>
      %826 = vector.shape_cast %825 : vector<1x16xi32> to vector<1x1x16xi32>
      %cst_201 = arith.constant dense<2147483647> : vector<1xi32>
      %827 = vector.multi_reduction <minsi>, %826, %cst_201 [1, 2] : vector<1x1x16xi32> to vector<1xi32>
      %828 = vector.shape_cast %827 : vector<1xi32> to vector<1x1x1xi32>
      %829 = vector.extract %828[0, 0, 0] : i32 from vector<1x1x1xi32>
      %cst_202 = arith.constant 2.000000e-01 : f32
      %830 = arith.cmpf ogt, %821, %cst_202 : f32
      %831 = vector.broadcast %c26_i32 : i32 to vector<1x32xi32>
      %832 = arith.cmpi eq, %31, %831 : vector<1x32xi32>
      %833 = vector.broadcast %830 : i1 to vector<1x32xi1>
      %834 = arith.andi %833, %832 : vector<1x32xi1>
      %835 = vector.broadcast %829 : i32 to vector<1x32xi32>
      %836 = arith.select %834, %835, %806 : vector<1x32xi1>, vector<1x32xi32>
      %837 = vector.broadcast %829 : i32 to vector<1x16xi32>
      %838 = arith.cmpi eq, %32, %837 : vector<1x16xi32>
      %839 = vector.broadcast %830 : i1 to vector<1x16xi1>
      %840 = arith.andi %839, %838 : vector<1x16xi1>
      %cst_203 = arith.constant 0.000000e+00 : f32
      %cst_204 = arith.constant 1.000000e+00 : f32
      %841 = vector.broadcast %cst_203 : f32 to vector<1x16xf32>
      %842 = vector.broadcast %cst_204 : f32 to vector<1x16xf32>
      %843 = arith.select %840, %841, %842 : vector<1x16xi1>, vector<1x16xf32>
      %844 = arith.mulf %814, %843 : vector<1x16xf32>
      %c27_i32 = arith.constant 27 : i32
      %845 = arith.index_cast %c27_i32 : i32 to index
      %c0_205 = arith.constant 0 : index
      %846 = vector.load %arg4[%845, %c0_205] : memref<32x16xf32, #tpu.memory_space<vmem>>, vector<1x16xf32>
      %847 = arith.mulf %846, %844 : vector<1x16xf32>
      %848 = vector.shape_cast %847 : vector<1x16xf32> to vector<1x1x16xf32>
      %cst_206 = arith.constant dense<0xFF800000> : vector<1xf32>
      %849 = vector.multi_reduction <maximumf>, %848, %cst_206 [1, 2] : vector<1x1x16xf32> to vector<1xf32>
      %850 = vector.shape_cast %849 : vector<1xf32> to vector<1x1x1xf32>
      %851 = vector.extract %850[0, 0, 0] : f32 from vector<1x1x1xf32>
      %852 = vector.broadcast %851 : f32 to vector<1x16xf32>
      %853 = arith.cmpf oeq, %847, %852 : vector<1x16xf32>
      %c16_i32_207 = arith.constant 16 : i32
      %854 = vector.broadcast %c16_i32_207 : i32 to vector<1x16xi32>
      %855 = arith.select %853, %32, %854 : vector<1x16xi1>, vector<1x16xi32>
      %856 = vector.shape_cast %855 : vector<1x16xi32> to vector<1x1x16xi32>
      %cst_208 = arith.constant dense<2147483647> : vector<1xi32>
      %857 = vector.multi_reduction <minsi>, %856, %cst_208 [1, 2] : vector<1x1x16xi32> to vector<1xi32>
      %858 = vector.shape_cast %857 : vector<1xi32> to vector<1x1x1xi32>
      %859 = vector.extract %858[0, 0, 0] : i32 from vector<1x1x1xi32>
      %cst_209 = arith.constant 2.000000e-01 : f32
      %860 = arith.cmpf ogt, %851, %cst_209 : f32
      %861 = vector.broadcast %c27_i32 : i32 to vector<1x32xi32>
      %862 = arith.cmpi eq, %31, %861 : vector<1x32xi32>
      %863 = vector.broadcast %860 : i1 to vector<1x32xi1>
      %864 = arith.andi %863, %862 : vector<1x32xi1>
      %865 = vector.broadcast %859 : i32 to vector<1x32xi32>
      %866 = arith.select %864, %865, %836 : vector<1x32xi1>, vector<1x32xi32>
      %867 = vector.broadcast %859 : i32 to vector<1x16xi32>
      %868 = arith.cmpi eq, %32, %867 : vector<1x16xi32>
      %869 = vector.broadcast %860 : i1 to vector<1x16xi1>
      %870 = arith.andi %869, %868 : vector<1x16xi1>
      %cst_210 = arith.constant 0.000000e+00 : f32
      %cst_211 = arith.constant 1.000000e+00 : f32
      %871 = vector.broadcast %cst_210 : f32 to vector<1x16xf32>
      %872 = vector.broadcast %cst_211 : f32 to vector<1x16xf32>
      %873 = arith.select %870, %871, %872 : vector<1x16xi1>, vector<1x16xf32>
      %874 = arith.mulf %844, %873 : vector<1x16xf32>
      %c28_i32 = arith.constant 28 : i32
      %875 = arith.index_cast %c28_i32 : i32 to index
      %c0_212 = arith.constant 0 : index
      %876 = vector.load %arg4[%875, %c0_212] : memref<32x16xf32, #tpu.memory_space<vmem>>, vector<1x16xf32>
      %877 = arith.mulf %876, %874 : vector<1x16xf32>
      %878 = vector.shape_cast %877 : vector<1x16xf32> to vector<1x1x16xf32>
      %cst_213 = arith.constant dense<0xFF800000> : vector<1xf32>
      %879 = vector.multi_reduction <maximumf>, %878, %cst_213 [1, 2] : vector<1x1x16xf32> to vector<1xf32>
      %880 = vector.shape_cast %879 : vector<1xf32> to vector<1x1x1xf32>
      %881 = vector.extract %880[0, 0, 0] : f32 from vector<1x1x1xf32>
      %882 = vector.broadcast %881 : f32 to vector<1x16xf32>
      %883 = arith.cmpf oeq, %877, %882 : vector<1x16xf32>
      %c16_i32_214 = arith.constant 16 : i32
      %884 = vector.broadcast %c16_i32_214 : i32 to vector<1x16xi32>
      %885 = arith.select %883, %32, %884 : vector<1x16xi1>, vector<1x16xi32>
      %886 = vector.shape_cast %885 : vector<1x16xi32> to vector<1x1x16xi32>
      %cst_215 = arith.constant dense<2147483647> : vector<1xi32>
      %887 = vector.multi_reduction <minsi>, %886, %cst_215 [1, 2] : vector<1x1x16xi32> to vector<1xi32>
      %888 = vector.shape_cast %887 : vector<1xi32> to vector<1x1x1xi32>
      %889 = vector.extract %888[0, 0, 0] : i32 from vector<1x1x1xi32>
      %cst_216 = arith.constant 2.000000e-01 : f32
      %890 = arith.cmpf ogt, %881, %cst_216 : f32
      %891 = vector.broadcast %c28_i32 : i32 to vector<1x32xi32>
      %892 = arith.cmpi eq, %31, %891 : vector<1x32xi32>
      %893 = vector.broadcast %890 : i1 to vector<1x32xi1>
      %894 = arith.andi %893, %892 : vector<1x32xi1>
      %895 = vector.broadcast %889 : i32 to vector<1x32xi32>
      %896 = arith.select %894, %895, %866 : vector<1x32xi1>, vector<1x32xi32>
      %897 = vector.broadcast %889 : i32 to vector<1x16xi32>
      %898 = arith.cmpi eq, %32, %897 : vector<1x16xi32>
      %899 = vector.broadcast %890 : i1 to vector<1x16xi1>
      %900 = arith.andi %899, %898 : vector<1x16xi1>
      %cst_217 = arith.constant 0.000000e+00 : f32
      %cst_218 = arith.constant 1.000000e+00 : f32
      %901 = vector.broadcast %cst_217 : f32 to vector<1x16xf32>
      %902 = vector.broadcast %cst_218 : f32 to vector<1x16xf32>
      %903 = arith.select %900, %901, %902 : vector<1x16xi1>, vector<1x16xf32>
      %904 = arith.mulf %874, %903 : vector<1x16xf32>
      %c29_i32 = arith.constant 29 : i32
      %905 = arith.index_cast %c29_i32 : i32 to index
      %c0_219 = arith.constant 0 : index
      %906 = vector.load %arg4[%905, %c0_219] : memref<32x16xf32, #tpu.memory_space<vmem>>, vector<1x16xf32>
      %907 = arith.mulf %906, %904 : vector<1x16xf32>
      %908 = vector.shape_cast %907 : vector<1x16xf32> to vector<1x1x16xf32>
      %cst_220 = arith.constant dense<0xFF800000> : vector<1xf32>
      %909 = vector.multi_reduction <maximumf>, %908, %cst_220 [1, 2] : vector<1x1x16xf32> to vector<1xf32>
      %910 = vector.shape_cast %909 : vector<1xf32> to vector<1x1x1xf32>
      %911 = vector.extract %910[0, 0, 0] : f32 from vector<1x1x1xf32>
      %912 = vector.broadcast %911 : f32 to vector<1x16xf32>
      %913 = arith.cmpf oeq, %907, %912 : vector<1x16xf32>
      %c16_i32_221 = arith.constant 16 : i32
      %914 = vector.broadcast %c16_i32_221 : i32 to vector<1x16xi32>
      %915 = arith.select %913, %32, %914 : vector<1x16xi1>, vector<1x16xi32>
      %916 = vector.shape_cast %915 : vector<1x16xi32> to vector<1x1x16xi32>
      %cst_222 = arith.constant dense<2147483647> : vector<1xi32>
      %917 = vector.multi_reduction <minsi>, %916, %cst_222 [1, 2] : vector<1x1x16xi32> to vector<1xi32>
      %918 = vector.shape_cast %917 : vector<1xi32> to vector<1x1x1xi32>
      %919 = vector.extract %918[0, 0, 0] : i32 from vector<1x1x1xi32>
      %cst_223 = arith.constant 2.000000e-01 : f32
      %920 = arith.cmpf ogt, %911, %cst_223 : f32
      %921 = vector.broadcast %c29_i32 : i32 to vector<1x32xi32>
      %922 = arith.cmpi eq, %31, %921 : vector<1x32xi32>
      %923 = vector.broadcast %920 : i1 to vector<1x32xi1>
      %924 = arith.andi %923, %922 : vector<1x32xi1>
      %925 = vector.broadcast %919 : i32 to vector<1x32xi32>
      %926 = arith.select %924, %925, %896 : vector<1x32xi1>, vector<1x32xi32>
      %927 = vector.broadcast %919 : i32 to vector<1x16xi32>
      %928 = arith.cmpi eq, %32, %927 : vector<1x16xi32>
      %929 = vector.broadcast %920 : i1 to vector<1x16xi1>
      %930 = arith.andi %929, %928 : vector<1x16xi1>
      %cst_224 = arith.constant 0.000000e+00 : f32
      %cst_225 = arith.constant 1.000000e+00 : f32
      %931 = vector.broadcast %cst_224 : f32 to vector<1x16xf32>
      %932 = vector.broadcast %cst_225 : f32 to vector<1x16xf32>
      %933 = arith.select %930, %931, %932 : vector<1x16xi1>, vector<1x16xf32>
      %934 = arith.mulf %904, %933 : vector<1x16xf32>
      %c30_i32 = arith.constant 30 : i32
      %935 = arith.index_cast %c30_i32 : i32 to index
      %c0_226 = arith.constant 0 : index
      %936 = vector.load %arg4[%935, %c0_226] : memref<32x16xf32, #tpu.memory_space<vmem>>, vector<1x16xf32>
      %937 = arith.mulf %936, %934 : vector<1x16xf32>
      %938 = vector.shape_cast %937 : vector<1x16xf32> to vector<1x1x16xf32>
      %cst_227 = arith.constant dense<0xFF800000> : vector<1xf32>
      %939 = vector.multi_reduction <maximumf>, %938, %cst_227 [1, 2] : vector<1x1x16xf32> to vector<1xf32>
      %940 = vector.shape_cast %939 : vector<1xf32> to vector<1x1x1xf32>
      %941 = vector.extract %940[0, 0, 0] : f32 from vector<1x1x1xf32>
      %942 = vector.broadcast %941 : f32 to vector<1x16xf32>
      %943 = arith.cmpf oeq, %937, %942 : vector<1x16xf32>
      %c16_i32_228 = arith.constant 16 : i32
      %944 = vector.broadcast %c16_i32_228 : i32 to vector<1x16xi32>
      %945 = arith.select %943, %32, %944 : vector<1x16xi1>, vector<1x16xi32>
      %946 = vector.shape_cast %945 : vector<1x16xi32> to vector<1x1x16xi32>
      %cst_229 = arith.constant dense<2147483647> : vector<1xi32>
      %947 = vector.multi_reduction <minsi>, %946, %cst_229 [1, 2] : vector<1x1x16xi32> to vector<1xi32>
      %948 = vector.shape_cast %947 : vector<1xi32> to vector<1x1x1xi32>
      %949 = vector.extract %948[0, 0, 0] : i32 from vector<1x1x1xi32>
      %cst_230 = arith.constant 2.000000e-01 : f32
      %950 = arith.cmpf ogt, %941, %cst_230 : f32
      %951 = vector.broadcast %c30_i32 : i32 to vector<1x32xi32>
      %952 = arith.cmpi eq, %31, %951 : vector<1x32xi32>
      %953 = vector.broadcast %950 : i1 to vector<1x32xi1>
      %954 = arith.andi %953, %952 : vector<1x32xi1>
      %955 = vector.broadcast %949 : i32 to vector<1x32xi32>
      %956 = arith.select %954, %955, %926 : vector<1x32xi1>, vector<1x32xi32>
      %957 = vector.broadcast %949 : i32 to vector<1x16xi32>
      %958 = arith.cmpi eq, %32, %957 : vector<1x16xi32>
      %959 = vector.broadcast %950 : i1 to vector<1x16xi1>
      %960 = arith.andi %959, %958 : vector<1x16xi1>
      %cst_231 = arith.constant 0.000000e+00 : f32
      %cst_232 = arith.constant 1.000000e+00 : f32
      %961 = vector.broadcast %cst_231 : f32 to vector<1x16xf32>
      %962 = vector.broadcast %cst_232 : f32 to vector<1x16xf32>
      %963 = arith.select %960, %961, %962 : vector<1x16xi1>, vector<1x16xf32>
      %964 = arith.mulf %934, %963 : vector<1x16xf32>
      %c31_i32 = arith.constant 31 : i32
      %965 = arith.index_cast %c31_i32 : i32 to index
      %c0_233 = arith.constant 0 : index
      %966 = vector.load %arg4[%965, %c0_233] : memref<32x16xf32, #tpu.memory_space<vmem>>, vector<1x16xf32>
      %967 = arith.mulf %966, %964 : vector<1x16xf32>
      %968 = vector.shape_cast %967 : vector<1x16xf32> to vector<1x1x16xf32>
      %cst_234 = arith.constant dense<0xFF800000> : vector<1xf32>
      %969 = vector.multi_reduction <maximumf>, %968, %cst_234 [1, 2] : vector<1x1x16xf32> to vector<1xf32>
      %970 = vector.shape_cast %969 : vector<1xf32> to vector<1x1x1xf32>
      %971 = vector.extract %970[0, 0, 0] : f32 from vector<1x1x1xf32>
      %972 = vector.broadcast %971 : f32 to vector<1x16xf32>
      %973 = arith.cmpf oeq, %967, %972 : vector<1x16xf32>
      %c16_i32_235 = arith.constant 16 : i32
      %974 = vector.broadcast %c16_i32_235 : i32 to vector<1x16xi32>
      %975 = arith.select %973, %32, %974 : vector<1x16xi1>, vector<1x16xi32>
      %976 = vector.shape_cast %975 : vector<1x16xi32> to vector<1x1x16xi32>
      %cst_236 = arith.constant dense<2147483647> : vector<1xi32>
      %977 = vector.multi_reduction <minsi>, %976, %cst_236 [1, 2] : vector<1x1x16xi32> to vector<1xi32>
      %978 = vector.shape_cast %977 : vector<1xi32> to vector<1x1x1xi32>
      %979 = vector.extract %978[0, 0, 0] : i32 from vector<1x1x1xi32>
      %cst_237 = arith.constant 2.000000e-01 : f32
      %980 = arith.cmpf ogt, %971, %cst_237 : f32
      %981 = vector.broadcast %c31_i32 : i32 to vector<1x32xi32>
      %982 = arith.cmpi eq, %31, %981 : vector<1x32xi32>
      %983 = vector.broadcast %980 : i1 to vector<1x32xi1>
      %984 = arith.andi %983, %982 : vector<1x32xi1>
      %985 = vector.broadcast %979 : i32 to vector<1x32xi32>
      %986 = arith.select %984, %985, %956 : vector<1x32xi1>, vector<1x32xi32>
      %987 = vector.broadcast %979 : i32 to vector<1x16xi32>
      %988 = arith.cmpi eq, %32, %987 : vector<1x16xi32>
      %989 = vector.broadcast %980 : i1 to vector<1x16xi1>
      %990 = arith.andi %989, %988 : vector<1x16xi1>
      %cst_238 = arith.constant 0.000000e+00 : f32
      %cst_239 = arith.constant 1.000000e+00 : f32
      %991 = vector.broadcast %cst_238 : f32 to vector<1x16xf32>
      %992 = vector.broadcast %cst_239 : f32 to vector<1x16xf32>
      %993 = arith.select %990, %991, %992 : vector<1x16xi1>, vector<1x16xf32>
      %994 = arith.mulf %964, %993 : vector<1x16xf32>
      %c32_i32 = arith.constant 32 : i32
      %c0_240 = arith.constant 0 : index
      %c0_241 = arith.constant 0 : index
      %995 = vector.load %arg3[%c0_240, %c0_241] : memref<1x32xi32, #tpu.memory_space<vmem>>, vector<1x32xi32>
      tpu.vector_store %arg3[%c0_240, %c0_241], %986 {strides = array<i32>} : memref<1x32xi32, #tpu.memory_space<vmem>>, vector<1x32xi32>,
    } else {
    }
    return
  }
  func.func @transform_0(%arg0: i32) -> (i32, i32) {
    %c0_i32 = arith.constant 0 : i32
    %c0_i32_0 = arith.constant 0 : i32
    return %arg0, %c0_i32 : i32, i32
  }
  func.func @transform_1(%arg0: i32) -> (i32, i32) {
    %c0_i32 = arith.constant 0 : i32
    %c0_i32_0 = arith.constant 0 : i32
    %c0_i32_1 = arith.constant 0 : i32
    return %c0_i32, %c0_i32_0 : i32, i32
  }
  func.func @transform_2(%arg0: i32) -> (i32, i32) {
    %c0_i32 = arith.constant 0 : i32
    %c0_i32_0 = arith.constant 0 : i32
    %c0_i32_1 = arith.constant 0 : i32
    return %c0_i32, %c0_i32_0 : i32, i32
  }
}

</mosaic_0001>

<llo_original>
// kernel: consecutive_frames_matcher.1
$region0: #{consecutive_frames_matcher.1}
  #allocation0 [shape = 'u32[]', space=smem, size = 0x4, offset = 0x4, fixed_abs, tag = 'smem constant byte address 0x4 - core index']
  #allocation1 [shape = 'u32[72,128]{1,0:T(1,128)}', space=vmem, size = 0x9000, scoped, tag = 'internal scratch']
  #allocation2 [shape = 'f32[32,16]{1,0:T(8,128)}', space=vmem, size = 0x4000, scoped, tag = 'scratch operand']
  %s0 = inlined_call_operand.vmem [shape: f32[32,512], index: 0, kind: input, shape index: {}]
  %s1 = inlined_call_operand.vmem [shape: f32[512,16], index: 1, kind: input, shape index: {}]
  %s2 = inlined_call_operand.hbm [shape: s32[1,32], index: 2, kind: output, shape index: {}]
  %s3 = sld [smem:[#allocation0]]
  $region45: #{consecutive_frames_matcher.1} parent=0
    _
  %s5 = ssub.s32 1, %s3
  %s6 = scalar_select 0, %s5, %s3
  $region1: #{consecutive_frames_matcher.1} parent=0
    #allocation3 [shape = 'u8[512]{0}', space=vmem, size = 0x400, scoped, tag = 'output window, operand 0, single buffered']
    #allocation4 [shape = 's32[2]{0}', space=sflag, size = 0x8, scoped, tag = 'scoped memory for consecutive_frames_matcher.1']
    %7 = vsyncpa [#allocation4], 0
    loop: start=0, step=1, limit=6
    $region2: #{consecutive_frames_matcher.1} parent=1 // loop_pre_header
      _
    $region3: #{consecutive_frames_matcher.1} parent=1 // loop_header
      %s9 = sphi 0, %s13
      %p10 = scmp.ge.s32.totalorder %s9, 6
      %s19 = sphi 0, %s21
      %s22 = sphi 0, %s19
      %s23 = sphi 0, %s22
      %s39 = sphi 0, %s23
      %s43 = sphi 0, %s43
      %s45 = sphi 0, %s43
      %s46 = sphi 0, %s45
      %s60 = sphi 0, %s46
      %s64 = sphi 0, %s64
      %s66 = sphi 0, %s64
      %s67 = sphi 0, %s66
      %s81 = sphi 0, %s67
    $region4: #{consecutive_frames_matcher.1} parent=1 // loop_header_branch
      %12 = sbr.rel (%p10) target = $region8
    $region5: #{consecutive_frames_matcher.1} parent=1 // loop_body
      %s14 = ssub.s32 %s9, 1
      %s15 = ssub.s32 %s9, 2
      %s16 = sadd.s32 %s9, 1
      %s17 = ssub.s32 %s9, %s16
      %p18 = scmp.eq.s32.totalorder %s17, 0
      %s20 = sadd.s32 %s19, 1
      %s21 = scalar_select %p18, %s19, %s20
      %p24 = pneg %p18
      %p25 = scmp.eq.s32.totalorder %s9, 3
      %p26 = por %p24, %p25
      %p27 = scmp.ne.s32.totalorder %s19, %s22
      %p28 = scmp.eq.s32.totalorder %s9, 0
      %p29 = por %p27, %p28
      %p30 = scmp.ne.s32.totalorder %s19, %s22
      %p31 = scmp.eq.s32.totalorder %s14, 3
      %p32 = por %p30, %p31
      %p33 = scmp.ne.s32.totalorder %s22, %s23
      %p34 = scmp.eq.s32.totalorder %s14, 0
      %p35 = por %p33, %p34
      %p36 = scmp.ne.s32.totalorder %s22, %s23
      %p37 = scmp.eq.s32.totalorder %s15, 3
      %p38 = por %p36, %p37
      %p40 = scmp.ne.s32.totalorder %s23, %s39
      %p41 = scmp.eq.s32.totalorder %s15, 0
      %p42 = por %p40, %p41
      %s44 = sadd.s32 %s43, 1
      %p47 = scmp.eq.s32.totalorder %s9, 3
      %p48 = scmp.ne.s32.totalorder %s43, %s45
      %p49 = scmp.eq.s32.totalorder %s9, 0
      %p50 = por %p48, %p49
      %p51 = scmp.ne.s32.totalorder %s43, %s45
      %p52 = scmp.eq.s32.totalorder %s14, 3
      %p53 = por %p51, %p52
      %p54 = scmp.ne.s32.totalorder %s45, %s46
      %p55 = scmp.eq.s32.totalorder %s14, 0
      %p56 = por %p54, %p55
      %p57 = scmp.ne.s32.totalorder %s45, %s46
      %p58 = scmp.eq.s32.totalorder %s15, 3
      %p59 = por %p57, %p58
      %p61 = scmp.ne.s32.totalorder %s46, %s60
      %p62 = scmp.eq.s32.totalorder %s15, 0
      %p63 = por %p61, %p62
      %s65 = sadd.s32 %s64, 1
      %p68 = scmp.eq.s32.totalorder %s9, 3
      %p69 = scmp.ne.s32.totalorder %s64, %s66
      %p70 = scmp.eq.s32.totalorder %s9, 0
      %p71 = por %p69, %p70
      %p72 = scmp.ne.s32.totalorder %s64, %s66
      %p73 = scmp.eq.s32.totalorder %s14, 3
      %p74 = por %p72, %p73
      %p75 = scmp.ne.s32.totalorder %s66, %s67
      %p76 = scmp.eq.s32.totalorder %s14, 0
      %p77 = por %p75, %p76
      %p78 = scmp.ne.s32.totalorder %s66, %s67
      %p79 = scmp.eq.s32.totalorder %s15, 3
      %p80 = por %p78, %p79
      %p82 = scmp.ne.s32.totalorder %s67, %s81
      %p83 = scmp.eq.s32.totalorder %s15, 0
      %p84 = por %p82, %p83
      %p85 = scmp.le.s32.totalorder 1, %s9
      %p86 = scmp.lt.s32.totalorder %s9, 5
      %p87 = pnand %p85, %p86
      %p88 = pneg %p87
      // Predicated region
      $region9: #{consecutive_frames_matcher.1} parent=5 // pred_check
        _
      $region10: #{consecutive_frames_matcher.1} parent=5 // pred_check_branch
        %90 = sbr.rel (%p87) target = $region12
      $region11: #{consecutive_frames_matcher.1} parent=5 // pred_region
        %s91 = ssub.s32 %s9, 1
        // Predicated region
        $region13: #{consecutive_frames_matcher.1} parent=11 // pred_check
          %p92 = pneg %p56
        $region14: #{consecutive_frames_matcher.1} parent=11 // pred_check_branch
          %94 = sbr.rel (%p92) target = $region16
        $region15: #{consecutive_frames_matcher.1} parent=11 // pred_region
          _
        $region16: #{consecutive_frames_matcher.1} parent=11 // pred_fallthru
          _
      $region12: #{consecutive_frames_matcher.1} parent=5 // pred_fallthru
        _
      %p95 = scmp.lt.s32.totalorder %s9, 4
      // Predicated region
      $region17: #{consecutive_frames_matcher.1} parent=5 // pred_check
        %p96 = pneg %p95
      $region18: #{consecutive_frames_matcher.1} parent=5 // pred_check_branch
        %98 = sbr.rel (%p96) target = $region20
      $region19: #{consecutive_frames_matcher.1} parent=5 // pred_region
        // Predicated region
        $region21: #{consecutive_frames_matcher.1} parent=19 // pred_check
          %p99 = pneg %p29
        $region22: #{consecutive_frames_matcher.1} parent=19 // pred_check_branch
          %101 = sbr.rel (%p99) target = $region24
        $region23: #{consecutive_frames_matcher.1} parent=19 // pred_region
          %p102 = scmp.lt.s32.totalorder %s9, 3
          %s103 = scalar_select %p102, %s9, 3
          %s104 = smul.addr %s103, 4
          %s105 = smul.addr %s104, 8
          %s106 = scalar_lea.vmem %s0, %s105
        $region24: #{consecutive_frames_matcher.1} parent=19 // pred_fallthru
          _
      $region20: #{consecutive_frames_matcher.1} parent=5 // pred_fallthru
        _
      %p107 = scmp.le.s32.totalorder 1, %s9
      %p108 = scmp.lt.s32.totalorder %s9, 5
      %p109 = pnand %p107, %p108
      %p110 = pneg %p109
      // Predicated region
      $region25: #{consecutive_frames_matcher.1} parent=5 // pred_check
        _
      $region26: #{consecutive_frames_matcher.1} parent=5 // pred_check_branch
        %112 = sbr.rel (%p109) target = $region28
      $region27: #{consecutive_frames_matcher.1} parent=5 // pred_region
        %s113 = ssub.s32 %s9, 1
        %p114 = scmp.lt.s32.totalorder %s14, 3
        %s115 = scalar_select %p114, %s14, 3
        %s116 = smul.addr %s115, 4
        %s117 = smul.addr %s116, 8
        %s118 = scalar_lea.vmem %s0, %s117
        %p119 = pneg %p35
        %p120 = pneg %p32
        %p121 = pneg %p56
        %p122 = pneg %p53
        %p123 = pneg %p77
        %p124 = pneg %p74
        %p125 = scmp.lt.s32.totalorder %s14, 3
        %s126 = scalar_select %p125, %s14, 3
        %s127 = smul.addr %s126, 4
        %s128 = smul.addr %s127, 8
        %s129 = scalar_lea.vmem %s0, %s128
        %v130 = vld [vmem:[%s129] sm:$0xff]
        %v131 = vld [vmem:[%s129 + $0x8] sm:$0xff]
        %v132 = vld [vmem:[%s129 + $0x10] sm:$0xff]
        %v133 = vld [vmem:[%s129 + $0x18] sm:$0xff]
        %v134 = vld [vmem:[%s1] sm:$0xff]
        %v135 = vld [vmem:[%s1 + $0x8] sm:$0xff]
        %v136 = vld [vmem:[%s1 + $0x10] sm:$0xff]
        %v137 = vld [vmem:[%s1 + $0x18] sm:$0xff]
        %v138 = vld [vmem:[%s1 + $0x20] sm:$0xff]
        %v139 = vld [vmem:[%s1 + $0x28] sm:$0xff]
        %v140 = vld [vmem:[%s1 + $0x30] sm:$0xff]
        %v141 = vld [vmem:[%s1 + $0x38] sm:$0xff]
        %v142 = vld [vmem:[%s1 + $0x40] sm:$0xff]
        %v143 = vld [vmem:[%s1 + $0x48] sm:$0xff]
        %v144 = vld [vmem:[%s1 + $0x50] sm:$0xff]
        %v145 = vld [vmem:[%s1 + $0x58] sm:$0xff]
        %v146 = vld [vmem:[%s1 + $0x60] sm:$0xff]
        %v147 = vld [vmem:[%s1 + $0x68] sm:$0xff]
        %v148 = vld [vmem:[%s1 + $0x70] sm:$0xff]
        %v149 = vld [vmem:[%s1 + $0x78] sm:$0xff]
        %v150 = vld [vmem:[%s1 + $0x80] sm:$0xff]
        %v151 = vld [vmem:[%s1 + $0x88] sm:$0xff]
        %v152 = vld [vmem:[%s1 + $0x90] sm:$0xff]
        %v153 = vld [vmem:[%s1 + $0x98] sm:$0xff]
        %v154 = vld [vmem:[%s1 + $0xa0] sm:$0xff]
        %v155 = vld [vmem:[%s1 + $0xa8] sm:$0xff]
        %v156 = vld [vmem:[%s1 + $0xb0] sm:$0xff]
        %v157 = vld [vmem:[%s1 + $0xb8] sm:$0xff]
        %v158 = vld [vmem:[%s1 + $0xc0] sm:$0xff]
        %v159 = vld [vmem:[%s1 + $0xc8] sm:$0xff]
        %v160 = vld [vmem:[%s1 + $0xd0] sm:$0xff]
        %v161 = vld [vmem:[%s1 + $0xd8] sm:$0xff]
        %v162 = vld [vmem:[%s1 + $0xe0] sm:$0xff]
        %v163 = vld [vmem:[%s1 + $0xe8] sm:$0xff]
        %v164 = vld [vmem:[%s1 + $0xf0] sm:$0xff]
        %v165 = vld [vmem:[%s1 + $0xf8] sm:$0xff]
        %v166 = vld [vmem:[%s1 + $0x100] sm:$0xff]
        %v167 = vld [vmem:[%s1 + $0x108] sm:$0xff]
        %v168 = vld [vmem:[%s1 + $0x110] sm:$0xff]
        %v169 = vld [vmem:[%s1 + $0x118] sm:$0xff]
        %v170 = vld [vmem:[%s1 + $0x120] sm:$0xff]
        %v171 = vld [vmem:[%s1 + $0x128] sm:$0xff]
        %v172 = vld [vmem:[%s1 + $0x130] sm:$0xff]
        %v173 = vld [vmem:[%s1 + $0x138] sm:$0xff]
        %v174 = vld [vmem:[%s1 + $0x140] sm:$0xff]
        %v175 = vld [vmem:[%s1 + $0x148] sm:$0xff]
        %v176 = vld [vmem:[%s1 + $0x150] sm:$0xff]
        %v177 = vld [vmem:[%s1 + $0x158] sm:$0xff]
        %v178 = vld [vmem:[%s1 + $0x160] sm:$0xff]
        %v179 = vld [vmem:[%s1 + $0x168] sm:$0xff]
        %v180 = vld [vmem:[%s1 + $0x170] sm:$0xff]
        %v181 = vld [vmem:[%s1 + $0x178] sm:$0xff]
        %v182 = vld [vmem:[%s1 + $0x180] sm:$0xff]
        %v183 = vld [vmem:[%s1 + $0x188] sm:$0xff]
        %v184 = vld [vmem:[%s1 + $0x190] sm:$0xff]
        %v185 = vld [vmem:[%s1 + $0x198] sm:$0xff]
        %v186 = vld [vmem:[%s1 + $0x1a0] sm:$0xff]
        %v187 = vld [vmem:[%s1 + $0x1a8] sm:$0xff]
        %v188 = vld [vmem:[%s1 + $0x1b0] sm:$0xff]
        %v189 = vld [vmem:[%s1 + $0x1b8] sm:$0xff]
        %v190 = vld [vmem:[%s1 + $0x1c0] sm:$0xff]
        %v191 = vld [vmem:[%s1 + $0x1c8] sm:$0xff]
        %v192 = vld [vmem:[%s1 + $0x1d0] sm:$0xff]
        %v193 = vld [vmem:[%s1 + $0x1d8] sm:$0xff]
        %v194 = vld [vmem:[%s1 + $0x1e0] sm:$0xff]
        %v195 = vld [vmem:[%s1 + $0x1e8] sm:$0xff]
        %v196 = vld [vmem:[%s1 + $0x1f0] sm:$0xff]
        %v197 = vld [vmem:[%s1 + $0x1f8] sm:$0xff]
        %198 = vmatpush.msra.mxu0 %v149
        %199 = vmatpush.msra.mxu0 %v148
        %200 = vmatpush.msra.mxu0 %v147
        %201 = vmatpush.msra.mxu0 %v146
        %202 = vmatpush.msra.mxu0 %v145
        %203 = vmatpush.msra.mxu0 %v144
        %204 = vmatpush.msra.mxu0 %v143
        %205 = vmatpush.msra.mxu0 %v142
        %206 = vmatpush.msra.mxu0 %v141
        %207 = vmatpush.msra.mxu0 %v140
        %208 = vmatpush.msra.mxu0 %v139
        %209 = vmatpush.msra.mxu0 %v138
        %210 = vmatpush.msra.mxu0 %v137
        %211 = vmatpush.msra.mxu0 %v136
        %212 = vmatpush.msra.mxu0 %v135
        %213 = vmatpush.msra.mxu0 %v134
        %214 = vmatmul.f32.gmra.mxu0 %v130
        %v215 = vpop.f32.mrf.mxu0
        %v216 = vadd.f32 0.0, %v215
        %217 = vdwg.mxu0
        %218 = vmatpush.msra.mxu0 %v165
        %219 = vmatpush.msra.mxu0 %v164
        %220 = vmatpush.msra.mxu0 %v163
        %221 = vmatpush.msra.mxu0 %v162
        %222 = vmatpush.msra.mxu0 %v161
        %223 = vmatpush.msra.mxu0 %v160
        %224 = vmatpush.msra.mxu0 %v159
        %225 = vmatpush.msra.mxu0 %v158
        %226 = vmatpush.msra.mxu0 %v157
        %227 = vmatpush.msra.mxu0 %v156
        %228 = vmatpush.msra.mxu0 %v155
        %229 = vmatpush.msra.mxu0 %v154
        %230 = vmatpush.msra.mxu0 %v153
        %231 = vmatpush.msra.mxu0 %v152
        %232 = vmatpush.msra.mxu0 %v151
        %233 = vmatpush.msra.mxu0 %v150
        %234 = vmatmul.f32.gmra.mxu0 %v131
        %v235 = vpop.f32.mrf.mxu0
        %v236 = vadd.f32 %v216, %v235
        %237 = vdwg.mxu0
        %238 = vmatpush.msra.mxu0 %v181
        %239 = vmatpush.msra.mxu0 %v180
        %240 = vmatpush.msra.mxu0 %v179
        %241 = vmatpush.msra.mxu0 %v178
        %242 = vmatpush.msra.mxu0 %v177
        %243 = vmatpush.msra.mxu0 %v176
        %244 = vmatpush.msra.mxu0 %v175
        %245 = vmatpush.msra.mxu0 %v174
        %246 = vmatpush.msra.mxu0 %v173
        %247 = vmatpush.msra.mxu0 %v172
        %248 = vmatpush.msra.mxu0 %v171
        %249 = vmatpush.msra.mxu0 %v170
        %250 = vmatpush.msra.mxu0 %v169
        %251 = vmatpush.msra.mxu0 %v168
        %252 = vmatpush.msra.mxu0 %v167
        %253 = vmatpush.msra.mxu0 %v166
        %254 = vmatmul.f32.gmra.mxu0 %v132
        %v255 = vpop.f32.mrf.mxu0
        %v256 = vadd.f32 %v236, %v255
        %257 = vdwg.mxu0
        %258 = vmatpush.msra.mxu0 %v197
        %259 = vmatpush.msra.mxu0 %v196
        %260 = vmatpush.msra.mxu0 %v195
        %261 = vmatpush.msra.mxu0 %v194
        %262 = vmatpush.msra.mxu0 %v193
        %263 = vmatpush.msra.mxu0 %v192
        %264 = vmatpush.msra.mxu0 %v191
        %265 = vmatpush.msra.mxu0 %v190
        %266 = vmatpush.msra.mxu0 %v189
        %267 = vmatpush.msra.mxu0 %v188
        %268 = vmatpush.msra.mxu0 %v187
        %269 = vmatpush.msra.mxu0 %v186
        %270 = vmatpush.msra.mxu0 %v185
        %271 = vmatpush.msra.mxu0 %v184
        %272 = vmatpush.msra.mxu0 %v183
        %273 = vmatpush.msra.mxu0 %v182
        %274 = vmatmul.f32.gmra.mxu0 %v133
        %v275 = vpop.f32.mrf.mxu0
        %v276 = vadd.f32 %v256, %v275
        %277 = vdwg.mxu0
        %s278 = smul.u32 %s14, 8
        %s279 = scalar_lea.vmem [#allocation2], %s278
        %vm280 = vcmask 130048
        %281 = vst.msk [vmem:[%s279] sm:$0xff] %vm280, %v276
        %p282 = scmp.eq.s32.totalorder %s14, 3
        // Predicated region
        $region29: #{consecutive_frames_matcher.1} parent=27 // pred_check
          %p283 = pneg %p282
        $region30: #{consecutive_frames_matcher.1} parent=27 // pred_check_branch
          %285 = sbr.rel (%p283) target = $region32
        $region31: #{consecutive_frames_matcher.1} parent=27 // pred_region
          %v286 = vld [vmem:[#allocation2] sm:$0xff]
          %v287 = vld [vmem:[#allocation2 + $0x8] sm:$0xff]
          %v288 = vld [vmem:[#allocation2 + $0x10] sm:$0xff]
          %v289 = vld [vmem:[#allocation2 + $0x18] sm:$0xff]
          %v290 = vsel %vm280, %v286, -inf
          %v291 = vsel %vm280, %v287, -inf
          %v292 = vsel %vm280, %v288, -inf
          %v293 = vsel %vm280, %v289, -inf
          %v294 = vmax.f32 %v290, %v291
          %v295 = vmax.f32 %v292, %v293
          %v296 = vmax.f32 %v294, %v295
          %297 = vmax.xlane.f32.xlu0 %v296
          %v298 = vpop.xlane.xlu0 %297
          %v299 = vrot.slane %v298, 4
          %v300 = vmax.f32 %v298, %v299
          %v301 = vrot.slane %v300, 2
          %v302 = vmax.f32 %v300, %v301
          %v303 = vrot.slane %v302, 1
          %v304 = vmax.f32 %v302, %v303
          %s305 = vtos %v304
          %v306 = vstv %s305
          %v307 = vsub.f32 %v286, %v306
          %v308 = vsub.f32 %v287, %v306
          %v309 = vsub.f32 %v288, %v306
          %v310 = vsub.f32 %v289, %v306
          %v311 = vmul.f32 %v307, 1.442695
          %v312 = vpow.pop %v311
          %v313 = vmul.f32 %v308, 1.442695
          %v314 = vpow.pop %v313
          %v315 = vmul.f32 %v309, 1.442695
          %v316 = vpow.pop %v315
          %v317 = vmul.f32 %v310, 1.442695
          %v318 = vpow.pop %v317
          %v319 = vsel %vm280, %v312, 0.0
          %320 = vadd.xlane.f32.xlu0 %v319
          %v321 = vpop.xlane.xlu0 %320
          %v322 = vsel %vm280, %v314, 0.0
          %323 = vadd.xlane.f32.xlu0 %v322
          %v324 = vpop.xlane.xlu0 %323
          %v325 = vsel %vm280, %v316, 0.0
          %326 = vadd.xlane.f32.xlu0 %v325
          %v327 = vpop.xlane.xlu0 %326
          %v328 = vsel %vm280, %v318, 0.0
          %329 = vadd.xlane.f32.xlu0 %v328
          %v330 = vpop.xlane.xlu0 %329
          %v331 = vrcp.pop %v321
          %v332 = vmul.f32 %v321, %v331
          %v333 = vsub.f32 1.0, %v332
          %v334 = vmul.f32 %v331, %v333
          %v335 = vadd.f32 %v331, %v334
          %vm336 = vweird.f32 %v321
          %vm337 = vweird.f32 %v331
          %vm338 = vmor %vm336, %vm337
          %v339 = vsel %vm338, %v331, %v335
          %v340 = vand.u32 2147483647, %v321
          %vm341 = vcmp.eq.f32.partialorder %v340, 8.507059e+37
          %v342 = vand.u32 %v321, 2147483648
          %v343 = vor.u32 1.1754944e-38, %v342
          %v344 = vsel %vm341, %v343, %v339
          %v345 = vrcp.pop %v324
          %v346 = vmul.f32 %v324, %v345
          %v347 = vsub.f32 1.0, %v346
          %v348 = vmul.f32 %v345, %v347
          %v349 = vadd.f32 %v345, %v348
          %vm350 = vweird.f32 %v324
          %vm351 = vweird.f32 %v345
          %vm352 = vmor %vm350, %vm351
          %v353 = vsel %vm352, %v345, %v349
          %v354 = vand.u32 2147483647, %v324
          %vm355 = vcmp.eq.f32.partialorder %v354, 8.507059e+37
          %v356 = vand.u32 %v324, 2147483648
          %v357 = vor.u32 1.1754944e-38, %v356
          %v358 = vsel %vm355, %v357, %v353
          %v359 = vrcp.pop %v327
          %v360 = vmul.f32 %v327, %v359
          %v361 = vsub.f32 1.0, %v360
          %v362 = vmul.f32 %v359, %v361
          %v363 = vadd.f32 %v359, %v362
          %vm364 = vweird.f32 %v327
          %vm365 = vweird.f32 %v359
          %vm366 = vmor %vm364, %vm365
          %v367 = vsel %vm366, %v359, %v363
          %v368 = vand.u32 2147483647, %v327
          %vm369 = vcmp.eq.f32.partialorder %v368, 8.507059e+37
          %v370 = vand.u32 %v327, 2147483648
          %v371 = vor.u32 1.1754944e-38, %v370
          %v372 = vsel %vm369, %v371, %v367
          %v373 = vrcp.pop %v330
          %v374 = vmul.f32 %v330, %v373
          %v375 = vsub.f32 1.0, %v374
          %v376 = vmul.f32 %v373, %v375
          %v377 = vadd.f32 %v373, %v376
          %vm378 = vweird.f32 %v330
          %vm379 = vweird.f32 %v373
          %vm380 = vmor %vm378, %vm379
          %v381 = vsel %vm380, %v373, %v377
          %v382 = vand.u32 2147483647, %v330
          %vm383 = vcmp.eq.f32.partialorder %v382, 8.507059e+37
          %v384 = vand.u32 %v330, 2147483648
          %v385 = vor.u32 1.1754944e-38, %v384
          %v386 = vsel %vm383, %v385, %v381
          %v387 = vadd.f32 %v319, %v322
          %v388 = vadd.f32 %v387, %v325
          %v389 = vadd.f32 %v388, %v328
          %v390 = vrot.slane %v389, 4
          %v391 = vadd.f32 %v389, %v390
          %v392 = vrot.slane %v391, 2
          %v393 = vadd.f32 %v391, %v392
          %v394 = vrot.slane %v393, 1
          %v395 = vadd.f32 %v393, %v394
          %v396 = vrcp.pop %v395
          %v397 = vmul.f32 %v395, %v396
          %v398 = vsub.f32 1.0, %v397
          %v399 = vmul.f32 %v396, %v398
          %v400 = vadd.f32 %v396, %v399
          %vm401 = vweird.f32 %v395
          %vm402 = vweird.f32 %v396
          %vm403 = vmor %vm401, %vm402
          %v404 = vsel %vm403, %v396, %v400
          %v405 = vand.u32 2147483647, %v395
          %vm406 = vcmp.eq.f32.partialorder %v405, 8.507059e+37
          %v407 = vand.u32 %v395, 2147483648
          %v408 = vor.u32 1.1754944e-38, %v407
          %v409 = vsel %vm406, %v408, %v404
          %v410 = vadd.f32 %v344, %v409
          %v411 = vadd.f32 %v358, %v409
          %v412 = vadd.f32 %v372, %v409
          %v413 = vadd.f32 %v386, %v409
          %v414 = vmul.f32 %v410, 0.5
          %v415 = vmul.f32 %v411, 0.5
          %v416 = vmul.f32 %v412, 0.5
          %v417 = vmul.f32 %v413, 0.5
          %v418 = vmul.f32 %v312, %v414
          %v419 = vmul.f32 %v314, %v415
          %v420 = vmul.f32 %v316, %v416
          %v421 = vmul.f32 %v318, %v417
          %422 = vst.msk [vmem:[#allocation2] sm:$0xff] %vm280, %v418
          %423 = vst.msk [vmem:[#allocation2 + $0x8] sm:$0xff] %vm280, %v419
          %424 = vst.msk [vmem:[#allocation2 + $0x10] sm:$0xff] %vm280, %v420
          %425 = vst.msk [vmem:[#allocation2 + $0x18] sm:$0xff] %vm280, %v421
          %v426 = vlaneseq
          %v427 = vand.u32 %v426, 127
          %v428 = vld [vmem:[#allocation2] sm:$0x1]
          %vm429 = vcmask 122880
          %v430 = vsel %vm429, %v428, -inf
          %431 = vmax.xlane.f32.xlu0 %v430
          %v432 = vpop.xlane.xlu0 %431
          %v433 = vrot.slane %v432, 4
          %v434 = vmax.f32 %v432, %v433
          %v435 = vrot.slane %v434, 2
          %v436 = vmax.f32 %v434, %v435
          %v437 = vrot.slane %v436, 1
          %v438 = vmax.f32 %v436, %v437
          %s439 = vtos %v438
          %v440 = vstv %s439
          %vm441 = vcmp.eq.f32.partialorder %v428, %v440
          %v442 = vsel %vm441, %v427, 16
          %v443 = vsel %vm429, %v442, 2147483647
          %v444 = vand.u32 %v443, 65535
          %v445 = vshra.s32 %v443, 16
          %v446 = vcvt.s32.f32 %v444
          %v447 = vcvt.s32.f32 %v445
          %448 = vmin.xlane.f32.xlu0 %v447
          %v449 = vpop.xlane.xlu0 %448
          %vm450 = vcmp.eq.f32.partialorder %v447, %v449
          %v451 = vsel %vm450, %v446, inf
          %452 = vmin.xlane.f32.xlu0 %v451
          %v453 = vpop.xlane.xlu0 %452
          %v454 = vcvt.f32.s32 %v453
          %v455 = vcvt.f32.s32 %v449
          %v456 = vshll.u32 %v455, 16
          %v457 = vadd.s32 %v456, %v454
          %v458 = vrot.slane %v457, 4
          %vm459 = vcmp.lt.s32.totalorder %v457, %v458
          %v460 = vsel %vm459, %v457, %v458
          %v461 = vrot.slane %v460, 2
          %vm462 = vcmp.lt.s32.totalorder %v460, %v461
          %v463 = vsel %vm462, %v460, %v461
          %v464 = vrot.slane %v463, 1
          %vm465 = vcmp.lt.s32.totalorder %v463, %v464
          %v466 = vsel %vm465, %v463, %v464
          %s467 = vtos %v466
          %p468 = scmp.gt.f32.partialorder %s439, 0.2
          %vm469 = vcmp.eq.s32.totalorder %v427, 0
          %s470 = scalar_select %p468, 1, 0
          %v471 = vstv %s470
          %vm472 = vcmp.eq.s32.totalorder %v471, 1
          %vm473 = vmand %vm472, %vm469
          %v474 = vstv %s467
          %v475 = vsel %vm473, %v474, 4294967295
          %vm476 = vcmp.eq.s32.totalorder %v427, %v474
          %vm477 = vmand %vm472, %vm476
          %v478 = vsel %vm477, 0.0, 1.0
          %v479 = vld [vmem:[#allocation2 + $0x1] sm:$0x1]
          %v480 = vmul.f32 %v479, %v478
          %v481 = vsel %vm429, %v480, -inf
          %482 = vmax.xlane.f32.xlu0 %v481
          %v483 = vpop.xlane.xlu0 %482
          %v484 = vrot.slane %v483, 4
          %v485 = vmax.f32 %v483, %v484
          %v486 = vrot.slane %v485, 2
          %v487 = vmax.f32 %v485, %v486
          %v488 = vrot.slane %v487, 1
          %v489 = vmax.f32 %v487, %v488
          %s490 = vtos %v489
          %v491 = vstv %s490
          %vm492 = vcmp.eq.f32.partialorder %v480, %v491
          %v493 = vsel %vm492, %v427, 16
          %v494 = vsel %vm429, %v493, 2147483647
          %v495 = vand.u32 %v494, 65535
          %v496 = vshra.s32 %v494, 16
          %v497 = vcvt.s32.f32 %v495
          %v498 = vcvt.s32.f32 %v496
          %499 = vmin.xlane.f32.xlu0 %v498
          %v500 = vpop.xlane.xlu0 %499
          %vm501 = vcmp.eq.f32.partialorder %v498, %v500
          %v502 = vsel %vm501, %v497, inf
          %503 = vmin.xlane.f32.xlu0 %v502
          %v504 = vpop.xlane.xlu0 %503
          %v505 = vcvt.f32.s32 %v504
          %v506 = vcvt.f32.s32 %v500
          %v507 = vshll.u32 %v506, 16
          %v508 = vadd.s32 %v507, %v505
          %v509 = vrot.slane %v508, 4
          %vm510 = vcmp.lt.s32.totalorder %v508, %v509
          %v511 = vsel %vm510, %v508, %v509
          %v512 = vrot.slane %v511, 2
          %vm513 = vcmp.lt.s32.totalorder %v511, %v512
          %v514 = vsel %vm513, %v511, %v512
          %v515 = vrot.slane %v514, 1
          %vm516 = vcmp.lt.s32.totalorder %v514, %v515
          %v517 = vsel %vm516, %v514, %v515
          %s518 = vtos %v517
          %p519 = scmp.gt.f32.partialorder %s490, 0.2
          %vm520 = vcmp.eq.s32.totalorder %v427, 1
          %s521 = scalar_select %p519, 1, 0
          %v522 = vstv %s521
          %vm523 = vcmp.eq.s32.totalorder %v522, 1
          %vm524 = vmand %vm523, %vm520
          %v525 = vstv %s518
          %v526 = vsel %vm524, %v525, %v475
          %vm527 = vcmp.eq.s32.totalorder %v427, %v525
          %vm528 = vmand %vm523, %vm527
          %v529 = vsel %vm528, 0.0, 1.0
          %v530 = vmul.f32 %v478, %v529
          %v531 = vld [vmem:[#allocation2 + $0x2] sm:$0x1]
          %v532 = vmul.f32 %v531, %v530
          %v533 = vsel %vm429, %v532, -inf
          %534 = vmax.xlane.f32.xlu0 %v533
          %v535 = vpop.xlane.xlu0 %534
          %v536 = vrot.slane %v535, 4
          %v537 = vmax.f32 %v535, %v536
          %v538 = vrot.slane %v537, 2
          %v539 = vmax.f32 %v537, %v538
          %v540 = vrot.slane %v539, 1
          %v541 = vmax.f32 %v539, %v540
          %s542 = vtos %v541
          %v543 = vstv %s542
          %vm544 = vcmp.eq.f32.partialorder %v532, %v543
          %v545 = vsel %vm544, %v427, 16
          %v546 = vsel %vm429, %v545, 2147483647
          %v547 = vand.u32 %v546, 65535
          %v548 = vshra.s32 %v546, 16
          %v549 = vcvt.s32.f32 %v547
          %v550 = vcvt.s32.f32 %v548
          %551 = vmin.xlane.f32.xlu0 %v550
          %v552 = vpop.xlane.xlu0 %551
          %vm553 = vcmp.eq.f32.partialorder %v550, %v552
          %v554 = vsel %vm553, %v549, inf
          %555 = vmin.xlane.f32.xlu0 %v554
          %v556 = vpop.xlane.xlu0 %555
          %v557 = vcvt.f32.s32 %v556
          %v558 = vcvt.f32.s32 %v552
          %v559 = vshll.u32 %v558, 16
          %v560 = vadd.s32 %v559, %v557
          %v561 = vrot.slane %v560, 4
          %vm562 = vcmp.lt.s32.totalorder %v560, %v561
          %v563 = vsel %vm562, %v560, %v561
          %v564 = vrot.slane %v563, 2
          %vm565 = vcmp.lt.s32.totalorder %v563, %v564
          %v566 = vsel %vm565, %v563, %v564
          %v567 = vrot.slane %v566, 1
          %vm568 = vcmp.lt.s32.totalorder %v566, %v567
          %v569 = vsel %vm568, %v566, %v567
          %s570 = vtos %v569
          %p571 = scmp.gt.f32.partialorder %s542, 0.2
          %vm572 = vcmp.eq.s32.totalorder %v427, 2
          %s573 = scalar_select %p571, 1, 0
          %v574 = vstv %s573
          %vm575 = vcmp.eq.s32.totalorder %v574, 1
          %vm576 = vmand %vm575, %vm572
          %v577 = vstv %s570
          %v578 = vsel %vm576, %v577, %v526
          %vm579 = vcmp.eq.s32.totalorder %v427, %v577
          %vm580 = vmand %vm575, %vm579
          %v581 = vsel %vm580, 0.0, 1.0
          %v582 = vmul.f32 %v530, %v581
          %v583 = vld [vmem:[#allocation2 + $0x3] sm:$0x1]
          %v584 = vmul.f32 %v583, %v582
          %v585 = vsel %vm429, %v584, -inf
          %586 = vmax.xlane.f32.xlu0 %v585
          %v587 = vpop.xlane.xlu0 %586
          %v588 = vrot.slane %v587, 4
          %v589 = vmax.f32 %v587, %v588
          %v590 = vrot.slane %v589, 2
          %v591 = vmax.f32 %v589, %v590
          %v592 = vrot.slane %v591, 1
          %v593 = vmax.f32 %v591, %v592
          %s594 = vtos %v593
          %v595 = vstv %s594
          %vm596 = vcmp.eq.f32.partialorder %v584, %v595
          %v597 = vsel %vm596, %v427, 16
          %v598 = vsel %vm429, %v597, 2147483647
          %v599 = vand.u32 %v598, 65535
          %v600 = vshra.s32 %v598, 16
          %v601 = vcvt.s32.f32 %v599
          %v602 = vcvt.s32.f32 %v600
          %603 = vmin.xlane.f32.xlu0 %v602
          %v604 = vpop.xlane.xlu0 %603
          %vm605 = vcmp.eq.f32.partialorder %v602, %v604
          %v606 = vsel %vm605, %v601, inf
          %607 = vmin.xlane.f32.xlu0 %v606
          %v608 = vpop.xlane.xlu0 %607
          %v609 = vcvt.f32.s32 %v608
          %v610 = vcvt.f32.s32 %v604
          %v611 = vshll.u32 %v610, 16
          %v612 = vadd.s32 %v611, %v609
          %v613 = vrot.slane %v612, 4
          %vm614 = vcmp.lt.s32.totalorder %v612, %v613
          %v615 = vsel %vm614, %v612, %v613
          %v616 = vrot.slane %v615, 2
          %vm617 = vcmp.lt.s32.totalorder %v615, %v616
          %v618 = vsel %vm617, %v615, %v616
          %v619 = vrot.slane %v618, 1
          %vm620 = vcmp.lt.s32.totalorder %v618, %v619
          %v621 = vsel %vm620, %v618, %v619
          %s622 = vtos %v621
          %p623 = scmp.gt.f32.partialorder %s594, 0.2
          %vm624 = vcmp.eq.s32.totalorder %v427, 3
          %s625 = scalar_select %p623, 1, 0
          %v626 = vstv %s625
          %vm627 = vcmp.eq.s32.totalorder %v626, 1
          %vm628 = vmand %vm627, %vm624
          %v629 = vstv %s622
          %v630 = vsel %vm628, %v629, %v578
          %vm631 = vcmp.eq.s32.totalorder %v427, %v629
          %vm632 = vmand %vm627, %vm631
          %v633 = vsel %vm632, 0.0, 1.0
          %v634 = vmul.f32 %v582, %v633
          %v635 = vld [vmem:[#allocation2 + $0x4] sm:$0x1]
          %v636 = vmul.f32 %v635, %v634
          %v637 = vsel %vm429, %v636, -inf
          %638 = vmax.xlane.f32.xlu0 %v637
          %v639 = vpop.xlane.xlu0 %638
          %v640 = vrot.slane %v639, 4
          %v641 = vmax.f32 %v639, %v640
          %v642 = vrot.slane %v641, 2
          %v643 = vmax.f32 %v641, %v642
          %v644 = vrot.slane %v643, 1
          %v645 = vmax.f32 %v643, %v644
          %s646 = vtos %v645
          %v647 = vstv %s646
          %vm648 = vcmp.eq.f32.partialorder %v636, %v647
          %v649 = vsel %vm648, %v427, 16
          %v650 = vsel %vm429, %v649, 2147483647
          %v651 = vand.u32 %v650, 65535
          %v652 = vshra.s32 %v650, 16
          %v653 = vcvt.s32.f32 %v651
          %v654 = vcvt.s32.f32 %v652
          %655 = vmin.xlane.f32.xlu0 %v654
          %v656 = vpop.xlane.xlu0 %655
          %vm657 = vcmp.eq.f32.partialorder %v654, %v656
          %v658 = vsel %vm657, %v653, inf
          %659 = vmin.xlane.f32.xlu0 %v658
          %v660 = vpop.xlane.xlu0 %659
          %v661 = vcvt.f32.s32 %v660
          %v662 = vcvt.f32.s32 %v656
          %v663 = vshll.u32 %v662, 16
          %v664 = vadd.s32 %v663, %v661
          %v665 = vrot.slane %v664, 4
          %vm666 = vcmp.lt.s32.totalorder %v664, %v665
          %v667 = vsel %vm666, %v664, %v665
          %v668 = vrot.slane %v667, 2
          %vm669 = vcmp.lt.s32.totalorder %v667, %v668
          %v670 = vsel %vm669, %v667, %v668
          %v671 = vrot.slane %v670, 1
          %vm672 = vcmp.lt.s32.totalorder %v670, %v671
          %v673 = vsel %vm672, %v670, %v671
          %s674 = vtos %v673
          %p675 = scmp.gt.f32.partialorder %s646, 0.2
          %vm676 = vcmp.eq.s32.totalorder %v427, 4
          %s677 = scalar_select %p675, 1, 0
          %v678 = vstv %s677
          %vm679 = vcmp.eq.s32.totalorder %v678, 1
          %vm680 = vmand %vm679, %vm676
          %v681 = vstv %s674
          %v682 = vsel %vm680, %v681, %v630
          %vm683 = vcmp.eq.s32.totalorder %v427, %v681
          %vm684 = vmand %vm679, %vm683
          %v685 = vsel %vm684, 0.0, 1.0
          %v686 = vmul.f32 %v634, %v685
          %v687 = vld [vmem:[#allocation2 + $0x5] sm:$0x1]
          %v688 = vmul.f32 %v687, %v686
          %v689 = vsel %vm429, %v688, -inf
          %690 = vmax.xlane.f32.xlu0 %v689
          %v691 = vpop.xlane.xlu0 %690
          %v692 = vrot.slane %v691, 4
          %v693 = vmax.f32 %v691, %v692
          %v694 = vrot.slane %v693, 2
          %v695 = vmax.f32 %v693, %v694
          %v696 = vrot.slane %v695, 1
          %v697 = vmax.f32 %v695, %v696
          %s698 = vtos %v697
          %v699 = vstv %s698
          %vm700 = vcmp.eq.f32.partialorder %v688, %v699
          %v701 = vsel %vm700, %v427, 16
          %v702 = vsel %vm429, %v701, 2147483647
          %v703 = vand.u32 %v702, 65535
          %v704 = vshra.s32 %v702, 16
          %v705 = vcvt.s32.f32 %v703
          %v706 = vcvt.s32.f32 %v704
          %707 = vmin.xlane.f32.xlu0 %v706
          %v708 = vpop.xlane.xlu0 %707
          %vm709 = vcmp.eq.f32.partialorder %v706, %v708
          %v710 = vsel %vm709, %v705, inf
          %711 = vmin.xlane.f32.xlu0 %v710
          %v712 = vpop.xlane.xlu0 %711
          %v713 = vcvt.f32.s32 %v712
          %v714 = vcvt.f32.s32 %v708
          %v715 = vshll.u32 %v714, 16
          %v716 = vadd.s32 %v715, %v713
          %v717 = vrot.slane %v716, 4
          %vm718 = vcmp.lt.s32.totalorder %v716, %v717
          %v719 = vsel %vm718, %v716, %v717
          %v720 = vrot.slane %v719, 2
          %vm721 = vcmp.lt.s32.totalorder %v719, %v720
          %v722 = vsel %vm721, %v719, %v720
          %v723 = vrot.slane %v722, 1
          %vm724 = vcmp.lt.s32.totalorder %v722, %v723
          %v725 = vsel %vm724, %v722, %v723
          %s726 = vtos %v725
          %p727 = scmp.gt.f32.partialorder %s698, 0.2
          %vm728 = vcmp.eq.s32.totalorder %v427, 5
          %s729 = scalar_select %p727, 1, 0
          %v730 = vstv %s729
          %vm731 = vcmp.eq.s32.totalorder %v730, 1
          %vm732 = vmand %vm731, %vm728
          %v733 = vstv %s726
          %v734 = vsel %vm732, %v733, %v682
          %vm735 = vcmp.eq.s32.totalorder %v427, %v733
          %vm736 = vmand %vm731, %vm735
          %v737 = vsel %vm736, 0.0, 1.0
          %v738 = vmul.f32 %v686, %v737
          %v739 = vld [vmem:[#allocation2 + $0x6] sm:$0x1]
          %v740 = vmul.f32 %v739, %v738
          %v741 = vsel %vm429, %v740, -inf
          %742 = vmax.xlane.f32.xlu0 %v741
          %v743 = vpop.xlane.xlu0 %742
          %v744 = vrot.slane %v743, 4
          %v745 = vmax.f32 %v743, %v744
          %v746 = vrot.slane %v745, 2
          %v747 = vmax.f32 %v745, %v746
          %v748 = vrot.slane %v747, 1
          %v749 = vmax.f32 %v747, %v748
          %s750 = vtos %v749
          %v751 = vstv %s750
          %vm752 = vcmp.eq.f32.partialorder %v740, %v751
          %v753 = vsel %vm752, %v427, 16
          %v754 = vsel %vm429, %v753, 2147483647
          %v755 = vand.u32 %v754, 65535
          %v756 = vshra.s32 %v754, 16
          %v757 = vcvt.s32.f32 %v755
          %v758 = vcvt.s32.f32 %v756
          %759 = vmin.xlane.f32.xlu0 %v758
          %v760 = vpop.xlane.xlu0 %759
          %vm761 = vcmp.eq.f32.partialorder %v758, %v760
          %v762 = vsel %vm761, %v757, inf
          %763 = vmin.xlane.f32.xlu0 %v762
          %v764 = vpop.xlane.xlu0 %763
          %v765 = vcvt.f32.s32 %v764
          %v766 = vcvt.f32.s32 %v760
          %v767 = vshll.u32 %v766, 16
          %v768 = vadd.s32 %v767, %v765
          %v769 = vrot.slane %v768, 4
          %vm770 = vcmp.lt.s32.totalorder %v768, %v769
          %v771 = vsel %vm770, %v768, %v769
          %v772 = vrot.slane %v771, 2
          %vm773 = vcmp.lt.s32.totalorder %v771, %v772
          %v774 = vsel %vm773, %v771, %v772
          %v775 = vrot.slane %v774, 1
          %vm776 = vcmp.lt.s32.totalorder %v774, %v775
          %v777 = vsel %vm776, %v774, %v775
          %s778 = vtos %v777
          %p779 = scmp.gt.f32.partialorder %s750, 0.2
          %vm780 = vcmp.eq.s32.totalorder %v427, 6
          %s781 = scalar_select %p779, 1, 0
          %v782 = vstv %s781
          %vm783 = vcmp.eq.s32.totalorder %v782, 1
          %vm784 = vmand %vm783, %vm780
          %v785 = vstv %s778
          %v786 = vsel %vm784, %v785, %v734
          %vm787 = vcmp.eq.s32.totalorder %v427, %v785
          %vm788 = vmand %vm783, %vm787
          %v789 = vsel %vm788, 0.0, 1.0
          %v790 = vmul.f32 %v738, %v789
          %v791 = vld [vmem:[#allocation2 + $0x7] sm:$0x1]
          %v792 = vmul.f32 %v791, %v790
          %v793 = vsel %vm429, %v792, -inf
          %794 = vmax.xlane.f32.xlu0 %v793
          %v795 = vpop.xlane.xlu0 %794
          %v796 = vrot.slane %v795, 4
          %v797 = vmax.f32 %v795, %v796
          %v798 = vrot.slane %v797, 2
          %v799 = vmax.f32 %v797, %v798
          %v800 = vrot.slane %v799, 1
          %v801 = vmax.f32 %v799, %v800
          %s802 = vtos %v801
          %v803 = vstv %s802
          %vm804 = vcmp.eq.f32.partialorder %v792, %v803
          %v805 = vsel %vm804, %v427, 16
          %v806 = vsel %vm429, %v805, 2147483647
          %v807 = vand.u32 %v806, 65535
          %v808 = vshra.s32 %v806, 16
          %v809 = vcvt.s32.f32 %v807
          %v810 = vcvt.s32.f32 %v808
          %811 = vmin.xlane.f32.xlu0 %v810
          %v812 = vpop.xlane.xlu0 %811
          %vm813 = vcmp.eq.f32.partialorder %v810, %v812
          %v814 = vsel %vm813, %v809, inf
          %815 = vmin.xlane.f32.xlu0 %v814
          %v816 = vpop.xlane.xlu0 %815
          %v817 = vcvt.f32.s32 %v816
          %v818 = vcvt.f32.s32 %v812
          %v819 = vshll.u32 %v818, 16
          %v820 = vadd.s32 %v819, %v817
          %v821 = vrot.slane %v820, 4
          %vm822 = vcmp.lt.s32.totalorder %v820, %v821
          %v823 = vsel %vm822, %v820, %v821
          %v824 = vrot.slane %v823, 2
          %vm825 = vcmp.lt.s32.totalorder %v823, %v824
          %v826 = vsel %vm825, %v823, %v824
          %v827 = vrot.slane %v826, 1
          %vm828 = vcmp.lt.s32.totalorder %v826, %v827
          %v829 = vsel %vm828, %v826, %v827
          %s830 = vtos %v829
          %p831 = scmp.gt.f32.partialorder %s802, 0.2
          %vm832 = vcmp.eq.s32.totalorder %v427, 7
          %s833 = scalar_select %p831, 1, 0
          %v834 = vstv %s833
          %vm835 = vcmp.eq.s32.totalorder %v834, 1
          %vm836 = vmand %vm835, %vm832
          %v837 = vstv %s830
          %v838 = vsel %vm836, %v837, %v786
          %vm839 = vcmp.eq.s32.totalorder %v427, %v837
          %vm840 = vmand %vm835, %vm839
          %v841 = vsel %vm840, 0.0, 1.0
          %v842 = vmul.f32 %v790, %v841
          %v843 = vld [vmem:[#allocation2 + $0x8] sm:$0x1]
          %v844 = vmul.f32 %v843, %v842
          %v845 = vsel %vm429, %v844, -inf
          %846 = vmax.xlane.f32.xlu0 %v845
          %v847 = vpop.xlane.xlu0 %846
          %v848 = vrot.slane %v847, 4
          %v849 = vmax.f32 %v847, %v848
          %v850 = vrot.slane %v849, 2
          %v851 = vmax.f32 %v849, %v850
          %v852 = vrot.slane %v851, 1
          %v853 = vmax.f32 %v851, %v852
          %s854 = vtos %v853
          %v855 = vstv %s854
          %vm856 = vcmp.eq.f32.partialorder %v844, %v855
          %v857 = vsel %vm856, %v427, 16
          %v858 = vsel %vm429, %v857, 2147483647
          %v859 = vand.u32 %v858, 65535
          %v860 = vshra.s32 %v858, 16
          %v861 = vcvt.s32.f32 %v859
          %v862 = vcvt.s32.f32 %v860
          %863 = vmin.xlane.f32.xlu0 %v862
          %v864 = vpop.xlane.xlu0 %863
          %vm865 = vcmp.eq.f32.partialorder %v862, %v864
          %v866 = vsel %vm865, %v861, inf
          %867 = vmin.xlane.f32.xlu0 %v866
          %v868 = vpop.xlane.xlu0 %867
          %v869 = vcvt.f32.s32 %v868
          %v870 = vcvt.f32.s32 %v864
          %v871 = vshll.u32 %v870, 16
          %v872 = vadd.s32 %v871, %v869
          %v873 = vrot.slane %v872, 4
          %vm874 = vcmp.lt.s32.totalorder %v872, %v873
          %v875 = vsel %vm874, %v872, %v873
          %v876 = vrot.slane %v875, 2
          %vm877 = vcmp.lt.s32.totalorder %v875, %v876
          %v878 = vsel %vm877, %v875, %v876
          %v879 = vrot.slane %v878, 1
          %vm880 = vcmp.lt.s32.totalorder %v878, %v879
          %v881 = vsel %vm880, %v878, %v879
          %s882 = vtos %v881
          %p883 = scmp.gt.f32.partialorder %s854, 0.2
          %vm884 = vcmp.eq.s32.totalorder %v427, 8
          %s885 = scalar_select %p883, 1, 0
          %v886 = vstv %s885
          %vm887 = vcmp.eq.s32.totalorder %v886, 1
          %vm888 = vmand %vm887, %vm884
          %v889 = vstv %s882
          %v890 = vsel %vm888, %v889, %v838
          %vm891 = vcmp.eq.s32.totalorder %v427, %v889
          %vm892 = vmand %vm887, %vm891
          %v893 = vsel %vm892, 0.0, 1.0
          %v894 = vmul.f32 %v842, %v893
          %v895 = vld [vmem:[#allocation2 + $0x9] sm:$0x1]
          %v896 = vmul.f32 %v895, %v894
          %v897 = vsel %vm429, %v896, -inf
          %898 = vmax.xlane.f32.xlu0 %v897
          %v899 = vpop.xlane.xlu0 %898
          %v900 = vrot.slane %v899, 4
          %v901 = vmax.f32 %v899, %v900
          %v902 = vrot.slane %v901, 2
          %v903 = vmax.f32 %v901, %v902
          %v904 = vrot.slane %v903, 1
          %v905 = vmax.f32 %v903, %v904
          %s906 = vtos %v905
          %v907 = vstv %s906
          %vm908 = vcmp.eq.f32.partialorder %v896, %v907
          %v909 = vsel %vm908, %v427, 16
          %v910 = vsel %vm429, %v909, 2147483647
          %v911 = vand.u32 %v910, 65535
          %v912 = vshra.s32 %v910, 16
          %v913 = vcvt.s32.f32 %v911
          %v914 = vcvt.s32.f32 %v912
          %915 = vmin.xlane.f32.xlu0 %v914
          %v916 = vpop.xlane.xlu0 %915
          %vm917 = vcmp.eq.f32.partialorder %v914, %v916
          %v918 = vsel %vm917, %v913, inf
          %919 = vmin.xlane.f32.xlu0 %v918
          %v920 = vpop.xlane.xlu0 %919
          %v921 = vcvt.f32.s32 %v920
          %v922 = vcvt.f32.s32 %v916
          %v923 = vshll.u32 %v922, 16
          %v924 = vadd.s32 %v923, %v921
          %v925 = vrot.slane %v924, 4
          %vm926 = vcmp.lt.s32.totalorder %v924, %v925
          %v927 = vsel %vm926, %v924, %v925
          %v928 = vrot.slane %v927, 2
          %vm929 = vcmp.lt.s32.totalorder %v927, %v928
          %v930 = vsel %vm929, %v927, %v928
          %v931 = vrot.slane %v930, 1
          %vm932 = vcmp.lt.s32.totalorder %v930, %v931
          %v933 = vsel %vm932, %v930, %v931
          %s934 = vtos %v933
          %p935 = scmp.gt.f32.partialorder %s906, 0.2
          %vm936 = vcmp.eq.s32.totalorder %v427, 9
          %s937 = scalar_select %p935, 1, 0
          %v938 = vstv %s937
          %vm939 = vcmp.eq.s32.totalorder %v938, 1
          %vm940 = vmand %vm939, %vm936
          %v941 = vstv %s934
          %v942 = vsel %vm940, %v941, %v890
          %vm943 = vcmp.eq.s32.totalorder %v427, %v941
          %vm944 = vmand %vm939, %vm943
          %v945 = vsel %vm944, 0.0, 1.0
          %v946 = vmul.f32 %v894, %v945
          %v947 = vld [vmem:[#allocation2 + $0xa] sm:$0x1]
          %v948 = vmul.f32 %v947, %v946
          %v949 = vsel %vm429, %v948, -inf
          %950 = vmax.xlane.f32.xlu0 %v949
          %v951 = vpop.xlane.xlu0 %950
          %v952 = vrot.slane %v951, 4
          %v953 = vmax.f32 %v951, %v952
          %v954 = vrot.slane %v953, 2
          %v955 = vmax.f32 %v953, %v954
          %v956 = vrot.slane %v955, 1
          %v957 = vmax.f32 %v955, %v956
          %s958 = vtos %v957
          %v959 = vstv %s958
          %vm960 = vcmp.eq.f32.partialorder %v948, %v959
          %v961 = vsel %vm960, %v427, 16
          %v962 = vsel %vm429, %v961, 2147483647
          %v963 = vand.u32 %v962, 65535
          %v964 = vshra.s32 %v962, 16
          %v965 = vcvt.s32.f32 %v963
          %v966 = vcvt.s32.f32 %v964
          %967 = vmin.xlane.f32.xlu0 %v966
          %v968 = vpop.xlane.xlu0 %967
          %vm969 = vcmp.eq.f32.partialorder %v966, %v968
          %v970 = vsel %vm969, %v965, inf
          %971 = vmin.xlane.f32.xlu0 %v970
          %v972 = vpop.xlane.xlu0 %971
          %v973 = vcvt.f32.s32 %v972
          %v974 = vcvt.f32.s32 %v968
          %v975 = vshll.u32 %v974, 16
          %v976 = vadd.s32 %v975, %v973
          %v977 = vrot.slane %v976, 4
          %vm978 = vcmp.lt.s32.totalorder %v976, %v977
          %v979 = vsel %vm978, %v976, %v977
          %v980 = vrot.slane %v979, 2
          %vm981 = vcmp.lt.s32.totalorder %v979, %v980
          %v982 = vsel %vm981, %v979, %v980
          %v983 = vrot.slane %v982, 1
          %vm984 = vcmp.lt.s32.totalorder %v982, %v983
          %v985 = vsel %vm984, %v982, %v983
          %s986 = vtos %v985
          %p987 = scmp.gt.f32.partialorder %s958, 0.2
          %vm988 = vcmp.eq.s32.totalorder %v427, 10
          %s989 = scalar_select %p987, 1, 0
          %v990 = vstv %s989
          %vm991 = vcmp.eq.s32.totalorder %v990, 1
          %vm992 = vmand %vm991, %vm988
          %v993 = vstv %s986
          %v994 = vsel %vm992, %v993, %v942
          %vm995 = vcmp.eq.s32.totalorder %v427, %v993
          %vm996 = vmand %vm991, %vm995
          %v997 = vsel %vm996, 0.0, 1.0
          %v998 = vmul.f32 %v946, %v997
          %v999 = vld [vmem:[#allocation2 + $0xb] sm:$0x1]
          %v1000 = vmul.f32 %v999, %v998
          %v1001 = vsel %vm429, %v1000, -inf
          %1002 = vmax.xlane.f32.xlu0 %v1001
          %v1003 = vpop.xlane.xlu0 %1002
          %v1004 = vrot.slane %v1003, 4
          %v1005 = vmax.f32 %v1003, %v1004
          %v1006 = vrot.slane %v1005, 2
          %v1007 = vmax.f32 %v1005, %v1006
          %v1008 = vrot.slane %v1007, 1
          %v1009 = vmax.f32 %v1007, %v1008
          %s1010 = vtos %v1009
          %v1011 = vstv %s1010
          %vm1012 = vcmp.eq.f32.partialorder %v1000, %v1011
          %v1013 = vsel %vm1012, %v427, 16
          %v1014 = vsel %vm429, %v1013, 2147483647
          %v1015 = vand.u32 %v1014, 65535
          %v1016 = vshra.s32 %v1014, 16
          %v1017 = vcvt.s32.f32 %v1015
          %v1018 = vcvt.s32.f32 %v1016
          %1019 = vmin.xlane.f32.xlu0 %v1018
          %v1020 = vpop.xlane.xlu0 %1019
          %vm1021 = vcmp.eq.f32.partialorder %v1018, %v1020
          %v1022 = vsel %vm1021, %v1017, inf
          %1023 = vmin.xlane.f32.xlu0 %v1022
          %v1024 = vpop.xlane.xlu0 %1023
          %v1025 = vcvt.f32.s32 %v1024
          %v1026 = vcvt.f32.s32 %v1020
          %v1027 = vshll.u32 %v1026, 16
          %v1028 = vadd.s32 %v1027, %v1025
          %v1029 = vrot.slane %v1028, 4
          %vm1030 = vcmp.lt.s32.totalorder %v1028, %v1029
          %v1031 = vsel %vm1030, %v1028, %v1029
          %v1032 = vrot.slane %v1031, 2
          %vm1033 = vcmp.lt.s32.totalorder %v1031, %v1032
          %v1034 = vsel %vm1033, %v1031, %v1032
          %v1035 = vrot.slane %v1034, 1
          %vm1036 = vcmp.lt.s32.totalorder %v1034, %v1035
          %v1037 = vsel %vm1036, %v1034, %v1035
          %s1038 = vtos %v1037
          %p1039 = scmp.gt.f32.partialorder %s1010, 0.2
          %vm1040 = vcmp.eq.s32.totalorder %v427, 11
          %s1041 = scalar_select %p1039, 1, 0
          %v1042 = vstv %s1041
          %vm1043 = vcmp.eq.s32.totalorder %v1042, 1
          %vm1044 = vmand %vm1043, %vm1040
          %v1045 = vstv %s1038
          %v1046 = vsel %vm1044, %v1045, %v994
          %vm1047 = vcmp.eq.s32.totalorder %v427, %v1045
          %vm1048 = vmand %vm1043, %vm1047
          %v1049 = vsel %vm1048, 0.0, 1.0
          %v1050 = vmul.f32 %v998, %v1049
          %v1051 = vld [vmem:[#allocation2 + $0xc] sm:$0x1]
          %v1052 = vmul.f32 %v1051, %v1050
          %v1053 = vsel %vm429, %v1052, -inf
          %1054 = vmax.xlane.f32.xlu0 %v1053
          %v1055 = vpop.xlane.xlu0 %1054
          %v1056 = vrot.slane %v1055, 4
          %v1057 = vmax.f32 %v1055, %v1056
          %v1058 = vrot.slane %v1057, 2
          %v1059 = vmax.f32 %v1057, %v1058
          %v1060 = vrot.slane %v1059, 1
          %v1061 = vmax.f32 %v1059, %v1060
          %s1062 = vtos %v1061
          %v1063 = vstv %s1062
          %vm1064 = vcmp.eq.f32.partialorder %v1052, %v1063
          %v1065 = vsel %vm1064, %v427, 16
          %v1066 = vsel %vm429, %v1065, 2147483647
          %v1067 = vand.u32 %v1066, 65535
          %v1068 = vshra.s32 %v1066, 16
          %v1069 = vcvt.s32.f32 %v1067
          %v1070 = vcvt.s32.f32 %v1068
          %1071 = vmin.xlane.f32.xlu0 %v1070
          %v1072 = vpop.xlane.xlu0 %1071
          %vm1073 = vcmp.eq.f32.partialorder %v1070, %v1072
          %v1074 = vsel %vm1073, %v1069, inf
          %1075 = vmin.xlane.f32.xlu0 %v1074
          %v1076 = vpop.xlane.xlu0 %1075
          %v1077 = vcvt.f32.s32 %v1076
          %v1078 = vcvt.f32.s32 %v1072
          %v1079 = vshll.u32 %v1078, 16
          %v1080 = vadd.s32 %v1079, %v1077
          %v1081 = vrot.slane %v1080, 4
          %vm1082 = vcmp.lt.s32.totalorder %v1080, %v1081
          %v1083 = vsel %vm1082, %v1080, %v1081
          %v1084 = vrot.slane %v1083, 2
          %vm1085 = vcmp.lt.s32.totalorder %v1083, %v1084
          %v1086 = vsel %vm1085, %v1083, %v1084
          %v1087 = vrot.slane %v1086, 1
          %vm1088 = vcmp.lt.s32.totalorder %v1086, %v1087
          %v1089 = vsel %vm1088, %v1086, %v1087
          %s1090 = vtos %v1089
          %p1091 = scmp.gt.f32.partialorder %s1062, 0.2
          %vm1092 = vcmp.eq.s32.totalorder %v427, 12
          %s1093 = scalar_select %p1091, 1, 0
          %v1094 = vstv %s1093
          %vm1095 = vcmp.eq.s32.totalorder %v1094, 1
          %vm1096 = vmand %vm1095, %vm1092
          %v1097 = vstv %s1090
          %v1098 = vsel %vm1096, %v1097, %v1046
          %vm1099 = vcmp.eq.s32.totalorder %v427, %v1097
          %vm1100 = vmand %vm1095, %vm1099
          %v1101 = vsel %vm1100, 0.0, 1.0
          %v1102 = vmul.f32 %v1050, %v1101
          %v1103 = vld [vmem:[#allocation2 + $0xd] sm:$0x1]
          %v1104 = vmul.f32 %v1103, %v1102
          %v1105 = vsel %vm429, %v1104, -inf
          %1106 = vmax.xlane.f32.xlu0 %v1105
          %v1107 = vpop.xlane.xlu0 %1106
          %v1108 = vrot.slane %v1107, 4
          %v1109 = vmax.f32 %v1107, %v1108
          %v1110 = vrot.slane %v1109, 2
          %v1111 = vmax.f32 %v1109, %v1110
          %v1112 = vrot.slane %v1111, 1
          %v1113 = vmax.f32 %v1111, %v1112
          %s1114 = vtos %v1113
          %v1115 = vstv %s1114
          %vm1116 = vcmp.eq.f32.partialorder %v1104, %v1115
          %v1117 = vsel %vm1116, %v427, 16
          %v1118 = vsel %vm429, %v1117, 2147483647
          %v1119 = vand.u32 %v1118, 65535
          %v1120 = vshra.s32 %v1118, 16
          %v1121 = vcvt.s32.f32 %v1119
          %v1122 = vcvt.s32.f32 %v1120
          %1123 = vmin.xlane.f32.xlu0 %v1122
          %v1124 = vpop.xlane.xlu0 %1123
          %vm1125 = vcmp.eq.f32.partialorder %v1122, %v1124
          %v1126 = vsel %vm1125, %v1121, inf
          %1127 = vmin.xlane.f32.xlu0 %v1126
          %v1128 = vpop.xlane.xlu0 %1127
          %v1129 = vcvt.f32.s32 %v1128
          %v1130 = vcvt.f32.s32 %v1124
          %v1131 = vshll.u32 %v1130, 16
          %v1132 = vadd.s32 %v1131, %v1129
          %v1133 = vrot.slane %v1132, 4
          %vm1134 = vcmp.lt.s32.totalorder %v1132, %v1133
          %v1135 = vsel %vm1134, %v1132, %v1133
          %v1136 = vrot.slane %v1135, 2
          %vm1137 = vcmp.lt.s32.totalorder %v1135, %v1136
          %v1138 = vsel %vm1137, %v1135, %v1136
          %v1139 = vrot.slane %v1138, 1
          %vm1140 = vcmp.lt.s32.totalorder %v1138, %v1139
          %v1141 = vsel %vm1140, %v1138, %v1139
          %s1142 = vtos %v1141
          %p1143 = scmp.gt.f32.partialorder %s1114, 0.2
          %vm1144 = vcmp.eq.s32.totalorder %v427, 13
          %s1145 = scalar_select %p1143, 1, 0
          %v1146 = vstv %s1145
          %vm1147 = vcmp.eq.s32.totalorder %v1146, 1
          %vm1148 = vmand %vm1147, %vm1144
          %v1149 = vstv %s1142
          %v1150 = vsel %vm1148, %v1149, %v1098
          %vm1151 = vcmp.eq.s32.totalorder %v427, %v1149
          %vm1152 = vmand %vm1147, %vm1151
          %v1153 = vsel %vm1152, 0.0, 1.0
          %v1154 = vmul.f32 %v1102, %v1153
          %v1155 = vld [vmem:[#allocation2 + $0xe] sm:$0x1]
          %v1156 = vmul.f32 %v1155, %v1154
          %v1157 = vsel %vm429, %v1156, -inf
          %1158 = vmax.xlane.f32.xlu0 %v1157
          %v1159 = vpop.xlane.xlu0 %1158
          %v1160 = vrot.slane %v1159, 4
          %v1161 = vmax.f32 %v1159, %v1160
          %v1162 = vrot.slane %v1161, 2
          %v1163 = vmax.f32 %v1161, %v1162
          %v1164 = vrot.slane %v1163, 1
          %v1165 = vmax.f32 %v1163, %v1164
          %s1166 = vtos %v1165
          %v1167 = vstv %s1166
          %vm1168 = vcmp.eq.f32.partialorder %v1156, %v1167
          %v1169 = vsel %vm1168, %v427, 16
          %v1170 = vsel %vm429, %v1169, 2147483647
          %v1171 = vand.u32 %v1170, 65535
          %v1172 = vshra.s32 %v1170, 16
          %v1173 = vcvt.s32.f32 %v1171
          %v1174 = vcvt.s32.f32 %v1172
          %1175 = vmin.xlane.f32.xlu0 %v1174
          %v1176 = vpop.xlane.xlu0 %1175
          %vm1177 = vcmp.eq.f32.partialorder %v1174, %v1176
          %v1178 = vsel %vm1177, %v1173, inf
          %1179 = vmin.xlane.f32.xlu0 %v1178
          %v1180 = vpop.xlane.xlu0 %1179
          %v1181 = vcvt.f32.s32 %v1180
          %v1182 = vcvt.f32.s32 %v1176
          %v1183 = vshll.u32 %v1182, 16
          %v1184 = vadd.s32 %v1183, %v1181
          %v1185 = vrot.slane %v1184, 4
          %vm1186 = vcmp.lt.s32.totalorder %v1184, %v1185
          %v1187 = vsel %vm1186, %v1184, %v1185
          %v1188 = vrot.slane %v1187, 2
          %vm1189 = vcmp.lt.s32.totalorder %v1187, %v1188
          %v1190 = vsel %vm1189, %v1187, %v1188
          %v1191 = vrot.slane %v1190, 1
          %vm1192 = vcmp.lt.s32.totalorder %v1190, %v1191
          %v1193 = vsel %vm1192, %v1190, %v1191
          %s1194 = vtos %v1193
          %p1195 = scmp.gt.f32.partialorder %s1166, 0.2
          %vm1196 = vcmp.eq.s32.totalorder %v427, 14
          %s1197 = scalar_select %p1195, 1, 0
          %v1198 = vstv %s1197
          %vm1199 = vcmp.eq.s32.totalorder %v1198, 1
          %vm1200 = vmand %vm1199, %vm1196
          %v1201 = vstv %s1194
          %v1202 = vsel %vm1200, %v1201, %v1150
          %vm1203 = vcmp.eq.s32.totalorder %v427, %v1201
          %vm1204 = vmand %vm1199, %vm1203
          %v1205 = vsel %vm1204, 0.0, 1.0
          %v1206 = vmul.f32 %v1154, %v1205
          %v1207 = vld [vmem:[#allocation2 + $0xf] sm:$0x1]
          %v1208 = vmul.f32 %v1207, %v1206
          %v1209 = vsel %vm429, %v1208, -inf
          %1210 = vmax.xlane.f32.xlu0 %v1209
          %v1211 = vpop.xlane.xlu0 %1210
          %v1212 = vrot.slane %v1211, 4
          %v1213 = vmax.f32 %v1211, %v1212
          %v1214 = vrot.slane %v1213, 2
          %v1215 = vmax.f32 %v1213, %v1214
          %v1216 = vrot.slane %v1215, 1
          %v1217 = vmax.f32 %v1215, %v1216
          %s1218 = vtos %v1217
          %v1219 = vstv %s1218
          %vm1220 = vcmp.eq.f32.partialorder %v1208, %v1219
          %v1221 = vsel %vm1220, %v427, 16
          %v1222 = vsel %vm429, %v1221, 2147483647
          %v1223 = vand.u32 %v1222, 65535
          %v1224 = vshra.s32 %v1222, 16
          %v1225 = vcvt.s32.f32 %v1223
          %v1226 = vcvt.s32.f32 %v1224
          %1227 = vmin.xlane.f32.xlu0 %v1226
          %v1228 = vpop.xlane.xlu0 %1227
          %vm1229 = vcmp.eq.f32.partialorder %v1226, %v1228
          %v1230 = vsel %vm1229, %v1225, inf
          %1231 = vmin.xlane.f32.xlu0 %v1230
          %v1232 = vpop.xlane.xlu0 %1231
          %v1233 = vcvt.f32.s32 %v1232
          %v1234 = vcvt.f32.s32 %v1228
          %v1235 = vshll.u32 %v1234, 16
          %v1236 = vadd.s32 %v1235, %v1233
          %v1237 = vrot.slane %v1236, 4
          %vm1238 = vcmp.lt.s32.totalorder %v1236, %v1237
          %v1239 = vsel %vm1238, %v1236, %v1237
          %v1240 = vrot.slane %v1239, 2
          %vm1241 = vcmp.lt.s32.totalorder %v1239, %v1240
          %v1242 = vsel %vm1241, %v1239, %v1240
          %v1243 = vrot.slane %v1242, 1
          %vm1244 = vcmp.lt.s32.totalorder %v1242, %v1243
          %v1245 = vsel %vm1244, %v1242, %v1243
          %s1246 = vtos %v1245
          %p1247 = scmp.gt.f32.partialorder %s1218, 0.2
          %vm1248 = vcmp.eq.s32.totalorder %v427, 15
          %s1249 = scalar_select %p1247, 1, 0
          %v1250 = vstv %s1249
          %vm1251 = vcmp.eq.s32.totalorder %v1250, 1
          %vm1252 = vmand %vm1251, %vm1248
          %v1253 = vstv %s1246
          %v1254 = vsel %vm1252, %v1253, %v1202
          %vm1255 = vcmp.eq.s32.totalorder %v427, %v1253
          %vm1256 = vmand %vm1251, %vm1255
          %v1257 = vsel %vm1256, 0.0, 1.0
          %v1258 = vmul.f32 %v1206, %v1257
          %v1259 = vld [vmem:[#allocation2 + $0x10] sm:$0x1]
          %v1260 = vmul.f32 %v1259, %v1258
          %v1261 = vsel %vm429, %v1260, -inf
          %1262 = vmax.xlane.f32.xlu0 %v1261
          %v1263 = vpop.xlane.xlu0 %1262
          %v1264 = vrot.slane %v1263, 4
          %v1265 = vmax.f32 %v1263, %v1264
          %v1266 = vrot.slane %v1265, 2
          %v1267 = vmax.f32 %v1265, %v1266
          %v1268 = vrot.slane %v1267, 1
          %v1269 = vmax.f32 %v1267, %v1268
          %s1270 = vtos %v1269
          %v1271 = vstv %s1270
          %vm1272 = vcmp.eq.f32.partialorder %v1260, %v1271
          %v1273 = vsel %vm1272, %v427, 16
          %v1274 = vsel %vm429, %v1273, 2147483647
          %v1275 = vand.u32 %v1274, 65535
          %v1276 = vshra.s32 %v1274, 16
          %v1277 = vcvt.s32.f32 %v1275
          %v1278 = vcvt.s32.f32 %v1276
          %1279 = vmin.xlane.f32.xlu0 %v1278
          %v1280 = vpop.xlane.xlu0 %1279
          %vm1281 = vcmp.eq.f32.partialorder %v1278, %v1280
          %v1282 = vsel %vm1281, %v1277, inf
          %1283 = vmin.xlane.f32.xlu0 %v1282
          %v1284 = vpop.xlane.xlu0 %1283
          %v1285 = vcvt.f32.s32 %v1284
          %v1286 = vcvt.f32.s32 %v1280
          %v1287 = vshll.u32 %v1286, 16
          %v1288 = vadd.s32 %v1287, %v1285
          %v1289 = vrot.slane %v1288, 4
          %vm1290 = vcmp.lt.s32.totalorder %v1288, %v1289
          %v1291 = vsel %vm1290, %v1288, %v1289
          %v1292 = vrot.slane %v1291, 2
          %vm1293 = vcmp.lt.s32.totalorder %v1291, %v1292
          %v1294 = vsel %vm1293, %v1291, %v1292
          %v1295 = vrot.slane %v1294, 1
          %vm1296 = vcmp.lt.s32.totalorder %v1294, %v1295
          %v1297 = vsel %vm1296, %v1294, %v1295
          %s1298 = vtos %v1297
          %p1299 = scmp.gt.f32.partialorder %s1270, 0.2
          %vm1300 = vcmp.eq.s32.totalorder %v427, 16
          %s1301 = scalar_select %p1299, 1, 0
          %v1302 = vstv %s1301
          %vm1303 = vcmp.eq.s32.totalorder %v1302, 1
          %vm1304 = vmand %vm1303, %vm1300
          %v1305 = vstv %s1298
          %v1306 = vsel %vm1304, %v1305, %v1254
          %vm1307 = vcmp.eq.s32.totalorder %v427, %v1305
          %vm1308 = vmand %vm1303, %vm1307
          %v1309 = vsel %vm1308, 0.0, 1.0
          %v1310 = vmul.f32 %v1258, %v1309
          %v1311 = vld [vmem:[#allocation2 + $0x11] sm:$0x1]
          %v1312 = vmul.f32 %v1311, %v1310
          %v1313 = vsel %vm429, %v1312, -inf
          %1314 = vmax.xlane.f32.xlu0 %v1313
          %v1315 = vpop.xlane.xlu0 %1314
          %v1316 = vrot.slane %v1315, 4
          %v1317 = vmax.f32 %v1315, %v1316
          %v1318 = vrot.slane %v1317, 2
          %v1319 = vmax.f32 %v1317, %v1318
          %v1320 = vrot.slane %v1319, 1
          %v1321 = vmax.f32 %v1319, %v1320
          %s1322 = vtos %v1321
          %v1323 = vstv %s1322
          %vm1324 = vcmp.eq.f32.partialorder %v1312, %v1323
          %v1325 = vsel %vm1324, %v427, 16
          %v1326 = vsel %vm429, %v1325, 2147483647
          %v1327 = vand.u32 %v1326, 65535
          %v1328 = vshra.s32 %v1326, 16
          %v1329 = vcvt.s32.f32 %v1327
          %v1330 = vcvt.s32.f32 %v1328
          %1331 = vmin.xlane.f32.xlu0 %v1330
          %v1332 = vpop.xlane.xlu0 %1331
          %vm1333 = vcmp.eq.f32.partialorder %v1330, %v1332
          %v1334 = vsel %vm1333, %v1329, inf
          %1335 = vmin.xlane.f32.xlu0 %v1334
          %v1336 = vpop.xlane.xlu0 %1335
          %v1337 = vcvt.f32.s32 %v1336
          %v1338 = vcvt.f32.s32 %v1332
          %v1339 = vshll.u32 %v1338, 16
          %v1340 = vadd.s32 %v1339, %v1337
          %v1341 = vrot.slane %v1340, 4
          %vm1342 = vcmp.lt.s32.totalorder %v1340, %v1341
          %v1343 = vsel %vm1342, %v1340, %v1341
          %v1344 = vrot.slane %v1343, 2
          %vm1345 = vcmp.lt.s32.totalorder %v1343, %v1344
          %v1346 = vsel %vm1345, %v1343, %v1344
          %v1347 = vrot.slane %v1346, 1
          %vm1348 = vcmp.lt.s32.totalorder %v1346, %v1347
          %v1349 = vsel %vm1348, %v1346, %v1347
          %s1350 = vtos %v1349
          %p1351 = scmp.gt.f32.partialorder %s1322, 0.2
          %vm1352 = vcmp.eq.s32.totalorder %v427, 17
          %s1353 = scalar_select %p1351, 1, 0
          %v1354 = vstv %s1353
          %vm1355 = vcmp.eq.s32.totalorder %v1354, 1
          %vm1356 = vmand %vm1355, %vm1352
          %v1357 = vstv %s1350
          %v1358 = vsel %vm1356, %v1357, %v1306
          %vm1359 = vcmp.eq.s32.totalorder %v427, %v1357
          %vm1360 = vmand %vm1355, %vm1359
          %v1361 = vsel %vm1360, 0.0, 1.0
          %v1362 = vmul.f32 %v1310, %v1361
          %v1363 = vld [vmem:[#allocation2 + $0x12] sm:$0x1]
          %v1364 = vmul.f32 %v1363, %v1362
          %v1365 = vsel %vm429, %v1364, -inf
          %1366 = vmax.xlane.f32.xlu0 %v1365
          %v1367 = vpop.xlane.xlu0 %1366
          %v1368 = vrot.slane %v1367, 4
          %v1369 = vmax.f32 %v1367, %v1368
          %v1370 = vrot.slane %v1369, 2
          %v1371 = vmax.f32 %v1369, %v1370
          %v1372 = vrot.slane %v1371, 1
          %v1373 = vmax.f32 %v1371, %v1372
          %s1374 = vtos %v1373
          %v1375 = vstv %s1374
          %vm1376 = vcmp.eq.f32.partialorder %v1364, %v1375
          %v1377 = vsel %vm1376, %v427, 16
          %v1378 = vsel %vm429, %v1377, 2147483647
          %v1379 = vand.u32 %v1378, 65535
          %v1380 = vshra.s32 %v1378, 16
          %v1381 = vcvt.s32.f32 %v1379
          %v1382 = vcvt.s32.f32 %v1380
          %1383 = vmin.xlane.f32.xlu0 %v1382
          %v1384 = vpop.xlane.xlu0 %1383
          %vm1385 = vcmp.eq.f32.partialorder %v1382, %v1384
          %v1386 = vsel %vm1385, %v1381, inf
          %1387 = vmin.xlane.f32.xlu0 %v1386
          %v1388 = vpop.xlane.xlu0 %1387
          %v1389 = vcvt.f32.s32 %v1388
          %v1390 = vcvt.f32.s32 %v1384
          %v1391 = vshll.u32 %v1390, 16
          %v1392 = vadd.s32 %v1391, %v1389
          %v1393 = vrot.slane %v1392, 4
          %vm1394 = vcmp.lt.s32.totalorder %v1392, %v1393
          %v1395 = vsel %vm1394, %v1392, %v1393
          %v1396 = vrot.slane %v1395, 2
          %vm1397 = vcmp.lt.s32.totalorder %v1395, %v1396
          %v1398 = vsel %vm1397, %v1395, %v1396
          %v1399 = vrot.slane %v1398, 1
          %vm1400 = vcmp.lt.s32.totalorder %v1398, %v1399
          %v1401 = vsel %vm1400, %v1398, %v1399
          %s1402 = vtos %v1401
          %p1403 = scmp.gt.f32.partialorder %s1374, 0.2
          %vm1404 = vcmp.eq.s32.totalorder %v427, 18
          %s1405 = scalar_select %p1403, 1, 0
          %v1406 = vstv %s1405
          %vm1407 = vcmp.eq.s32.totalorder %v1406, 1
          %vm1408 = vmand %vm1407, %vm1404
          %v1409 = vstv %s1402
          %v1410 = vsel %vm1408, %v1409, %v1358
          %vm1411 = vcmp.eq.s32.totalorder %v427, %v1409
          %vm1412 = vmand %vm1407, %vm1411
          %v1413 = vsel %vm1412, 0.0, 1.0
          %v1414 = vmul.f32 %v1362, %v1413
          %v1415 = vld [vmem:[#allocation2 + $0x13] sm:$0x1]
          %v1416 = vmul.f32 %v1415, %v1414
          %v1417 = vsel %vm429, %v1416, -inf
          %1418 = vmax.xlane.f32.xlu0 %v1417
          %v1419 = vpop.xlane.xlu0 %1418
          %v1420 = vrot.slane %v1419, 4
          %v1421 = vmax.f32 %v1419, %v1420
          %v1422 = vrot.slane %v1421, 2
          %v1423 = vmax.f32 %v1421, %v1422
          %v1424 = vrot.slane %v1423, 1
          %v1425 = vmax.f32 %v1423, %v1424
          %s1426 = vtos %v1425
          %v1427 = vstv %s1426
          %vm1428 = vcmp.eq.f32.partialorder %v1416, %v1427
          %v1429 = vsel %vm1428, %v427, 16
          %v1430 = vsel %vm429, %v1429, 2147483647
          %v1431 = vand.u32 %v1430, 65535
          %v1432 = vshra.s32 %v1430, 16
          %v1433 = vcvt.s32.f32 %v1431
          %v1434 = vcvt.s32.f32 %v1432
          %1435 = vmin.xlane.f32.xlu0 %v1434
          %v1436 = vpop.xlane.xlu0 %1435
          %vm1437 = vcmp.eq.f32.partialorder %v1434, %v1436
          %v1438 = vsel %vm1437, %v1433, inf
          %1439 = vmin.xlane.f32.xlu0 %v1438
          %v1440 = vpop.xlane.xlu0 %1439
          %v1441 = vcvt.f32.s32 %v1440
          %v1442 = vcvt.f32.s32 %v1436
          %v1443 = vshll.u32 %v1442, 16
          %v1444 = vadd.s32 %v1443, %v1441
          %v1445 = vrot.slane %v1444, 4
          %vm1446 = vcmp.lt.s32.totalorder %v1444, %v1445
          %v1447 = vsel %vm1446, %v1444, %v1445
          %v1448 = vrot.slane %v1447, 2
          %vm1449 = vcmp.lt.s32.totalorder %v1447, %v1448
          %v1450 = vsel %vm1449, %v1447, %v1448
          %v1451 = vrot.slane %v1450, 1
          %vm1452 = vcmp.lt.s32.totalorder %v1450, %v1451
          %v1453 = vsel %vm1452, %v1450, %v1451
          %s1454 = vtos %v1453
          %p1455 = scmp.gt.f32.partialorder %s1426, 0.2
          %vm1456 = vcmp.eq.s32.totalorder %v427, 19
          %s1457 = scalar_select %p1455, 1, 0
          %v1458 = vstv %s1457
          %vm1459 = vcmp.eq.s32.totalorder %v1458, 1
          %vm1460 = vmand %vm1459, %vm1456
          %v1461 = vstv %s1454
          %v1462 = vsel %vm1460, %v1461, %v1410
          %vm1463 = vcmp.eq.s32.totalorder %v427, %v1461
          %vm1464 = vmand %vm1459, %vm1463
          %v1465 = vsel %vm1464, 0.0, 1.0
          %v1466 = vmul.f32 %v1414, %v1465
          %v1467 = vld [vmem:[#allocation2 + $0x14] sm:$0x1]
          %v1468 = vmul.f32 %v1467, %v1466
          %v1469 = vsel %vm429, %v1468, -inf
          %1470 = vmax.xlane.f32.xlu0 %v1469
          %v1471 = vpop.xlane.xlu0 %1470
          %v1472 = vrot.slane %v1471, 4
          %v1473 = vmax.f32 %v1471, %v1472
          %v1474 = vrot.slane %v1473, 2
          %v1475 = vmax.f32 %v1473, %v1474
          %v1476 = vrot.slane %v1475, 1
          %v1477 = vmax.f32 %v1475, %v1476
          %s1478 = vtos %v1477
          %v1479 = vstv %s1478
          %vm1480 = vcmp.eq.f32.partialorder %v1468, %v1479
          %v1481 = vsel %vm1480, %v427, 16
          %v1482 = vsel %vm429, %v1481, 2147483647
          %v1483 = vand.u32 %v1482, 65535
          %v1484 = vshra.s32 %v1482, 16
          %v1485 = vcvt.s32.f32 %v1483
          %v1486 = vcvt.s32.f32 %v1484
          %1487 = vmin.xlane.f32.xlu0 %v1486
          %v1488 = vpop.xlane.xlu0 %1487
          %vm1489 = vcmp.eq.f32.partialorder %v1486, %v1488
          %v1490 = vsel %vm1489, %v1485, inf
          %1491 = vmin.xlane.f32.xlu0 %v1490
          %v1492 = vpop.xlane.xlu0 %1491
          %v1493 = vcvt.f32.s32 %v1492
          %v1494 = vcvt.f32.s32 %v1488
          %v1495 = vshll.u32 %v1494, 16
          %v1496 = vadd.s32 %v1495, %v1493
          %v1497 = vrot.slane %v1496, 4
          %vm1498 = vcmp.lt.s32.totalorder %v1496, %v1497
          %v1499 = vsel %vm1498, %v1496, %v1497
          %v1500 = vrot.slane %v1499, 2
          %vm1501 = vcmp.lt.s32.totalorder %v1499, %v1500
          %v1502 = vsel %vm1501, %v1499, %v1500
          %v1503 = vrot.slane %v1502, 1
          %vm1504 = vcmp.lt.s32.totalorder %v1502, %v1503
          %v1505 = vsel %vm1504, %v1502, %v1503
          %s1506 = vtos %v1505
          %p1507 = scmp.gt.f32.partialorder %s1478, 0.2
          %vm1508 = vcmp.eq.s32.totalorder %v427, 20
          %s1509 = scalar_select %p1507, 1, 0
          %v1510 = vstv %s1509
          %vm1511 = vcmp.eq.s32.totalorder %v1510, 1
          %vm1512 = vmand %vm1511, %vm1508
          %v1513 = vstv %s1506
          %v1514 = vsel %vm1512, %v1513, %v1462
          %vm1515 = vcmp.eq.s32.totalorder %v427, %v1513
          %vm1516 = vmand %vm1511, %vm1515
          %v1517 = vsel %vm1516, 0.0, 1.0
          %v1518 = vmul.f32 %v1466, %v1517
          %v1519 = vld [vmem:[#allocation2 + $0x15] sm:$0x1]
          %v1520 = vmul.f32 %v1519, %v1518
          %v1521 = vsel %vm429, %v1520, -inf
          %1522 = vmax.xlane.f32.xlu0 %v1521
          %v1523 = vpop.xlane.xlu0 %1522
          %v1524 = vrot.slane %v1523, 4
          %v1525 = vmax.f32 %v1523, %v1524
          %v1526 = vrot.slane %v1525, 2
          %v1527 = vmax.f32 %v1525, %v1526
          %v1528 = vrot.slane %v1527, 1
          %v1529 = vmax.f32 %v1527, %v1528
          %s1530 = vtos %v1529
          %v1531 = vstv %s1530
          %vm1532 = vcmp.eq.f32.partialorder %v1520, %v1531
          %v1533 = vsel %vm1532, %v427, 16
          %v1534 = vsel %vm429, %v1533, 2147483647
          %v1535 = vand.u32 %v1534, 65535
          %v1536 = vshra.s32 %v1534, 16
          %v1537 = vcvt.s32.f32 %v1535
          %v1538 = vcvt.s32.f32 %v1536
          %1539 = vmin.xlane.f32.xlu0 %v1538
          %v1540 = vpop.xlane.xlu0 %1539
          %vm1541 = vcmp.eq.f32.partialorder %v1538, %v1540
          %v1542 = vsel %vm1541, %v1537, inf
          %1543 = vmin.xlane.f32.xlu0 %v1542
          %v1544 = vpop.xlane.xlu0 %1543
          %v1545 = vcvt.f32.s32 %v1544
          %v1546 = vcvt.f32.s32 %v1540
          %v1547 = vshll.u32 %v1546, 16
          %v1548 = vadd.s32 %v1547, %v1545
          %v1549 = vrot.slane %v1548, 4
          %vm1550 = vcmp.lt.s32.totalorder %v1548, %v1549
          %v1551 = vsel %vm1550, %v1548, %v1549
          %v1552 = vrot.slane %v1551, 2
          %vm1553 = vcmp.lt.s32.totalorder %v1551, %v1552
          %v1554 = vsel %vm1553, %v1551, %v1552
          %v1555 = vrot.slane %v1554, 1
          %vm1556 = vcmp.lt.s32.totalorder %v1554, %v1555
          %v1557 = vsel %vm1556, %v1554, %v1555
          %s1558 = vtos %v1557
          %p1559 = scmp.gt.f32.partialorder %s1530, 0.2
          %vm1560 = vcmp.eq.s32.totalorder %v427, 21
          %s1561 = scalar_select %p1559, 1, 0
          %v1562 = vstv %s1561
          %vm1563 = vcmp.eq.s32.totalorder %v1562, 1
          %vm1564 = vmand %vm1563, %vm1560
          %v1565 = vstv %s1558
          %v1566 = vsel %vm1564, %v1565, %v1514
          %vm1567 = vcmp.eq.s32.totalorder %v427, %v1565
          %vm1568 = vmand %vm1563, %vm1567
          %v1569 = vsel %vm1568, 0.0, 1.0
          %v1570 = vmul.f32 %v1518, %v1569
          %v1571 = vld [vmem:[#allocation2 + $0x16] sm:$0x1]
          %v1572 = vmul.f32 %v1571, %v1570
          %v1573 = vsel %vm429, %v1572, -inf
          %1574 = vmax.xlane.f32.xlu0 %v1573
          %v1575 = vpop.xlane.xlu0 %1574
          %v1576 = vrot.slane %v1575, 4
          %v1577 = vmax.f32 %v1575, %v1576
          %v1578 = vrot.slane %v1577, 2
          %v1579 = vmax.f32 %v1577, %v1578
          %v1580 = vrot.slane %v1579, 1
          %v1581 = vmax.f32 %v1579, %v1580
          %s1582 = vtos %v1581
          %v1583 = vstv %s1582
          %vm1584 = vcmp.eq.f32.partialorder %v1572, %v1583
          %v1585 = vsel %vm1584, %v427, 16
          %v1586 = vsel %vm429, %v1585, 2147483647
          %v1587 = vand.u32 %v1586, 65535
          %v1588 = vshra.s32 %v1586, 16
          %v1589 = vcvt.s32.f32 %v1587
          %v1590 = vcvt.s32.f32 %v1588
          %1591 = vmin.xlane.f32.xlu0 %v1590
          %v1592 = vpop.xlane.xlu0 %1591
          %vm1593 = vcmp.eq.f32.partialorder %v1590, %v1592
          %v1594 = vsel %vm1593, %v1589, inf
          %1595 = vmin.xlane.f32.xlu0 %v1594
          %v1596 = vpop.xlane.xlu0 %1595
          %v1597 = vcvt.f32.s32 %v1596
          %v1598 = vcvt.f32.s32 %v1592
          %v1599 = vshll.u32 %v1598, 16
          %v1600 = vadd.s32 %v1599, %v1597
          %v1601 = vrot.slane %v1600, 4
          %vm1602 = vcmp.lt.s32.totalorder %v1600, %v1601
          %v1603 = vsel %vm1602, %v1600, %v1601
          %v1604 = vrot.slane %v1603, 2
          %vm1605 = vcmp.lt.s32.totalorder %v1603, %v1604
          %v1606 = vsel %vm1605, %v1603, %v1604
          %v1607 = vrot.slane %v1606, 1
          %vm1608 = vcmp.lt.s32.totalorder %v1606, %v1607
          %v1609 = vsel %vm1608, %v1606, %v1607
          %s1610 = vtos %v1609
          %p1611 = scmp.gt.f32.partialorder %s1582, 0.2
          %vm1612 = vcmp.eq.s32.totalorder %v427, 22
          %s1613 = scalar_select %p1611, 1, 0
          %v1614 = vstv %s1613
          %vm1615 = vcmp.eq.s32.totalorder %v1614, 1
          %vm1616 = vmand %vm1615, %vm1612
          %v1617 = vstv %s1610
          %v1618 = vsel %vm1616, %v1617, %v1566
          %vm1619 = vcmp.eq.s32.totalorder %v427, %v1617
          %vm1620 = vmand %vm1615, %vm1619
          %v1621 = vsel %vm1620, 0.0, 1.0
          %v1622 = vmul.f32 %v1570, %v1621
          %v1623 = vld [vmem:[#allocation2 + $0x17] sm:$0x1]
          %v1624 = vmul.f32 %v1623, %v1622
          %v1625 = vsel %vm429, %v1624, -inf
          %1626 = vmax.xlane.f32.xlu0 %v1625
          %v1627 = vpop.xlane.xlu0 %1626
          %v1628 = vrot.slane %v1627, 4
          %v1629 = vmax.f32 %v1627, %v1628
          %v1630 = vrot.slane %v1629, 2
          %v1631 = vmax.f32 %v1629, %v1630
          %v1632 = vrot.slane %v1631, 1
          %v1633 = vmax.f32 %v1631, %v1632
          %s1634 = vtos %v1633
          %v1635 = vstv %s1634
          %vm1636 = vcmp.eq.f32.partialorder %v1624, %v1635
          %v1637 = vsel %vm1636, %v427, 16
          %v1638 = vsel %vm429, %v1637, 2147483647
          %v1639 = vand.u32 %v1638, 65535
          %v1640 = vshra.s32 %v1638, 16
          %v1641 = vcvt.s32.f32 %v1639
          %v1642 = vcvt.s32.f32 %v1640
          %1643 = vmin.xlane.f32.xlu0 %v1642
          %v1644 = vpop.xlane.xlu0 %1643
          %vm1645 = vcmp.eq.f32.partialorder %v1642, %v1644
          %v1646 = vsel %vm1645, %v1641, inf
          %1647 = vmin.xlane.f32.xlu0 %v1646
          %v1648 = vpop.xlane.xlu0 %1647
          %v1649 = vcvt.f32.s32 %v1648
          %v1650 = vcvt.f32.s32 %v1644
          %v1651 = vshll.u32 %v1650, 16
          %v1652 = vadd.s32 %v1651, %v1649
          %v1653 = vrot.slane %v1652, 4
          %vm1654 = vcmp.lt.s32.totalorder %v1652, %v1653
          %v1655 = vsel %vm1654, %v1652, %v1653
          %v1656 = vrot.slane %v1655, 2
          %vm1657 = vcmp.lt.s32.totalorder %v1655, %v1656
          %v1658 = vsel %vm1657, %v1655, %v1656
          %v1659 = vrot.slane %v1658, 1
          %vm1660 = vcmp.lt.s32.totalorder %v1658, %v1659
          %v1661 = vsel %vm1660, %v1658, %v1659
          %s1662 = vtos %v1661
          %p1663 = scmp.gt.f32.partialorder %s1634, 0.2
          %vm1664 = vcmp.eq.s32.totalorder %v427, 23
          %s1665 = scalar_select %p1663, 1, 0
          %v1666 = vstv %s1665
          %vm1667 = vcmp.eq.s32.totalorder %v1666, 1
          %vm1668 = vmand %vm1667, %vm1664
          %v1669 = vstv %s1662
          %v1670 = vsel %vm1668, %v1669, %v1618
          %vm1671 = vcmp.eq.s32.totalorder %v427, %v1669
          %vm1672 = vmand %vm1667, %vm1671
          %v1673 = vsel %vm1672, 0.0, 1.0
          %v1674 = vmul.f32 %v1622, %v1673
          %v1675 = vld [vmem:[#allocation2 + $0x18] sm:$0x1]
          %v1676 = vmul.f32 %v1675, %v1674
          %v1677 = vsel %vm429, %v1676, -inf
          %1678 = vmax.xlane.f32.xlu0 %v1677
          %v1679 = vpop.xlane.xlu0 %1678
          %v1680 = vrot.slane %v1679, 4
          %v1681 = vmax.f32 %v1679, %v1680
          %v1682 = vrot.slane %v1681, 2
          %v1683 = vmax.f32 %v1681, %v1682
          %v1684 = vrot.slane %v1683, 1
          %v1685 = vmax.f32 %v1683, %v1684
          %s1686 = vtos %v1685
          %v1687 = vstv %s1686
          %vm1688 = vcmp.eq.f32.partialorder %v1676, %v1687
          %v1689 = vsel %vm1688, %v427, 16
          %v1690 = vsel %vm429, %v1689, 2147483647
          %v1691 = vand.u32 %v1690, 65535
          %v1692 = vshra.s32 %v1690, 16
          %v1693 = vcvt.s32.f32 %v1691
          %v1694 = vcvt.s32.f32 %v1692
          %1695 = vmin.xlane.f32.xlu0 %v1694
          %v1696 = vpop.xlane.xlu0 %1695
          %vm1697 = vcmp.eq.f32.partialorder %v1694, %v1696
          %v1698 = vsel %vm1697, %v1693, inf
          %1699 = vmin.xlane.f32.xlu0 %v1698
          %v1700 = vpop.xlane.xlu0 %1699
          %v1701 = vcvt.f32.s32 %v1700
          %v1702 = vcvt.f32.s32 %v1696
          %v1703 = vshll.u32 %v1702, 16
          %v1704 = vadd.s32 %v1703, %v1701
          %v1705 = vrot.slane %v1704, 4
          %vm1706 = vcmp.lt.s32.totalorder %v1704, %v1705
          %v1707 = vsel %vm1706, %v1704, %v1705
          %v1708 = vrot.slane %v1707, 2
          %vm1709 = vcmp.lt.s32.totalorder %v1707, %v1708
          %v1710 = vsel %vm1709, %v1707, %v1708
          %v1711 = vrot.slane %v1710, 1
          %vm1712 = vcmp.lt.s32.totalorder %v1710, %v1711
          %v1713 = vsel %vm1712, %v1710, %v1711
          %s1714 = vtos %v1713
          %p1715 = scmp.gt.f32.partialorder %s1686, 0.2
          %vm1716 = vcmp.eq.s32.totalorder %v427, 24
          %s1717 = scalar_select %p1715, 1, 0
          %v1718 = vstv %s1717
          %vm1719 = vcmp.eq.s32.totalorder %v1718, 1
          %vm1720 = vmand %vm1719, %vm1716
          %v1721 = vstv %s1714
          %v1722 = vsel %vm1720, %v1721, %v1670
          %vm1723 = vcmp.eq.s32.totalorder %v427, %v1721
          %vm1724 = vmand %vm1719, %vm1723
          %v1725 = vsel %vm1724, 0.0, 1.0
          %v1726 = vmul.f32 %v1674, %v1725
          %v1727 = vld [vmem:[#allocation2 + $0x19] sm:$0x1]
          %v1728 = vmul.f32 %v1727, %v1726
          %v1729 = vsel %vm429, %v1728, -inf
          %1730 = vmax.xlane.f32.xlu0 %v1729
          %v1731 = vpop.xlane.xlu0 %1730
          %v1732 = vrot.slane %v1731, 4
          %v1733 = vmax.f32 %v1731, %v1732
          %v1734 = vrot.slane %v1733, 2
          %v1735 = vmax.f32 %v1733, %v1734
          %v1736 = vrot.slane %v1735, 1
          %v1737 = vmax.f32 %v1735, %v1736
          %s1738 = vtos %v1737
          %v1739 = vstv %s1738
          %vm1740 = vcmp.eq.f32.partialorder %v1728, %v1739
          %v1741 = vsel %vm1740, %v427, 16
          %v1742 = vsel %vm429, %v1741, 2147483647
          %v1743 = vand.u32 %v1742, 65535
          %v1744 = vshra.s32 %v1742, 16
          %v1745 = vcvt.s32.f32 %v1743
          %v1746 = vcvt.s32.f32 %v1744
          %1747 = vmin.xlane.f32.xlu0 %v1746
          %v1748 = vpop.xlane.xlu0 %1747
          %vm1749 = vcmp.eq.f32.partialorder %v1746, %v1748
          %v1750 = vsel %vm1749, %v1745, inf
          %1751 = vmin.xlane.f32.xlu0 %v1750
          %v1752 = vpop.xlane.xlu0 %1751
          %v1753 = vcvt.f32.s32 %v1752
          %v1754 = vcvt.f32.s32 %v1748
          %v1755 = vshll.u32 %v1754, 16
          %v1756 = vadd.s32 %v1755, %v1753
          %v1757 = vrot.slane %v1756, 4
          %vm1758 = vcmp.lt.s32.totalorder %v1756, %v1757
          %v1759 = vsel %vm1758, %v1756, %v1757
          %v1760 = vrot.slane %v1759, 2
          %vm1761 = vcmp.lt.s32.totalorder %v1759, %v1760
          %v1762 = vsel %vm1761, %v1759, %v1760
          %v1763 = vrot.slane %v1762, 1
          %vm1764 = vcmp.lt.s32.totalorder %v1762, %v1763
          %v1765 = vsel %vm1764, %v1762, %v1763
          %s1766 = vtos %v1765
          %p1767 = scmp.gt.f32.partialorder %s1738, 0.2
          %vm1768 = vcmp.eq.s32.totalorder %v427, 25
          %s1769 = scalar_select %p1767, 1, 0
          %v1770 = vstv %s1769
          %vm1771 = vcmp.eq.s32.totalorder %v1770, 1
          %vm1772 = vmand %vm1771, %vm1768
          %v1773 = vstv %s1766
          %v1774 = vsel %vm1772, %v1773, %v1722
          %vm1775 = vcmp.eq.s32.totalorder %v427, %v1773
          %vm1776 = vmand %vm1771, %vm1775
          %v1777 = vsel %vm1776, 0.0, 1.0
          %v1778 = vmul.f32 %v1726, %v1777
          %v1779 = vld [vmem:[#allocation2 + $0x1a] sm:$0x1]
          %v1780 = vmul.f32 %v1779, %v1778
          %v1781 = vsel %vm429, %v1780, -inf
          %1782 = vmax.xlane.f32.xlu0 %v1781
          %v1783 = vpop.xlane.xlu0 %1782
          %v1784 = vrot.slane %v1783, 4
          %v1785 = vmax.f32 %v1783, %v1784
          %v1786 = vrot.slane %v1785, 2
          %v1787 = vmax.f32 %v1785, %v1786
          %v1788 = vrot.slane %v1787, 1
          %v1789 = vmax.f32 %v1787, %v1788
          %s1790 = vtos %v1789
          %v1791 = vstv %s1790
          %vm1792 = vcmp.eq.f32.partialorder %v1780, %v1791
          %v1793 = vsel %vm1792, %v427, 16
          %v1794 = vsel %vm429, %v1793, 2147483647
          %v1795 = vand.u32 %v1794, 65535
          %v1796 = vshra.s32 %v1794, 16
          %v1797 = vcvt.s32.f32 %v1795
          %v1798 = vcvt.s32.f32 %v1796
          %1799 = vmin.xlane.f32.xlu0 %v1798
          %v1800 = vpop.xlane.xlu0 %1799
          %vm1801 = vcmp.eq.f32.partialorder %v1798, %v1800
          %v1802 = vsel %vm1801, %v1797, inf
          %1803 = vmin.xlane.f32.xlu0 %v1802
          %v1804 = vpop.xlane.xlu0 %1803
          %v1805 = vcvt.f32.s32 %v1804
          %v1806 = vcvt.f32.s32 %v1800
          %v1807 = vshll.u32 %v1806, 16
          %v1808 = vadd.s32 %v1807, %v1805
          %v1809 = vrot.slane %v1808, 4
          %vm1810 = vcmp.lt.s32.totalorder %v1808, %v1809
          %v1811 = vsel %vm1810, %v1808, %v1809
          %v1812 = vrot.slane %v1811, 2
          %vm1813 = vcmp.lt.s32.totalorder %v1811, %v1812
          %v1814 = vsel %vm1813, %v1811, %v1812
          %v1815 = vrot.slane %v1814, 1
          %vm1816 = vcmp.lt.s32.totalorder %v1814, %v1815
          %v1817 = vsel %vm1816, %v1814, %v1815
          %s1818 = vtos %v1817
          %p1819 = scmp.gt.f32.partialorder %s1790, 0.2
          %vm1820 = vcmp.eq.s32.totalorder %v427, 26
          %s1821 = scalar_select %p1819, 1, 0
          %v1822 = vstv %s1821
          %vm1823 = vcmp.eq.s32.totalorder %v1822, 1
          %vm1824 = vmand %vm1823, %vm1820
          %v1825 = vstv %s1818
          %v1826 = vsel %vm1824, %v1825, %v1774
          %vm1827 = vcmp.eq.s32.totalorder %v427, %v1825
          %vm1828 = vmand %vm1823, %vm1827
          %v1829 = vsel %vm1828, 0.0, 1.0
          %v1830 = vmul.f32 %v1778, %v1829
          %v1831 = vld [vmem:[#allocation2 + $0x1b] sm:$0x1]
          %v1832 = vmul.f32 %v1831, %v1830
          %v1833 = vsel %vm429, %v1832, -inf
          %1834 = vmax.xlane.f32.xlu0 %v1833
          %v1835 = vpop.xlane.xlu0 %1834
          %v1836 = vrot.slane %v1835, 4
          %v1837 = vmax.f32 %v1835, %v1836
          %v1838 = vrot.slane %v1837, 2
          %v1839 = vmax.f32 %v1837, %v1838
          %v1840 = vrot.slane %v1839, 1
          %v1841 = vmax.f32 %v1839, %v1840
          %s1842 = vtos %v1841
          %v1843 = vstv %s1842
          %vm1844 = vcmp.eq.f32.partialorder %v1832, %v1843
          %v1845 = vsel %vm1844, %v427, 16
          %v1846 = vsel %vm429, %v1845, 2147483647
          %v1847 = vand.u32 %v1846, 65535
          %v1848 = vshra.s32 %v1846, 16
          %v1849 = vcvt.s32.f32 %v1847
          %v1850 = vcvt.s32.f32 %v1848
          %1851 = vmin.xlane.f32.xlu0 %v1850
          %v1852 = vpop.xlane.xlu0 %1851
          %vm1853 = vcmp.eq.f32.partialorder %v1850, %v1852
          %v1854 = vsel %vm1853, %v1849, inf
          %1855 = vmin.xlane.f32.xlu0 %v1854
          %v1856 = vpop.xlane.xlu0 %1855
          %v1857 = vcvt.f32.s32 %v1856
          %v1858 = vcvt.f32.s32 %v1852
          %v1859 = vshll.u32 %v1858, 16
          %v1860 = vadd.s32 %v1859, %v1857
          %v1861 = vrot.slane %v1860, 4
          %vm1862 = vcmp.lt.s32.totalorder %v1860, %v1861
          %v1863 = vsel %vm1862, %v1860, %v1861
          %v1864 = vrot.slane %v1863, 2
          %vm1865 = vcmp.lt.s32.totalorder %v1863, %v1864
          %v1866 = vsel %vm1865, %v1863, %v1864
          %v1867 = vrot.slane %v1866, 1
          %vm1868 = vcmp.lt.s32.totalorder %v1866, %v1867
          %v1869 = vsel %vm1868, %v1866, %v1867
          %s1870 = vtos %v1869
          %p1871 = scmp.gt.f32.partialorder %s1842, 0.2
          %vm1872 = vcmp.eq.s32.totalorder %v427, 27
          %s1873 = scalar_select %p1871, 1, 0
          %v1874 = vstv %s1873
          %vm1875 = vcmp.eq.s32.totalorder %v1874, 1
          %vm1876 = vmand %vm1875, %vm1872
          %v1877 = vstv %s1870
          %v1878 = vsel %vm1876, %v1877, %v1826
          %vm1879 = vcmp.eq.s32.totalorder %v427, %v1877
          %vm1880 = vmand %vm1875, %vm1879
          %v1881 = vsel %vm1880, 0.0, 1.0
          %v1882 = vmul.f32 %v1830, %v1881
          %v1883 = vld [vmem:[#allocation2 + $0x1c] sm:$0x1]
          %v1884 = vmul.f32 %v1883, %v1882
          %v1885 = vsel %vm429, %v1884, -inf
          %1886 = vmax.xlane.f32.xlu0 %v1885
          %v1887 = vpop.xlane.xlu0 %1886
          %v1888 = vrot.slane %v1887, 4
          %v1889 = vmax.f32 %v1887, %v1888
          %v1890 = vrot.slane %v1889, 2
          %v1891 = vmax.f32 %v1889, %v1890
          %v1892 = vrot.slane %v1891, 1
          %v1893 = vmax.f32 %v1891, %v1892
          %s1894 = vtos %v1893
          %v1895 = vstv %s1894
          %vm1896 = vcmp.eq.f32.partialorder %v1884, %v1895
          %v1897 = vsel %vm1896, %v427, 16
          %v1898 = vsel %vm429, %v1897, 2147483647
          %v1899 = vand.u32 %v1898, 65535
          %v1900 = vshra.s32 %v1898, 16
          %v1901 = vcvt.s32.f32 %v1899
          %v1902 = vcvt.s32.f32 %v1900
          %1903 = vmin.xlane.f32.xlu0 %v1902
          %v1904 = vpop.xlane.xlu0 %1903
          %vm1905 = vcmp.eq.f32.partialorder %v1902, %v1904
          %v1906 = vsel %vm1905, %v1901, inf
          %1907 = vmin.xlane.f32.xlu0 %v1906
          %v1908 = vpop.xlane.xlu0 %1907
          %v1909 = vcvt.f32.s32 %v1908
          %v1910 = vcvt.f32.s32 %v1904
          %v1911 = vshll.u32 %v1910, 16
          %v1912 = vadd.s32 %v1911, %v1909
          %v1913 = vrot.slane %v1912, 4
          %vm1914 = vcmp.lt.s32.totalorder %v1912, %v1913
          %v1915 = vsel %vm1914, %v1912, %v1913
          %v1916 = vrot.slane %v1915, 2
          %vm1917 = vcmp.lt.s32.totalorder %v1915, %v1916
          %v1918 = vsel %vm1917, %v1915, %v1916
          %v1919 = vrot.slane %v1918, 1
          %vm1920 = vcmp.lt.s32.totalorder %v1918, %v1919
          %v1921 = vsel %vm1920, %v1918, %v1919
          %s1922 = vtos %v1921
          %p1923 = scmp.gt.f32.partialorder %s1894, 0.2
          %vm1924 = vcmp.eq.s32.totalorder %v427, 28
          %s1925 = scalar_select %p1923, 1, 0
          %v1926 = vstv %s1925
          %vm1927 = vcmp.eq.s32.totalorder %v1926, 1
          %vm1928 = vmand %vm1927, %vm1924
          %v1929 = vstv %s1922
          %v1930 = vsel %vm1928, %v1929, %v1878
          %vm1931 = vcmp.eq.s32.totalorder %v427, %v1929
          %vm1932 = vmand %vm1927, %vm1931
          %v1933 = vsel %vm1932, 0.0, 1.0
          %v1934 = vmul.f32 %v1882, %v1933
          %v1935 = vld [vmem:[#allocation2 + $0x1d] sm:$0x1]
          %v1936 = vmul.f32 %v1935, %v1934
          %v1937 = vsel %vm429, %v1936, -inf
          %1938 = vmax.xlane.f32.xlu0 %v1937
          %v1939 = vpop.xlane.xlu0 %1938
          %v1940 = vrot.slane %v1939, 4
          %v1941 = vmax.f32 %v1939, %v1940
          %v1942 = vrot.slane %v1941, 2
          %v1943 = vmax.f32 %v1941, %v1942
          %v1944 = vrot.slane %v1943, 1
          %v1945 = vmax.f32 %v1943, %v1944
          %s1946 = vtos %v1945
          %v1947 = vstv %s1946
          %vm1948 = vcmp.eq.f32.partialorder %v1936, %v1947
          %v1949 = vsel %vm1948, %v427, 16
          %v1950 = vsel %vm429, %v1949, 2147483647
          %v1951 = vand.u32 %v1950, 65535
          %v1952 = vshra.s32 %v1950, 16
          %v1953 = vcvt.s32.f32 %v1951
          %v1954 = vcvt.s32.f32 %v1952
          %1955 = vmin.xlane.f32.xlu0 %v1954
          %v1956 = vpop.xlane.xlu0 %1955
          %vm1957 = vcmp.eq.f32.partialorder %v1954, %v1956
          %v1958 = vsel %vm1957, %v1953, inf
          %1959 = vmin.xlane.f32.xlu0 %v1958
          %v1960 = vpop.xlane.xlu0 %1959
          %v1961 = vcvt.f32.s32 %v1960
          %v1962 = vcvt.f32.s32 %v1956
          %v1963 = vshll.u32 %v1962, 16
          %v1964 = vadd.s32 %v1963, %v1961
          %v1965 = vrot.slane %v1964, 4
          %vm1966 = vcmp.lt.s32.totalorder %v1964, %v1965
          %v1967 = vsel %vm1966, %v1964, %v1965
          %v1968 = vrot.slane %v1967, 2
          %vm1969 = vcmp.lt.s32.totalorder %v1967, %v1968
          %v1970 = vsel %vm1969, %v1967, %v1968
          %v1971 = vrot.slane %v1970, 1
          %vm1972 = vcmp.lt.s32.totalorder %v1970, %v1971
          %v1973 = vsel %vm1972, %v1970, %v1971
          %s1974 = vtos %v1973
          %p1975 = scmp.gt.f32.partialorder %s1946, 0.2
          %vm1976 = vcmp.eq.s32.totalorder %v427, 29
          %s1977 = scalar_select %p1975, 1, 0
          %v1978 = vstv %s1977
          %vm1979 = vcmp.eq.s32.totalorder %v1978, 1
          %vm1980 = vmand %vm1979, %vm1976
          %v1981 = vstv %s1974
          %v1982 = vsel %vm1980, %v1981, %v1930
          %vm1983 = vcmp.eq.s32.totalorder %v427, %v1981
          %vm1984 = vmand %vm1979, %vm1983
          %v1985 = vsel %vm1984, 0.0, 1.0
          %v1986 = vmul.f32 %v1934, %v1985
          %v1987 = vld [vmem:[#allocation2 + $0x1e] sm:$0x1]
          %v1988 = vmul.f32 %v1987, %v1986
          %v1989 = vsel %vm429, %v1988, -inf
          %1990 = vmax.xlane.f32.xlu0 %v1989
          %v1991 = vpop.xlane.xlu0 %1990
          %v1992 = vrot.slane %v1991, 4
          %v1993 = vmax.f32 %v1991, %v1992
          %v1994 = vrot.slane %v1993, 2
          %v1995 = vmax.f32 %v1993, %v1994
          %v1996 = vrot.slane %v1995, 1
          %v1997 = vmax.f32 %v1995, %v1996
          %s1998 = vtos %v1997
          %v1999 = vstv %s1998
          %vm2000 = vcmp.eq.f32.partialorder %v1988, %v1999
          %v2001 = vsel %vm2000, %v427, 16
          %v2002 = vsel %vm429, %v2001, 2147483647
          %v2003 = vand.u32 %v2002, 65535
          %v2004 = vshra.s32 %v2002, 16
          %v2005 = vcvt.s32.f32 %v2003
          %v2006 = vcvt.s32.f32 %v2004
          %2007 = vmin.xlane.f32.xlu0 %v2006
          %v2008 = vpop.xlane.xlu0 %2007
          %vm2009 = vcmp.eq.f32.partialorder %v2006, %v2008
          %v2010 = vsel %vm2009, %v2005, inf
          %2011 = vmin.xlane.f32.xlu0 %v2010
          %v2012 = vpop.xlane.xlu0 %2011
          %v2013 = vcvt.f32.s32 %v2012
          %v2014 = vcvt.f32.s32 %v2008
          %v2015 = vshll.u32 %v2014, 16
          %v2016 = vadd.s32 %v2015, %v2013
          %v2017 = vrot.slane %v2016, 4
          %vm2018 = vcmp.lt.s32.totalorder %v2016, %v2017
          %v2019 = vsel %vm2018, %v2016, %v2017
          %v2020 = vrot.slane %v2019, 2
          %vm2021 = vcmp.lt.s32.totalorder %v2019, %v2020
          %v2022 = vsel %vm2021, %v2019, %v2020
          %v2023 = vrot.slane %v2022, 1
          %vm2024 = vcmp.lt.s32.totalorder %v2022, %v2023
          %v2025 = vsel %vm2024, %v2022, %v2023
          %s2026 = vtos %v2025
          %p2027 = scmp.gt.f32.partialorder %s1998, 0.2
          %vm2028 = vcmp.eq.s32.totalorder %v427, 30
          %s2029 = scalar_select %p2027, 1, 0
          %v2030 = vstv %s2029
          %vm2031 = vcmp.eq.s32.totalorder %v2030, 1
          %vm2032 = vmand %vm2031, %vm2028
          %v2033 = vstv %s2026
          %v2034 = vsel %vm2032, %v2033, %v1982
          %vm2035 = vcmp.eq.s32.totalorder %v427, %v2033
          %vm2036 = vmand %vm2031, %vm2035
          %v2037 = vsel %vm2036, 0.0, 1.0
          %v2038 = vmul.f32 %v1986, %v2037
          %v2039 = vld [vmem:[#allocation2 + $0x1f] sm:$0x1]
          %v2040 = vmul.f32 %v2039, %v2038
          %v2041 = vsel %vm429, %v2040, -inf
          %2042 = vmax.xlane.f32.xlu0 %v2041
          %v2043 = vpop.xlane.xlu0 %2042
          %v2044 = vrot.slane %v2043, 4
          %v2045 = vmax.f32 %v2043, %v2044
          %v2046 = vrot.slane %v2045, 2
          %v2047 = vmax.f32 %v2045, %v2046
          %v2048 = vrot.slane %v2047, 1
          %v2049 = vmax.f32 %v2047, %v2048
          %s2050 = vtos %v2049
          %v2051 = vstv %s2050
          %vm2052 = vcmp.eq.f32.partialorder %v2040, %v2051
          %v2053 = vsel %vm2052, %v427, 16
          %v2054 = vsel %vm429, %v2053, 2147483647
          %v2055 = vand.u32 %v2054, 65535
          %v2056 = vshra.s32 %v2054, 16
          %v2057 = vcvt.s32.f32 %v2055
          %v2058 = vcvt.s32.f32 %v2056
          %2059 = vmin.xlane.f32.xlu0 %v2058
          %v2060 = vpop.xlane.xlu0 %2059
          %vm2061 = vcmp.eq.f32.partialorder %v2058, %v2060
          %v2062 = vsel %vm2061, %v2057, inf
          %2063 = vmin.xlane.f32.xlu0 %v2062
          %v2064 = vpop.xlane.xlu0 %2063
          %v2065 = vcvt.f32.s32 %v2064
          %v2066 = vcvt.f32.s32 %v2060
          %v2067 = vshll.u32 %v2066, 16
          %v2068 = vadd.s32 %v2067, %v2065
          %v2069 = vrot.slane %v2068, 4
          %vm2070 = vcmp.lt.s32.totalorder %v2068, %v2069
          %v2071 = vsel %vm2070, %v2068, %v2069
          %v2072 = vrot.slane %v2071, 2
          %vm2073 = vcmp.lt.s32.totalorder %v2071, %v2072
          %v2074 = vsel %vm2073, %v2071, %v2072
          %v2075 = vrot.slane %v2074, 1
          %vm2076 = vcmp.lt.s32.totalorder %v2074, %v2075
          %v2077 = vsel %vm2076, %v2074, %v2075
          %s2078 = vtos %v2077
          %p2079 = scmp.gt.f32.partialorder %s2050, 0.2
          %vm2080 = vcmp.eq.s32.totalorder %v427, 31
          %s2081 = scalar_select %p2079, 1, 0
          %v2082 = vstv %s2081
          %vm2083 = vcmp.eq.s32.totalorder %v2082, 1
          %vm2084 = vmand %vm2083, %vm2080
          %v2085 = vstv %s2078
          %v2086 = vsel %vm2084, %v2085, %v2034
          %vm2087 = vcmask 253952
          %2088 = vst.msk [vmem:[#allocation3] sm:$0x1] %vm2087, %v2086
        $region32: #{consecutive_frames_matcher.1} parent=27 // pred_fallthru
          _
        // Predicated region
        $region33: #{consecutive_frames_matcher.1} parent=27 // pred_check
          %p2089 = pneg %p74
        $region34: #{consecutive_frames_matcher.1} parent=27 // pred_check_branch
          %2091 = sbr.rel (%p2089) target = $region36
        $region35: #{consecutive_frames_matcher.1} parent=27 // pred_region
          %2093 = vsyncadd [#allocation4], 0
          %s2095 = sshll.u32 [#allocation3], 4
          %s2096 = int_to_ptr.vmem [resolvable:$true] %s2095
          %s2097 = sshll.u32 %s2, 4
          %s2098 = int_to_ptr.hbm [resolvable:$true] %s2097
          %2100 = dma.vmem_to_hbm [thread:$0]  %s2096, 16, %s2098, [#allocation4]
        $region36: #{consecutive_frames_matcher.1} parent=27 // pred_fallthru
          _
        // Predicated region
        $region37: #{consecutive_frames_matcher.1} parent=27 // pred_check
          %p2101 = pneg %p74
        $region38: #{consecutive_frames_matcher.1} parent=27 // pred_check_branch
          %2103 = sbr.rel (%p2101) target = $region40
        $region39: #{consecutive_frames_matcher.1} parent=27 // pred_region
          %2105 = dma.done [#allocation4], 16
        $region40: #{consecutive_frames_matcher.1} parent=27 // pred_fallthru
          _
      $region28: #{consecutive_frames_matcher.1} parent=5 // pred_fallthru
        _
      %p2106 = scmp.le.s32.totalorder 2, %s9
      // Predicated region
      $region41: #{consecutive_frames_matcher.1} parent=5 // pred_check
        %p2107 = pneg %p2106
      $region42: #{consecutive_frames_matcher.1} parent=5 // pred_check_branch
        %2109 = sbr.rel (%p2107) target = $region44
      $region43: #{consecutive_frames_matcher.1} parent=5 // pred_region
        %s2110 = ssub.s32 %s9, 2
      $region44: #{consecutive_frames_matcher.1} parent=5 // pred_fallthru
        _
    $region6: #{consecutive_frames_matcher.1} parent=1 // loop_footer
      %s13 = sadd.s32 1, %s9
    $region7: #{consecutive_frames_matcher.1} parent=1 // loop_footer_branch
      %8 = sbr.rel target = $region3
    $region8: #{consecutive_frames_matcher.1} parent=1 // loop_exit
      _
    %2111 = vsyncpa [#allocation4], 1
    %s2112 = scalar_lea.sflag [#allocation4], 1
    %2113 = vsyncpa %s2112, 1

</llo_original>
